<compile_context>
chip_gen: v6e
topology: v6e:2x2x1
jax: 0.10.0
libtpu: 0.0.40
codegen_flags: <defaults>
</compile_context>

<pallas_src>
import functools

import jax
import jax.numpy as jnp
from jax.experimental import pallas as pl
from jax.experimental.pallas import tpu as pltpu


def _round_up(x, m):
    return (x + m - 1) // m * m


def _postnet_fused_kernel(*refs, K, T, N, LH, S, n_mel, chans):
    """Whole Postnet (all L layers, all N batch elements) in one invocation.

    refs layout: x_ref, (w_ref_l, shift_ref_l) * L, o_ref, act_ref
      x_ref:     (N, Cin0_r, T)     f32 input mel (channels pre-padded to /8)
      w_ref_l:   (K, Cout_r, Cin_r) bf16, BN scale folded, true per-layer dims
      shift_l:   (Cout_r, 1)        f32 folded BN shift
      o_ref:     (N, n_mel, T)      f32 output
      act_ref:   (Cmax, Wslab)      bf16 activation slab (batch folded in lanes)

    Slab lane layout: [0, LH) zero halo | for each batch b: T interior columns
    at LH + b*S followed by (S - T) zero gap columns | trailing zero slack.
    LH and S are multiples of 128, so every writeback store is lane-aligned;
    the per-tap reads at offset LH - pad + k are misaligned but ride the load
    slots / XLU, which have slack.
    """
    L = len(chans)
    x_ref = refs[0]
    w_refs = [refs[1 + 2 * l] for l in range(L)]
    s_refs = [refs[2 + 2 * l] for l in range(L)]
    o_ref = refs[1 + 2 * L]
    act_ref = refs[2 + 2 * L]

    pad = (K - 1) // 2
    Wy = N * S                       # matmul output width (lane-dense)
    cmax, wslab = act_ref.shape

    # Zero only what is read but never written: halo / gap / trailing columns.
    act_ref[:, 0:LH] = jnp.zeros((cmax, LH), act_ref.dtype)
    for b in range(N):
        lo = LH + b * S + T
        hi = LH + (b + 1) * S
        act_ref[:, lo:hi] = jnp.zeros((cmax, hi - lo), act_ref.dtype)
    act_ref[:, LH + N * S:wslab] = jnp.zeros((cmax, wslab - LH - N * S),
                                             act_ref.dtype)

    # Load input mel into the per-batch interiors (bf16 for the MXU).
    cin0 = chans[0][0]
    for b in range(N):
        col = LH + b * S
        act_ref[0:cin0, col:col + T] = x_ref[b].astype(act_ref.dtype)

    # Static (fully unrolled) layer loop; activations stay resident in VMEM.
    for l in range(L):
        cin_r, cout_r = chans[l]
        # K per-tap matmuls accumulated in f32 — no materialized im2col slab.
        y = None
        for k in range(K):
            off = LH - pad + k
            part = jnp.dot(w_refs[l][k], act_ref[0:cin_r, off:off + Wy],
                           preferred_element_type=jnp.float32)
            y = part if y is None else y + part
        y = y + s_refs[l][...]            # folded BN shift (scale is in weights)
        # TODO(synk): Conv1dWithBatchNorm's definition is not in the spec; if it
        # applies tanh (canonical Tacotron2) on all but the last layer, insert
        # `y = jnp.tanh(y)` here in f32 (EUP slot, essentially free).

        if l < L - 1:
            # Aligned interior writeback (bf16); halos/gaps stay zero.
            for b in range(N):
                col = LH + b * S
                act_ref[0:cout_r, col:col + T] = (
                    y[:, b * S:b * S + T].astype(act_ref.dtype))
        else:
            # Last layer writes straight to the f32 output (no bf16 round trip).
            for b in range(N):
                o_ref[b] = y[0:n_mel, b * S:b * S + T].astype(o_ref.dtype)


def postnet_forward(x, layer_ws, layer_shifts, *, K):
    """Fused Postnet forward (eval mode). x: (N, n_mel, T) f32.
    layer_ws[l]: (K, Cout_r, Cin_r) bf16; layer_shifts[l]: (Cout_r, 1) f32.
    TODO(synk): nn.Dropout is stochastic in train mode (identity here, eval) and
    BatchNorm uses folded running statistics (eval mode)."""
    N, n_mel, T = x.shape
    pad = (K - 1) // 2
    cin0 = layer_ws[0].shape[2]
    cmax = max(cin0, max(w.shape[1] for w in layer_ws))

    halo = max(128, _round_up(pad, 128))
    LH = halo                          # left halo block (keeps writebacks aligned)
    S = _round_up(T + pad, 128)        # per-batch lane stride (interior + gap)
    wslab = LH + N * S + halo          # trailing slack for the k-shifted reads

    # Pad the input channel dim to a sublane multiple (no-op at n_mel=8).
    x_p = jnp.pad(x, ((0, 0), (0, cin0 - n_mel), (0, 0)))

    chans = tuple((w.shape[2], w.shape[1]) for w in layer_ws)  # (Cin_r, Cout_r)
    kern = functools.partial(_postnet_fused_kernel, K=K, T=T, N=N, LH=LH, S=S,
                             n_mel=n_mel, chans=chans)

    args = [x_p]
    for w, s in zip(layer_ws, layer_shifts):
        args += [w, s]

    # No grid: single invocation, batch folded into lanes.  At production T one
    # would add a "parallel" time-tile grid axis (for v7x's two TensorCores),
    # mark the weight/shift specs pipeline_mode=pl.Buffered(1) (grid-invariant),
    # and size the time tile against the VMEM limit below.
    return pl.pallas_call(
        kern,
        out_shape=jax.ShapeDtypeStruct((N, n_mel, T), x.dtype),
        in_specs=[pl.BlockSpec(memory_space=pltpu.MemorySpace.VMEM)
                  for _ in args],
        out_specs=pl.BlockSpec(memory_space=pltpu.MemorySpace.VMEM),
        scratch_shapes=[pltpu.VMEM((cmax, wslab), jnp.bfloat16)],
        compiler_params=pltpu.CompilerParams(vmem_limit_bytes=32 * 1024 * 1024),
    )(*args)


def init_postnet_params(key, n_mel, embed_dim, K, n_convs, eps=1e-5):
    """Deterministic synthetic conv/BN parameters (raw, un-folded, f32)."""
    dims = [(n_mel, embed_dim)] + [(embed_dim, embed_dim)] * (n_convs - 2) + \
           [(embed_dim, n_mel)]
    params = []
    for (cin, cout) in dims:
        key, k1, k2, k3, k4, k5, k6 = jax.random.split(key, 7)
        w = 0.1 * jax.random.normal(k1, (cout, cin, K), jnp.float32)
        b = 0.1 * jax.random.normal(k2, (cout,), jnp.float32)
        gamma = 1.0 + 0.1 * jax.random.normal(k3, (cout,), jnp.float32)
        beta = 0.1 * jax.random.normal(k4, (cout,), jnp.float32)
        rmean = 0.1 * jax.random.normal(k5, (cout,), jnp.float32)
        rvar = 1.0 + 0.1 * jax.random.uniform(k6, (cout,), jnp.float32)
        scale = gamma / jnp.sqrt(rvar + eps)            # eval-mode folded BN
        shift = (b - rmean) * scale + beta
        params.append((w, scale, shift))
    return params


def pack_params(params, K):
    """Host-side prep: fold BN scale into the conv weights, cast to bf16, and
    lay out per-tap as (K, Cout_r, Cin_r) with channel dims rounded only to the
    sublane multiple (8) *per layer* (no uniform Cmax padding)."""
    ws, ss, ws_true = [], [], []
    for (w, scale, shift) in params:
        cout, cin, _ = w.shape
        wf = (w * scale[:, None, None]).astype(jnp.bfloat16)   # fold BN scale
        ws_true.append(wf)                                     # for the reference
        cor, cir = _round_up(cout, 8), _round_up(cin, 8)
        wp = jnp.pad(wf, ((0, cor - cout), (0, cir - cin), (0, 0)))
        ws.append(jnp.transpose(wp, (2, 0, 1)))                # (K, Cout_r, Cin_r)
        ss.append(jnp.pad(shift, (0, cor - cout))
                  .reshape(cor, 1).astype(jnp.float32))
    return ws, ss, ws_true


def reference_forward(x, ws_true, shifts, K):
    """Pure-JAX (XLA conv) reference with the same numerics as the kernel:
    bf16 conv inputs, f32 accumulation, bf16 intermediate activations."""
    pad = (K - 1) // 2
    L = len(ws_true)
    act = x.astype(jnp.bfloat16)
    out = None
    for l, (w, shift) in enumerate(zip(ws_true, shifts)):
        y = jax.lax.conv_general_dilated(
            act, w, window_strides=(1,), padding=[(pad, pad)],
            dimension_numbers=("NCH", "OIH", "NCH"),
            preferred_element_type=jnp.float32)
        y = y + shift[None, :, None]
        if l < L - 1:
            act = y.astype(jnp.bfloat16)
        else:
            out = y
    return out


if __name__ == "__main__":
    # Postnet(n_mel_channel=8, postnet_embedding_dim=32,
    #         postnet_kernel_size=5, postnet_conv_nums=5)
    n_mel, embed_dim, K, n_convs = 8, 32, 5, 5
    N, T = 2, 16

    key = jax.random.PRNGKey(0)
    kx, kp = jax.random.split(key)
    x = jax.random.normal(kx, (N, n_mel, T), jnp.float32)      # (N, C_mel, T)
    params = init_postnet_params(kp, n_mel, embed_dim, K, n_convs)
    layer_ws, layer_shifts, ws_true = pack_params(params, K)

    out = postnet_forward(x, layer_ws, layer_shifts, K=K)
    out = jax.block_until_ready(out)

    ref = reference_forward(x, ws_true, [p[2] for p in params], K)
    assert out.shape == (N, n_mel, T), out.shape
    # bf16 matmul inputs / bf16 intermediate activations in both paths; only the
    # f32 accumulation order differs, so a modest tolerance suffices.
    assert jnp.allclose(out, ref, atol=2e-2, rtol=2e-2), \
        float(jnp.max(jnp.abs(out - ref)))

    print("KERNEL_OK")
</pallas_src>

<mosaic_0001>
module attributes {stable_mosaic.version = 11 : i64} {
  func.func @_postnet_fused_kernel(%arg0: memref<2x8x16xf32, #tpu.memory_space<vmem>>, %arg1: memref<5x32x8xbf16, #tpu.memory_space<vmem>>, %arg2: memref<32x1xf32, #tpu.memory_space<vmem>>, %arg3: memref<5x32x32xbf16, #tpu.memory_space<vmem>>, %arg4: memref<32x1xf32, #tpu.memory_space<vmem>>, %arg5: memref<5x32x32xbf16, #tpu.memory_space<vmem>>, %arg6: memref<32x1xf32, #tpu.memory_space<vmem>>, %arg7: memref<5x32x32xbf16, #tpu.memory_space<vmem>>, %arg8: memref<32x1xf32, #tpu.memory_space<vmem>>, %arg9: memref<5x8x32xbf16, #tpu.memory_space<vmem>>, %arg10: memref<8x1xf32, #tpu.memory_space<vmem>>, %arg11: memref<2x8x16xf32, #tpu.memory_space<vmem>>, %arg12: memref<32x512xbf16, #tpu.memory_space<vmem>>) attributes {dimension_semantics = [], scalar_prefetch = 0 : i64, scratch_operands = 1 : i64, tpu.core_type = #tpu.core_type<tc>} {
    %cst = arith.constant 0.000000e+00 : bf16
    %0 = vector.broadcast %cst : bf16 to vector<32x128xbf16>
    %c0 = arith.constant 0 : index
    %c0_0 = arith.constant 0 : index
    %1 = vector.load %arg12[%c0, %c0_0] : memref<32x512xbf16, #tpu.memory_space<vmem>>, vector<32x128xbf16>
    tpu.vector_store %arg12[%c0, %c0_0], %0 {strides = array<i32>} : memref<32x512xbf16, #tpu.memory_space<vmem>>, vector<32x128xbf16>,
    %cst_1 = arith.constant 0.000000e+00 : bf16
    %2 = vector.broadcast %cst_1 : bf16 to vector<32x112xbf16>
    %c0_2 = arith.constant 0 : index
    %c144 = arith.constant 144 : index
    %3 = vector.load %arg12[%c0_2, %c144] : memref<32x512xbf16, #tpu.memory_space<vmem>>, vector<32x112xbf16>
    tpu.vector_store %arg12[%c0_2, %c144], %2 {strides = array<i32>} : memref<32x512xbf16, #tpu.memory_space<vmem>>, vector<32x112xbf16>,
    %cst_3 = arith.constant 0.000000e+00 : bf16
    %4 = vector.broadcast %cst_3 : bf16 to vector<32x112xbf16>
    %c0_4 = arith.constant 0 : index
    %c272 = arith.constant 272 : index
    %5 = vector.load %arg12[%c0_4, %c272] : memref<32x512xbf16, #tpu.memory_space<vmem>>, vector<32x112xbf16>
    tpu.vector_store %arg12[%c0_4, %c272], %4 {strides = array<i32>} : memref<32x512xbf16, #tpu.memory_space<vmem>>, vector<32x112xbf16>,
    %cst_5 = arith.constant 0.000000e+00 : bf16
    %6 = vector.broadcast %cst_5 : bf16 to vector<32x128xbf16>
    %c0_6 = arith.constant 0 : index
    %c384 = arith.constant 384 : index
    %7 = vector.load %arg12[%c0_6, %c384] : memref<32x512xbf16, #tpu.memory_space<vmem>>, vector<32x128xbf16>
    tpu.vector_store %arg12[%c0_6, %c384], %6 {strides = array<i32>} : memref<32x512xbf16, #tpu.memory_space<vmem>>, vector<32x128xbf16>,
    %c0_7 = arith.constant 0 : index
    %c0_8 = arith.constant 0 : index
    %c0_9 = arith.constant 0 : index
    %8 = vector.load %arg0[%c0_7, %c0_8, %c0_9] : memref<2x8x16xf32, #tpu.memory_space<vmem>>, vector<1x8x16xf32>
    %9 = vector.shape_cast %8 : vector<1x8x16xf32> to vector<8x16xf32>
    %10 = arith.truncf %9 : vector<8x16xf32> to vector<8x16xbf16>
    %c0_10 = arith.constant 0 : index
    %c128 = arith.constant 128 : index
    %11 = vector.load %arg12[%c0_10, %c128] : memref<32x512xbf16, #tpu.memory_space<vmem>>, vector<8x16xbf16>
    tpu.vector_store %arg12[%c0_10, %c128], %10 {strides = array<i32>} : memref<32x512xbf16, #tpu.memory_space<vmem>>, vector<8x16xbf16>,
    %c1 = arith.constant 1 : index
    %c0_11 = arith.constant 0 : index
    %c0_12 = arith.constant 0 : index
    %12 = vector.load %arg0[%c1, %c0_11, %c0_12] : memref<2x8x16xf32, #tpu.memory_space<vmem>>, vector<1x8x16xf32>
    %13 = vector.shape_cast %12 : vector<1x8x16xf32> to vector<8x16xf32>
    %14 = arith.truncf %13 : vector<8x16xf32> to vector<8x16xbf16>
    %c0_13 = arith.constant 0 : index
    %c256 = arith.constant 256 : index
    %15 = vector.load %arg12[%c0_13, %c256] : memref<32x512xbf16, #tpu.memory_space<vmem>>, vector<8x16xbf16>
    tpu.vector_store %arg12[%c0_13, %c256], %14 {strides = array<i32>} : memref<32x512xbf16, #tpu.memory_space<vmem>>, vector<8x16xbf16>,
    %c0_14 = arith.constant 0 : index
    %c0_15 = arith.constant 0 : index
    %c0_16 = arith.constant 0 : index
    %16 = vector.load %arg1[%c0_14, %c0_15, %c0_16] : memref<5x32x8xbf16, #tpu.memory_space<vmem>>, vector<1x32x8xbf16>
    %17 = vector.shape_cast %16 : vector<1x32x8xbf16> to vector<32x8xbf16>
    %c0_17 = arith.constant 0 : index
    %c126 = arith.constant 126 : index
    %18 = vector.load %arg12[%c0_17, %c126] : memref<32x512xbf16, #tpu.memory_space<vmem>>, vector<8x256xbf16>
    %cst_18 = arith.constant dense<0.000000e+00> : vector<32x256xf32>
    %19 = tpu.matmul %17, %18, %cst_18 {dimension_numbers = #tpu.dot_dimension_numbers<[1], [0], [0], [1], [0, 0, 1, 1], [], []>} : vector<32x8xbf16>, vector<8x256xbf16>, vector<32x256xf32> -> vector<32x256xf32>
    %c1_19 = arith.constant 1 : index
    %c0_20 = arith.constant 0 : index
    %c0_21 = arith.constant 0 : index
    %20 = vector.load %arg1[%c1_19, %c0_20, %c0_21] : memref<5x32x8xbf16, #tpu.memory_space<vmem>>, vector<1x32x8xbf16>
    %21 = vector.shape_cast %20 : vector<1x32x8xbf16> to vector<32x8xbf16>
    %c0_22 = arith.constant 0 : index
    %c127 = arith.constant 127 : index
    %22 = vector.load %arg12[%c0_22, %c127] : memref<32x512xbf16, #tpu.memory_space<vmem>>, vector<8x256xbf16>
    %cst_23 = arith.constant dense<0.000000e+00> : vector<32x256xf32>
    %23 = tpu.matmul %21, %22, %cst_23 {dimension_numbers = #tpu.dot_dimension_numbers<[1], [0], [0], [1], [0, 0, 1, 1], [], []>} : vector<32x8xbf16>, vector<8x256xbf16>, vector<32x256xf32> -> vector<32x256xf32>
    %24 = arith.addf %19, %23 : vector<32x256xf32>
    %c2 = arith.constant 2 : index
    %c0_24 = arith.constant 0 : index
    %c0_25 = arith.constant 0 : index
    %25 = vector.load %arg1[%c2, %c0_24, %c0_25] : memref<5x32x8xbf16, #tpu.memory_space<vmem>>, vector<1x32x8xbf16>
    %26 = vector.shape_cast %25 : vector<1x32x8xbf16> to vector<32x8xbf16>
    %c0_26 = arith.constant 0 : index
    %c128_27 = arith.constant 128 : index
    %27 = vector.load %arg12[%c0_26, %c128_27] : memref<32x512xbf16, #tpu.memory_space<vmem>>, vector<8x256xbf16>
    %cst_28 = arith.constant dense<0.000000e+00> : vector<32x256xf32>
    %28 = tpu.matmul %26, %27, %cst_28 {dimension_numbers = #tpu.dot_dimension_numbers<[1], [0], [0], [1], [0, 0, 1, 1], [], []>} : vector<32x8xbf16>, vector<8x256xbf16>, vector<32x256xf32> -> vector<32x256xf32>
    %29 = arith.addf %24, %28 : vector<32x256xf32>
    %c3 = arith.constant 3 : index
    %c0_29 = arith.constant 0 : index
    %c0_30 = arith.constant 0 : index
    %30 = vector.load %arg1[%c3, %c0_29, %c0_30] : memref<5x32x8xbf16, #tpu.memory_space<vmem>>, vector<1x32x8xbf16>
    %31 = vector.shape_cast %30 : vector<1x32x8xbf16> to vector<32x8xbf16>
    %c0_31 = arith.constant 0 : index
    %c129 = arith.constant 129 : index
    %32 = vector.load %arg12[%c0_31, %c129] : memref<32x512xbf16, #tpu.memory_space<vmem>>, vector<8x256xbf16>
    %cst_32 = arith.constant dense<0.000000e+00> : vector<32x256xf32>
    %33 = tpu.matmul %31, %32, %cst_32 {dimension_numbers = #tpu.dot_dimension_numbers<[1], [0], [0], [1], [0, 0, 1, 1], [], []>} : vector<32x8xbf16>, vector<8x256xbf16>, vector<32x256xf32> -> vector<32x256xf32>
    %34 = arith.addf %29, %33 : vector<32x256xf32>
    %c4 = arith.constant 4 : index
    %c0_33 = arith.constant 0 : index
    %c0_34 = arith.constant 0 : index
    %35 = vector.load %arg1[%c4, %c0_33, %c0_34] : memref<5x32x8xbf16, #tpu.memory_space<vmem>>, vector<1x32x8xbf16>
    %36 = vector.shape_cast %35 : vector<1x32x8xbf16> to vector<32x8xbf16>
    %c0_35 = arith.constant 0 : index
    %c130 = arith.constant 130 : index
    %37 = vector.load %arg12[%c0_35, %c130] : memref<32x512xbf16, #tpu.memory_space<vmem>>, vector<8x256xbf16>
    %cst_36 = arith.constant dense<0.000000e+00> : vector<32x256xf32>
    %38 = tpu.matmul %36, %37, %cst_36 {dimension_numbers = #tpu.dot_dimension_numbers<[1], [0], [0], [1], [0, 0, 1, 1], [], []>} : vector<32x8xbf16>, vector<8x256xbf16>, vector<32x256xf32> -> vector<32x256xf32>
    %39 = arith.addf %34, %38 : vector<32x256xf32>
    %c0_37 = arith.constant 0 : index
    %c0_38 = arith.constant 0 : index
    %40 = vector.load %arg2[%c0_37, %c0_38] : memref<32x1xf32, #tpu.memory_space<vmem>>, vector<32x1xf32>
    %41 = vector.broadcast %40 : vector<32x1xf32> to vector<32x256xf32>
    %42 = arith.addf %39, %41 : vector<32x256xf32>
    %43 = vector.extract_strided_slice %42 {offsets = [0, 0], sizes = [32, 16], strides = [1, 1]} : vector<32x256xf32> to vector<32x16xf32>
    %44 = arith.truncf %43 : vector<32x16xf32> to vector<32x16xbf16>
    %c0_39 = arith.constant 0 : index
    %c128_40 = arith.constant 128 : index
    %45 = vector.load %arg12[%c0_39, %c128_40] : memref<32x512xbf16, #tpu.memory_space<vmem>>, vector<32x16xbf16>
    tpu.vector_store %arg12[%c0_39, %c128_40], %44 {strides = array<i32>} : memref<32x512xbf16, #tpu.memory_space<vmem>>, vector<32x16xbf16>,
    %46 = vector.extract_strided_slice %42 {offsets = [0, 128], sizes = [32, 16], strides = [1, 1]} : vector<32x256xf32> to vector<32x16xf32>
    %47 = arith.truncf %46 : vector<32x16xf32> to vector<32x16xbf16>
    %c0_41 = arith.constant 0 : index
    %c256_42 = arith.constant 256 : index
    %48 = vector.load %arg12[%c0_41, %c256_42] : memref<32x512xbf16, #tpu.memory_space<vmem>>, vector<32x16xbf16>
    tpu.vector_store %arg12[%c0_41, %c256_42], %47 {strides = array<i32>} : memref<32x512xbf16, #tpu.memory_space<vmem>>, vector<32x16xbf16>,
    %c0_43 = arith.constant 0 : index
    %c0_44 = arith.constant 0 : index
    %c0_45 = arith.constant 0 : index
    %49 = vector.load %arg3[%c0_43, %c0_44, %c0_45] : memref<5x32x32xbf16, #tpu.memory_space<vmem>>, vector<1x32x32xbf16>
    %50 = vector.shape_cast %49 : vector<1x32x32xbf16> to vector<32x32xbf16>
    %c0_46 = arith.constant 0 : index
    %c126_47 = arith.constant 126 : index
    %51 = vector.load %arg12[%c0_46, %c126_47] : memref<32x512xbf16, #tpu.memory_space<vmem>>, vector<32x256xbf16>
    %cst_48 = arith.constant dense<0.000000e+00> : vector<32x256xf32>
    %52 = tpu.matmul %50, %51, %cst_48 {dimension_numbers = #tpu.dot_dimension_numbers<[1], [0], [0], [1], [0, 0, 1, 1], [], []>} : vector<32x32xbf16>, vector<32x256xbf16>, vector<32x256xf32> -> vector<32x256xf32>
    %c1_49 = arith.constant 1 : index
    %c0_50 = arith.constant 0 : index
    %c0_51 = arith.constant 0 : index
    %53 = vector.load %arg3[%c1_49, %c0_50, %c0_51] : memref<5x32x32xbf16, #tpu.memory_space<vmem>>, vector<1x32x32xbf16>
    %54 = vector.shape_cast %53 : vector<1x32x32xbf16> to vector<32x32xbf16>
    %c0_52 = arith.constant 0 : index
    %c127_53 = arith.constant 127 : index
    %55 = vector.load %arg12[%c0_52, %c127_53] : memref<32x512xbf16, #tpu.memory_space<vmem>>, vector<32x256xbf16>
    %cst_54 = arith.constant dense<0.000000e+00> : vector<32x256xf32>
    %56 = tpu.matmul %54, %55, %cst_54 {dimension_numbers = #tpu.dot_dimension_numbers<[1], [0], [0], [1], [0, 0, 1, 1], [], []>} : vector<32x32xbf16>, vector<32x256xbf16>, vector<32x256xf32> -> vector<32x256xf32>
    %57 = arith.addf %52, %56 : vector<32x256xf32>
    %c2_55 = arith.constant 2 : index
    %c0_56 = arith.constant 0 : index
    %c0_57 = arith.constant 0 : index
    %58 = vector.load %arg3[%c2_55, %c0_56, %c0_57] : memref<5x32x32xbf16, #tpu.memory_space<vmem>>, vector<1x32x32xbf16>
    %59 = vector.shape_cast %58 : vector<1x32x32xbf16> to vector<32x32xbf16>
    %c0_58 = arith.constant 0 : index
    %c128_59 = arith.constant 128 : index
    %60 = vector.load %arg12[%c0_58, %c128_59] : memref<32x512xbf16, #tpu.memory_space<vmem>>, vector<32x256xbf16>
    %cst_60 = arith.constant dense<0.000000e+00> : vector<32x256xf32>
    %61 = tpu.matmul %59, %60, %cst_60 {dimension_numbers = #tpu.dot_dimension_numbers<[1], [0], [0], [1], [0, 0, 1, 1], [], []>} : vector<32x32xbf16>, vector<32x256xbf16>, vector<32x256xf32> -> vector<32x256xf32>
    %62 = arith.addf %57, %61 : vector<32x256xf32>
    %c3_61 = arith.constant 3 : index
    %c0_62 = arith.constant 0 : index
    %c0_63 = arith.constant 0 : index
    %63 = vector.load %arg3[%c3_61, %c0_62, %c0_63] : memref<5x32x32xbf16, #tpu.memory_space<vmem>>, vector<1x32x32xbf16>
    %64 = vector.shape_cast %63 : vector<1x32x32xbf16> to vector<32x32xbf16>
    %c0_64 = arith.constant 0 : index
    %c129_65 = arith.constant 129 : index
    %65 = vector.load %arg12[%c0_64, %c129_65] : memref<32x512xbf16, #tpu.memory_space<vmem>>, vector<32x256xbf16>
    %cst_66 = arith.constant dense<0.000000e+00> : vector<32x256xf32>
    %66 = tpu.matmul %64, %65, %cst_66 {dimension_numbers = #tpu.dot_dimension_numbers<[1], [0], [0], [1], [0, 0, 1, 1], [], []>} : vector<32x32xbf16>, vector<32x256xbf16>, vector<32x256xf32> -> vector<32x256xf32>
    %67 = arith.addf %62, %66 : vector<32x256xf32>
    %c4_67 = arith.constant 4 : index
    %c0_68 = arith.constant 0 : index
    %c0_69 = arith.constant 0 : index
    %68 = vector.load %arg3[%c4_67, %c0_68, %c0_69] : memref<5x32x32xbf16, #tpu.memory_space<vmem>>, vector<1x32x32xbf16>
    %69 = vector.shape_cast %68 : vector<1x32x32xbf16> to vector<32x32xbf16>
    %c0_70 = arith.constant 0 : index
    %c130_71 = arith.constant 130 : index
    %70 = vector.load %arg12[%c0_70, %c130_71] : memref<32x512xbf16, #tpu.memory_space<vmem>>, vector<32x256xbf16>
    %cst_72 = arith.constant dense<0.000000e+00> : vector<32x256xf32>
    %71 = tpu.matmul %69, %70, %cst_72 {dimension_numbers = #tpu.dot_dimension_numbers<[1], [0], [0], [1], [0, 0, 1, 1], [], []>} : vector<32x32xbf16>, vector<32x256xbf16>, vector<32x256xf32> -> vector<32x256xf32>
    %72 = arith.addf %67, %71 : vector<32x256xf32>
    %c0_73 = arith.constant 0 : index
    %c0_74 = arith.constant 0 : index
    %73 = vector.load %arg4[%c0_73, %c0_74] : memref<32x1xf32, #tpu.memory_space<vmem>>, vector<32x1xf32>
    %74 = vector.broadcast %73 : vector<32x1xf32> to vector<32x256xf32>
    %75 = arith.addf %72, %74 : vector<32x256xf32>
    %76 = vector.extract_strided_slice %75 {offsets = [0, 0], sizes = [32, 16], strides = [1, 1]} : vector<32x256xf32> to vector<32x16xf32>
    %77 = arith.truncf %76 : vector<32x16xf32> to vector<32x16xbf16>
    %c0_75 = arith.constant 0 : index
    %c128_76 = arith.constant 128 : index
    %78 = vector.load %arg12[%c0_75, %c128_76] : memref<32x512xbf16, #tpu.memory_space<vmem>>, vector<32x16xbf16>
    tpu.vector_store %arg12[%c0_75, %c128_76], %77 {strides = array<i32>} : memref<32x512xbf16, #tpu.memory_space<vmem>>, vector<32x16xbf16>,
    %79 = vector.extract_strided_slice %75 {offsets = [0, 128], sizes = [32, 16], strides = [1, 1]} : vector<32x256xf32> to vector<32x16xf32>
    %80 = arith.truncf %79 : vector<32x16xf32> to vector<32x16xbf16>
    %c0_77 = arith.constant 0 : index
    %c256_78 = arith.constant 256 : index
    %81 = vector.load %arg12[%c0_77, %c256_78] : memref<32x512xbf16, #tpu.memory_space<vmem>>, vector<32x16xbf16>
    tpu.vector_store %arg12[%c0_77, %c256_78], %80 {strides = array<i32>} : memref<32x512xbf16, #tpu.memory_space<vmem>>, vector<32x16xbf16>,
    %c0_79 = arith.constant 0 : index
    %c0_80 = arith.constant 0 : index
    %c0_81 = arith.constant 0 : index
    %82 = vector.load %arg5[%c0_79, %c0_80, %c0_81] : memref<5x32x32xbf16, #tpu.memory_space<vmem>>, vector<1x32x32xbf16>
    %83 = vector.shape_cast %82 : vector<1x32x32xbf16> to vector<32x32xbf16>
    %c0_82 = arith.constant 0 : index
    %c126_83 = arith.constant 126 : index
    %84 = vector.load %arg12[%c0_82, %c126_83] : memref<32x512xbf16, #tpu.memory_space<vmem>>, vector<32x256xbf16>
    %cst_84 = arith.constant dense<0.000000e+00> : vector<32x256xf32>
    %85 = tpu.matmul %83, %84, %cst_84 {dimension_numbers = #tpu.dot_dimension_numbers<[1], [0], [0], [1], [0, 0, 1, 1], [], []>} : vector<32x32xbf16>, vector<32x256xbf16>, vector<32x256xf32> -> vector<32x256xf32>
    %c1_85 = arith.constant 1 : index
    %c0_86 = arith.constant 0 : index
    %c0_87 = arith.constant 0 : index
    %86 = vector.load %arg5[%c1_85, %c0_86, %c0_87] : memref<5x32x32xbf16, #tpu.memory_space<vmem>>, vector<1x32x32xbf16>
    %87 = vector.shape_cast %86 : vector<1x32x32xbf16> to vector<32x32xbf16>
    %c0_88 = arith.constant 0 : index
    %c127_89 = arith.constant 127 : index
    %88 = vector.load %arg12[%c0_88, %c127_89] : memref<32x512xbf16, #tpu.memory_space<vmem>>, vector<32x256xbf16>
    %cst_90 = arith.constant dense<0.000000e+00> : vector<32x256xf32>
    %89 = tpu.matmul %87, %88, %cst_90 {dimension_numbers = #tpu.dot_dimension_numbers<[1], [0], [0], [1], [0, 0, 1, 1], [], []>} : vector<32x32xbf16>, vector<32x256xbf16>, vector<32x256xf32> -> vector<32x256xf32>
    %90 = arith.addf %85, %89 : vector<32x256xf32>
    %c2_91 = arith.constant 2 : index
    %c0_92 = arith.constant 0 : index
    %c0_93 = arith.constant 0 : index
    %91 = vector.load %arg5[%c2_91, %c0_92, %c0_93] : memref<5x32x32xbf16, #tpu.memory_space<vmem>>, vector<1x32x32xbf16>
    %92 = vector.shape_cast %91 : vector<1x32x32xbf16> to vector<32x32xbf16>
    %c0_94 = arith.constant 0 : index
    %c128_95 = arith.constant 128 : index
    %93 = vector.load %arg12[%c0_94, %c128_95] : memref<32x512xbf16, #tpu.memory_space<vmem>>, vector<32x256xbf16>
    %cst_96 = arith.constant dense<0.000000e+00> : vector<32x256xf32>
    %94 = tpu.matmul %92, %93, %cst_96 {dimension_numbers = #tpu.dot_dimension_numbers<[1], [0], [0], [1], [0, 0, 1, 1], [], []>} : vector<32x32xbf16>, vector<32x256xbf16>, vector<32x256xf32> -> vector<32x256xf32>
    %95 = arith.addf %90, %94 : vector<32x256xf32>
    %c3_97 = arith.constant 3 : index
    %c0_98 = arith.constant 0 : index
    %c0_99 = arith.constant 0 : index
    %96 = vector.load %arg5[%c3_97, %c0_98, %c0_99] : memref<5x32x32xbf16, #tpu.memory_space<vmem>>, vector<1x32x32xbf16>
    %97 = vector.shape_cast %96 : vector<1x32x32xbf16> to vector<32x32xbf16>
    %c0_100 = arith.constant 0 : index
    %c129_101 = arith.constant 129 : index
    %98 = vector.load %arg12[%c0_100, %c129_101] : memref<32x512xbf16, #tpu.memory_space<vmem>>, vector<32x256xbf16>
    %cst_102 = arith.constant dense<0.000000e+00> : vector<32x256xf32>
    %99 = tpu.matmul %97, %98, %cst_102 {dimension_numbers = #tpu.dot_dimension_numbers<[1], [0], [0], [1], [0, 0, 1, 1], [], []>} : vector<32x32xbf16>, vector<32x256xbf16>, vector<32x256xf32> -> vector<32x256xf32>
    %100 = arith.addf %95, %99 : vector<32x256xf32>
    %c4_103 = arith.constant 4 : index
    %c0_104 = arith.constant 0 : index
    %c0_105 = arith.constant 0 : index
    %101 = vector.load %arg5[%c4_103, %c0_104, %c0_105] : memref<5x32x32xbf16, #tpu.memory_space<vmem>>, vector<1x32x32xbf16>
    %102 = vector.shape_cast %101 : vector<1x32x32xbf16> to vector<32x32xbf16>
    %c0_106 = arith.constant 0 : index
    %c130_107 = arith.constant 130 : index
    %103 = vector.load %arg12[%c0_106, %c130_107] : memref<32x512xbf16, #tpu.memory_space<vmem>>, vector<32x256xbf16>
    %cst_108 = arith.constant dense<0.000000e+00> : vector<32x256xf32>
    %104 = tpu.matmul %102, %103, %cst_108 {dimension_numbers = #tpu.dot_dimension_numbers<[1], [0], [0], [1], [0, 0, 1, 1], [], []>} : vector<32x32xbf16>, vector<32x256xbf16>, vector<32x256xf32> -> vector<32x256xf32>
    %105 = arith.addf %100, %104 : vector<32x256xf32>
    %c0_109 = arith.constant 0 : index
    %c0_110 = arith.constant 0 : index
    %106 = vector.load %arg6[%c0_109, %c0_110] : memref<32x1xf32, #tpu.memory_space<vmem>>, vector<32x1xf32>
    %107 = vector.broadcast %106 : vector<32x1xf32> to vector<32x256xf32>
    %108 = arith.addf %105, %107 : vector<32x256xf32>
    %109 = vector.extract_strided_slice %108 {offsets = [0, 0], sizes = [32, 16], strides = [1, 1]} : vector<32x256xf32> to vector<32x16xf32>
    %110 = arith.truncf %109 : vector<32x16xf32> to vector<32x16xbf16>
    %c0_111 = arith.constant 0 : index
    %c128_112 = arith.constant 128 : index
    %111 = vector.load %arg12[%c0_111, %c128_112] : memref<32x512xbf16, #tpu.memory_space<vmem>>, vector<32x16xbf16>
    tpu.vector_store %arg12[%c0_111, %c128_112], %110 {strides = array<i32>} : memref<32x512xbf16, #tpu.memory_space<vmem>>, vector<32x16xbf16>,
    %112 = vector.extract_strided_slice %108 {offsets = [0, 128], sizes = [32, 16], strides = [1, 1]} : vector<32x256xf32> to vector<32x16xf32>
    %113 = arith.truncf %112 : vector<32x16xf32> to vector<32x16xbf16>
    %c0_113 = arith.constant 0 : index
    %c256_114 = arith.constant 256 : index
    %114 = vector.load %arg12[%c0_113, %c256_114] : memref<32x512xbf16, #tpu.memory_space<vmem>>, vector<32x16xbf16>
    tpu.vector_store %arg12[%c0_113, %c256_114], %113 {strides = array<i32>} : memref<32x512xbf16, #tpu.memory_space<vmem>>, vector<32x16xbf16>,
    %c0_115 = arith.constant 0 : index
    %c0_116 = arith.constant 0 : index
    %c0_117 = arith.constant 0 : index
    %115 = vector.load %arg7[%c0_115, %c0_116, %c0_117] : memref<5x32x32xbf16, #tpu.memory_space<vmem>>, vector<1x32x32xbf16>
    %116 = vector.shape_cast %115 : vector<1x32x32xbf16> to vector<32x32xbf16>
    %c0_118 = arith.constant 0 : index
    %c126_119 = arith.constant 126 : index
    %117 = vector.load %arg12[%c0_118, %c126_119] : memref<32x512xbf16, #tpu.memory_space<vmem>>, vector<32x256xbf16>
    %cst_120 = arith.constant dense<0.000000e+00> : vector<32x256xf32>
    %118 = tpu.matmul %116, %117, %cst_120 {dimension_numbers = #tpu.dot_dimension_numbers<[1], [0], [0], [1], [0, 0, 1, 1], [], []>} : vector<32x32xbf16>, vector<32x256xbf16>, vector<32x256xf32> -> vector<32x256xf32>
    %c1_121 = arith.constant 1 : index
    %c0_122 = arith.constant 0 : index
    %c0_123 = arith.constant 0 : index
    %119 = vector.load %arg7[%c1_121, %c0_122, %c0_123] : memref<5x32x32xbf16, #tpu.memory_space<vmem>>, vector<1x32x32xbf16>
    %120 = vector.shape_cast %119 : vector<1x32x32xbf16> to vector<32x32xbf16>
    %c0_124 = arith.constant 0 : index
    %c127_125 = arith.constant 127 : index
    %121 = vector.load %arg12[%c0_124, %c127_125] : memref<32x512xbf16, #tpu.memory_space<vmem>>, vector<32x256xbf16>
    %cst_126 = arith.constant dense<0.000000e+00> : vector<32x256xf32>
    %122 = tpu.matmul %120, %121, %cst_126 {dimension_numbers = #tpu.dot_dimension_numbers<[1], [0], [0], [1], [0, 0, 1, 1], [], []>} : vector<32x32xbf16>, vector<32x256xbf16>, vector<32x256xf32> -> vector<32x256xf32>
    %123 = arith.addf %118, %122 : vector<32x256xf32>
    %c2_127 = arith.constant 2 : index
    %c0_128 = arith.constant 0 : index
    %c0_129 = arith.constant 0 : index
    %124 = vector.load %arg7[%c2_127, %c0_128, %c0_129] : memref<5x32x32xbf16, #tpu.memory_space<vmem>>, vector<1x32x32xbf16>
    %125 = vector.shape_cast %124 : vector<1x32x32xbf16> to vector<32x32xbf16>
    %c0_130 = arith.constant 0 : index
    %c128_131 = arith.constant 128 : index
    %126 = vector.load %arg12[%c0_130, %c128_131] : memref<32x512xbf16, #tpu.memory_space<vmem>>, vector<32x256xbf16>
    %cst_132 = arith.constant dense<0.000000e+00> : vector<32x256xf32>
    %127 = tpu.matmul %125, %126, %cst_132 {dimension_numbers = #tpu.dot_dimension_numbers<[1], [0], [0], [1], [0, 0, 1, 1], [], []>} : vector<32x32xbf16>, vector<32x256xbf16>, vector<32x256xf32> -> vector<32x256xf32>
    %128 = arith.addf %123, %127 : vector<32x256xf32>
    %c3_133 = arith.constant 3 : index
    %c0_134 = arith.constant 0 : index
    %c0_135 = arith.constant 0 : index
    %129 = vector.load %arg7[%c3_133, %c0_134, %c0_135] : memref<5x32x32xbf16, #tpu.memory_space<vmem>>, vector<1x32x32xbf16>
    %130 = vector.shape_cast %129 : vector<1x32x32xbf16> to vector<32x32xbf16>
    %c0_136 = arith.constant 0 : index
    %c129_137 = arith.constant 129 : index
    %131 = vector.load %arg12[%c0_136, %c129_137] : memref<32x512xbf16, #tpu.memory_space<vmem>>, vector<32x256xbf16>
    %cst_138 = arith.constant dense<0.000000e+00> : vector<32x256xf32>
    %132 = tpu.matmul %130, %131, %cst_138 {dimension_numbers = #tpu.dot_dimension_numbers<[1], [0], [0], [1], [0, 0, 1, 1], [], []>} : vector<32x32xbf16>, vector<32x256xbf16>, vector<32x256xf32> -> vector<32x256xf32>
    %133 = arith.addf %128, %132 : vector<32x256xf32>
    %c4_139 = arith.constant 4 : index
    %c0_140 = arith.constant 0 : index
    %c0_141 = arith.constant 0 : index
    %134 = vector.load %arg7[%c4_139, %c0_140, %c0_141] : memref<5x32x32xbf16, #tpu.memory_space<vmem>>, vector<1x32x32xbf16>
    %135 = vector.shape_cast %134 : vector<1x32x32xbf16> to vector<32x32xbf16>
    %c0_142 = arith.constant 0 : index
    %c130_143 = arith.constant 130 : index
    %136 = vector.load %arg12[%c0_142, %c130_143] : memref<32x512xbf16, #tpu.memory_space<vmem>>, vector<32x256xbf16>
    %cst_144 = arith.constant dense<0.000000e+00> : vector<32x256xf32>
    %137 = tpu.matmul %135, %136, %cst_144 {dimension_numbers = #tpu.dot_dimension_numbers<[1], [0], [0], [1], [0, 0, 1, 1], [], []>} : vector<32x32xbf16>, vector<32x256xbf16>, vector<32x256xf32> -> vector<32x256xf32>
    %138 = arith.addf %133, %137 : vector<32x256xf32>
    %c0_145 = arith.constant 0 : index
    %c0_146 = arith.constant 0 : index
    %139 = vector.load %arg8[%c0_145, %c0_146] : memref<32x1xf32, #tpu.memory_space<vmem>>, vector<32x1xf32>
    %140 = vector.broadcast %139 : vector<32x1xf32> to vector<32x256xf32>
    %141 = arith.addf %138, %140 : vector<32x256xf32>
    %142 = vector.extract_strided_slice %141 {offsets = [0, 0], sizes = [32, 16], strides = [1, 1]} : vector<32x256xf32> to vector<32x16xf32>
    %143 = arith.truncf %142 : vector<32x16xf32> to vector<32x16xbf16>
    %c0_147 = arith.constant 0 : index
    %c128_148 = arith.constant 128 : index
    %144 = vector.load %arg12[%c0_147, %c128_148] : memref<32x512xbf16, #tpu.memory_space<vmem>>, vector<32x16xbf16>
    tpu.vector_store %arg12[%c0_147, %c128_148], %143 {strides = array<i32>} : memref<32x512xbf16, #tpu.memory_space<vmem>>, vector<32x16xbf16>,
    %145 = vector.extract_strided_slice %141 {offsets = [0, 128], sizes = [32, 16], strides = [1, 1]} : vector<32x256xf32> to vector<32x16xf32>
    %146 = arith.truncf %145 : vector<32x16xf32> to vector<32x16xbf16>
    %c0_149 = arith.constant 0 : index
    %c256_150 = arith.constant 256 : index
    %147 = vector.load %arg12[%c0_149, %c256_150] : memref<32x512xbf16, #tpu.memory_space<vmem>>, vector<32x16xbf16>
    tpu.vector_store %arg12[%c0_149, %c256_150], %146 {strides = array<i32>} : memref<32x512xbf16, #tpu.memory_space<vmem>>, vector<32x16xbf16>,
    %c0_151 = arith.constant 0 : index
    %c0_152 = arith.constant 0 : index
    %c0_153 = arith.constant 0 : index
    %148 = vector.load %arg9[%c0_151, %c0_152, %c0_153] : memref<5x8x32xbf16, #tpu.memory_space<vmem>>, vector<1x8x32xbf16>
    %149 = vector.shape_cast %148 : vector<1x8x32xbf16> to vector<8x32xbf16>
    %c0_154 = arith.constant 0 : index
    %c126_155 = arith.constant 126 : index
    %150 = vector.load %arg12[%c0_154, %c126_155] : memref<32x512xbf16, #tpu.memory_space<vmem>>, vector<32x256xbf16>
    %cst_156 = arith.constant dense<0.000000e+00> : vector<8x256xf32>
    %151 = tpu.matmul %149, %150, %cst_156 {dimension_numbers = #tpu.dot_dimension_numbers<[1], [0], [0], [1], [0, 0, 1, 1], [], []>} : vector<8x32xbf16>, vector<32x256xbf16>, vector<8x256xf32> -> vector<8x256xf32>
    %c1_157 = arith.constant 1 : index
    %c0_158 = arith.constant 0 : index
    %c0_159 = arith.constant 0 : index
    %152 = vector.load %arg9[%c1_157, %c0_158, %c0_159] : memref<5x8x32xbf16, #tpu.memory_space<vmem>>, vector<1x8x32xbf16>
    %153 = vector.shape_cast %152 : vector<1x8x32xbf16> to vector<8x32xbf16>
    %c0_160 = arith.constant 0 : index
    %c127_161 = arith.constant 127 : index
    %154 = vector.load %arg12[%c0_160, %c127_161] : memref<32x512xbf16, #tpu.memory_space<vmem>>, vector<32x256xbf16>
    %cst_162 = arith.constant dense<0.000000e+00> : vector<8x256xf32>
    %155 = tpu.matmul %153, %154, %cst_162 {dimension_numbers = #tpu.dot_dimension_numbers<[1], [0], [0], [1], [0, 0, 1, 1], [], []>} : vector<8x32xbf16>, vector<32x256xbf16>, vector<8x256xf32> -> vector<8x256xf32>
    %156 = arith.addf %151, %155 : vector<8x256xf32>
    %c2_163 = arith.constant 2 : index
    %c0_164 = arith.constant 0 : index
    %c0_165 = arith.constant 0 : index
    %157 = vector.load %arg9[%c2_163, %c0_164, %c0_165] : memref<5x8x32xbf16, #tpu.memory_space<vmem>>, vector<1x8x32xbf16>
    %158 = vector.shape_cast %157 : vector<1x8x32xbf16> to vector<8x32xbf16>
    %c0_166 = arith.constant 0 : index
    %c128_167 = arith.constant 128 : index
    %159 = vector.load %arg12[%c0_166, %c128_167] : memref<32x512xbf16, #tpu.memory_space<vmem>>, vector<32x256xbf16>
    %cst_168 = arith.constant dense<0.000000e+00> : vector<8x256xf32>
    %160 = tpu.matmul %158, %159, %cst_168 {dimension_numbers = #tpu.dot_dimension_numbers<[1], [0], [0], [1], [0, 0, 1, 1], [], []>} : vector<8x32xbf16>, vector<32x256xbf16>, vector<8x256xf32> -> vector<8x256xf32>
    %161 = arith.addf %156, %160 : vector<8x256xf32>
    %c3_169 = arith.constant 3 : index
    %c0_170 = arith.constant 0 : index
    %c0_171 = arith.constant 0 : index
    %162 = vector.load %arg9[%c3_169, %c0_170, %c0_171] : memref<5x8x32xbf16, #tpu.memory_space<vmem>>, vector<1x8x32xbf16>
    %163 = vector.shape_cast %162 : vector<1x8x32xbf16> to vector<8x32xbf16>
    %c0_172 = arith.constant 0 : index
    %c129_173 = arith.constant 129 : index
    %164 = vector.load %arg12[%c0_172, %c129_173] : memref<32x512xbf16, #tpu.memory_space<vmem>>, vector<32x256xbf16>
    %cst_174 = arith.constant dense<0.000000e+00> : vector<8x256xf32>
    %165 = tpu.matmul %163, %164, %cst_174 {dimension_numbers = #tpu.dot_dimension_numbers<[1], [0], [0], [1], [0, 0, 1, 1], [], []>} : vector<8x32xbf16>, vector<32x256xbf16>, vector<8x256xf32> -> vector<8x256xf32>
    %166 = arith.addf %161, %165 : vector<8x256xf32>
    %c4_175 = arith.constant 4 : index
    %c0_176 = arith.constant 0 : index
    %c0_177 = arith.constant 0 : index
    %167 = vector.load %arg9[%c4_175, %c0_176, %c0_177] : memref<5x8x32xbf16, #tpu.memory_space<vmem>>, vector<1x8x32xbf16>
    %168 = vector.shape_cast %167 : vector<1x8x32xbf16> to vector<8x32xbf16>
    %c0_178 = arith.constant 0 : index
    %c130_179 = arith.constant 130 : index
    %169 = vector.load %arg12[%c0_178, %c130_179] : memref<32x512xbf16, #tpu.memory_space<vmem>>, vector<32x256xbf16>
    %cst_180 = arith.constant dense<0.000000e+00> : vector<8x256xf32>
    %170 = tpu.matmul %168, %169, %cst_180 {dimension_numbers = #tpu.dot_dimension_numbers<[1], [0], [0], [1], [0, 0, 1, 1], [], []>} : vector<8x32xbf16>, vector<32x256xbf16>, vector<8x256xf32> -> vector<8x256xf32>
    %171 = arith.addf %166, %170 : vector<8x256xf32>
    %c0_181 = arith.constant 0 : index
    %c0_182 = arith.constant 0 : index
    %172 = vector.load %arg10[%c0_181, %c0_182] : memref<8x1xf32, #tpu.memory_space<vmem>>, vector<8x1xf32>
    %173 = vector.broadcast %172 : vector<8x1xf32> to vector<8x256xf32>
    %174 = arith.addf %171, %173 : vector<8x256xf32>
    %175 = vector.extract_strided_slice %174 {offsets = [0, 0], sizes = [8, 16], strides = [1, 1]} : vector<8x256xf32> to vector<8x16xf32>
    %c0_183 = arith.constant 0 : index
    %c0_184 = arith.constant 0 : index
    %c0_185 = arith.constant 0 : index
    %176 = vector.load %arg11[%c0_183, %c0_184, %c0_185] : memref<2x8x16xf32, #tpu.memory_space<vmem>>, vector<1x8x16xf32>
    %177 = vector.shape_cast %176 : vector<1x8x16xf32> to vector<8x16xf32>
    %178 = vector.shape_cast %175 : vector<8x16xf32> to vector<1x8x16xf32>
    tpu.vector_store %arg11[%c0_183, %c0_184, %c0_185], %178 {strides = array<i32>} : memref<2x8x16xf32, #tpu.memory_space<vmem>>, vector<1x8x16xf32>,
    %179 = vector.extract_strided_slice %174 {offsets = [0, 128], sizes = [8, 16], strides = [1, 1]} : vector<8x256xf32> to vector<8x16xf32>
    %c1_186 = arith.constant 1 : index
    %c0_187 = arith.constant 0 : index
    %c0_188 = arith.constant 0 : index
    %180 = vector.load %arg11[%c1_186, %c0_187, %c0_188] : memref<2x8x16xf32, #tpu.memory_space<vmem>>, vector<1x8x16xf32>
    %181 = vector.shape_cast %180 : vector<1x8x16xf32> to vector<8x16xf32>
    %182 = vector.shape_cast %179 : vector<8x16xf32> to vector<1x8x16xf32>
    tpu.vector_store %arg11[%c1_186, %c0_187, %c0_188], %182 {strides = array<i32>} : memref<2x8x16xf32, #tpu.memory_space<vmem>>, vector<1x8x16xf32>,
    return
  }
}

</mosaic_0001>

<llo_original>
// kernel: tpu_custom_call.1
$region0: #{tpu_custom_call.1}
  #allocation0 [shape = 'u32[]', space=smem, size = 0x4, offset = 0x4, fixed_abs, tag = 'smem constant byte address 0x4 - core index']
  #allocation1 [shape = 'u32[144,128]{1,0:T(1,128)}', space=vmem, size = 0x12000, scoped, tag = 'internal scratch']
  #allocation2 [shape = 'bf16[32,512]{1,0:T(8,128)(2,1)}', space=vmem, size = 0x8000, scoped, tag = 'scratch operand']
  %s0 = inlined_call_operand.hbm [shape: f32[2,8,16], index: 0, kind: input, shape index: {}]
  %s1 = inlined_call_operand.vmem [shape: bf16[5,32,8], index: 1, kind: input, shape index: {}]
  %s2 = inlined_call_operand.vmem [shape: f32[32,1], index: 2, kind: input, shape index: {}]
  %s3 = inlined_call_operand.vmem [shape: bf16[5,32,32], index: 3, kind: input, shape index: {}]
  %s4 = inlined_call_operand.vmem [shape: f32[32,1], index: 4, kind: input, shape index: {}]
  %s5 = inlined_call_operand.vmem [shape: bf16[5,32,32], index: 5, kind: input, shape index: {}]
  %s6 = inlined_call_operand.vmem [shape: f32[32,1], index: 6, kind: input, shape index: {}]
  %s7 = inlined_call_operand.vmem [shape: bf16[5,32,32], index: 7, kind: input, shape index: {}]
  %s8 = inlined_call_operand.vmem [shape: f32[32,1], index: 8, kind: input, shape index: {}]
  %s9 = inlined_call_operand.hbm [shape: bf16[5,8,32], index: 9, kind: input, shape index: {}]
  %s10 = inlined_call_operand.vmem [shape: f32[8,1], index: 10, kind: input, shape index: {}]
  %s11 = inlined_call_operand.hbm [shape: f32[2,8,16], index: 11, kind: output, shape index: {}]
  %s12 = sld [smem:[#allocation0]]
  $region62: #{tpu_custom_call.1} parent=0
    _
  %s14 = ssub.s32 1, %s12
  %s15 = scalar_select 0, %s14, %s12
  $region1: #{tpu_custom_call.1} parent=0
    #allocation3 [shape = 'u8[8192]{0}', space=vmem, size = 0x2000, scoped, tag = 'input window, operand 0, single buffered']
    #allocation4 [shape = 's32[1]{0}', space=sflag, size = 0x4, scoped, tag = 'scoped memory for tpu_custom_call.1']
    #allocation5 [shape = 's32[1]{0}', space=sflag, size = 0x4, scoped, tag = 'scoped memory for tpu_custom_call.1']
    #allocation6 [shape = 'u8[10240]{0}', space=vmem, size = 0x2800, scoped, tag = 'input window, operand 9, single buffered']
    #allocation7 [shape = 's32[1]{0}', space=sflag, size = 0x4, scoped, tag = 'scoped memory for tpu_custom_call.1']
    #allocation8 [shape = 'u8[8192]{0}', space=vmem, size = 0x2000, scoped, tag = 'output window, operand 0, single buffered']
    %16 = vsyncpa [#allocation4], 0
    %17 = vsyncpa [#allocation7], 0
    %18 = vsyncpa [#allocation5], 0
    // Predicated region
    $region2: #{tpu_custom_call.1} parent=1 // pred_check
      _
    $region3: #{tpu_custom_call.1} parent=1 // pred_check_branch
      %20 = sbr.rel (0) target = $region5
    $region4: #{tpu_custom_call.1} parent=1 // pred_region
      %s22 = ssub.s32 256, 256
      %23 = vsyncadd [#allocation4], %s22
      %s24 = sshll.u32 [#allocation3], 4
      %s25 = int_to_ptr.vmem [resolvable:$true] %s24
      %30 = dma.hbm_to_vmem [thread:$0]  %s0, 256, %s25, [#allocation4], 128, 128, 8
    $region5: #{tpu_custom_call.1} parent=1 // pred_fallthru
      _
    // Predicated region
    $region6: #{tpu_custom_call.1} parent=1 // pred_check
      _
    $region7: #{tpu_custom_call.1} parent=1 // pred_check_branch
      %32 = sbr.rel (0) target = $region9
    $region8: #{tpu_custom_call.1} parent=1 // pred_region
      _
    $region9: #{tpu_custom_call.1} parent=1 // pred_fallthru
      _
    // Predicated region
    $region10: #{tpu_custom_call.1} parent=1 // pred_check
      _
    $region11: #{tpu_custom_call.1} parent=1 // pred_check_branch
      %34 = sbr.rel (0) target = $region13
    $region12: #{tpu_custom_call.1} parent=1 // pred_region
      _
    $region13: #{tpu_custom_call.1} parent=1 // pred_fallthru
      _
    // Predicated region
    $region14: #{tpu_custom_call.1} parent=1 // pred_check
      _
    $region15: #{tpu_custom_call.1} parent=1 // pred_check_branch
      %36 = sbr.rel (0) target = $region17
    $region16: #{tpu_custom_call.1} parent=1 // pred_region
      _
    $region17: #{tpu_custom_call.1} parent=1 // pred_fallthru
      _
    // Predicated region
    $region18: #{tpu_custom_call.1} parent=1 // pred_check
      _
    $region19: #{tpu_custom_call.1} parent=1 // pred_check_branch
      %38 = sbr.rel (0) target = $region21
    $region20: #{tpu_custom_call.1} parent=1 // pred_region
      _
    $region21: #{tpu_custom_call.1} parent=1 // pred_fallthru
      _
    // Predicated region
    $region22: #{tpu_custom_call.1} parent=1 // pred_check
      _
    $region23: #{tpu_custom_call.1} parent=1 // pred_check_branch
      %40 = sbr.rel (0) target = $region25
    $region24: #{tpu_custom_call.1} parent=1 // pred_region
      _
    $region25: #{tpu_custom_call.1} parent=1 // pred_fallthru
      _
    // Predicated region
    $region26: #{tpu_custom_call.1} parent=1 // pred_check
      _
    $region27: #{tpu_custom_call.1} parent=1 // pred_check_branch
      %42 = sbr.rel (0) target = $region29
    $region28: #{tpu_custom_call.1} parent=1 // pred_region
      _
    $region29: #{tpu_custom_call.1} parent=1 // pred_fallthru
      _
    // Predicated region
    $region30: #{tpu_custom_call.1} parent=1 // pred_check
      _
    $region31: #{tpu_custom_call.1} parent=1 // pred_check_branch
      %44 = sbr.rel (0) target = $region33
    $region32: #{tpu_custom_call.1} parent=1 // pred_region
      _
    $region33: #{tpu_custom_call.1} parent=1 // pred_fallthru
      _
    // Predicated region
    $region34: #{tpu_custom_call.1} parent=1 // pred_check
      _
    $region35: #{tpu_custom_call.1} parent=1 // pred_check_branch
      %46 = sbr.rel (0) target = $region37
    $region36: #{tpu_custom_call.1} parent=1 // pred_region
      _
    $region37: #{tpu_custom_call.1} parent=1 // pred_fallthru
      _
    // Predicated region
    $region38: #{tpu_custom_call.1} parent=1 // pred_check
      _
    $region39: #{tpu_custom_call.1} parent=1 // pred_check_branch
      %48 = sbr.rel (0) target = $region41
    $region40: #{tpu_custom_call.1} parent=1 // pred_region
      %s50 = ssub.s32 320, 320
      %51 = vsyncadd [#allocation7], %s50
      %s52 = sshll.u32 [#allocation6], 4
      %s53 = int_to_ptr.vmem [resolvable:$true] %s52
      %58 = dma.hbm_to_vmem [thread:$0]  %s9, 320, %s53, [#allocation7], 64, 64, 4
    $region41: #{tpu_custom_call.1} parent=1 // pred_fallthru
      _
    // Predicated region
    $region42: #{tpu_custom_call.1} parent=1 // pred_check
      _
    $region43: #{tpu_custom_call.1} parent=1 // pred_check_branch
      %60 = sbr.rel (0) target = $region45
    $region44: #{tpu_custom_call.1} parent=1 // pred_region
      _
    $region45: #{tpu_custom_call.1} parent=1 // pred_fallthru
      _
    // Predicated region
    $region46: #{tpu_custom_call.1} parent=1 // pred_check
      _
    $region47: #{tpu_custom_call.1} parent=1 // pred_check_branch
      %62 = sbr.rel (0) target = $region49
    $region48: #{tpu_custom_call.1} parent=1 // pred_region
      %63 = dma.done [#allocation4], 256
    $region49: #{tpu_custom_call.1} parent=1 // pred_fallthru
      _
    // Predicated region
    $region50: #{tpu_custom_call.1} parent=1 // pred_check
      _
    $region51: #{tpu_custom_call.1} parent=1 // pred_check_branch
      %65 = sbr.rel (0) target = $region53
    $region52: #{tpu_custom_call.1} parent=1 // pred_region
      %66 = dma.done [#allocation7], 320
    $region53: #{tpu_custom_call.1} parent=1 // pred_fallthru
      _
    %68 = vst [vmem:[#allocation2] sm:$0xf] 0
    %69 = vst [vmem:[#allocation2 + $0x10] sm:$0xf] 0
    %70 = vst [vmem:[#allocation2 + $0x20] sm:$0xf] 0
    %71 = vst [vmem:[#allocation2 + $0x30] sm:$0xf] 0
    %vm72 = vcmask 1043584
    %73 = vst.msk [vmem:[#allocation2 + $0x4] sm:$0xf] %vm72, 0
    %74 = vst.msk [vmem:[#allocation2 + $0x14] sm:$0xf] %vm72, 0
    %75 = vst.msk [vmem:[#allocation2 + $0x24] sm:$0xf] %vm72, 0
    %76 = vst.msk [vmem:[#allocation2 + $0x34] sm:$0xf] %vm72, 0
    %77 = vst.msk [vmem:[#allocation2 + $0x8] sm:$0xf] %vm72, 0
    %78 = vst.msk [vmem:[#allocation2 + $0x18] sm:$0xf] %vm72, 0
    %79 = vst.msk [vmem:[#allocation2 + $0x28] sm:$0xf] %vm72, 0
    %80 = vst.msk [vmem:[#allocation2 + $0x38] sm:$0xf] %vm72, 0
    %81 = vst [vmem:[#allocation2 + $0xc] sm:$0xf] 0
    %82 = vst [vmem:[#allocation2 + $0x1c] sm:$0xf] 0
    %83 = vst [vmem:[#allocation2 + $0x2c] sm:$0xf] 0
    %84 = vst [vmem:[#allocation2 + $0x3c] sm:$0xf] 0
    %v85 = vld [vmem:[#allocation3] sm:$0xff]
    %v86 = vpack.c.bf16 %v85, %v85
    %vm87 = vcmask 125952
    %88 = vst.msk [vmem:[#allocation2 + $0x4] sm:$0xf] %vm87, %v86
    %s89 = scalar_lea.vmem [#allocation3], 8
    %v90 = vld [vmem:[%s89] sm:$0xff]
    %v91 = vpack.c.bf16 %v90, %v90
    %92 = vst.msk [vmem:[#allocation2 + $0x8] sm:$0xf] %vm87, %v91
    %v93 = vld [vmem:[%s1] sm:$0xf]
    %v94 = vld [vmem:[%s1 + $0x4] sm:$0xf]
    %v95 = vld [vmem:[%s1 + $0x8] sm:$0xf]
    %v96 = vld [vmem:[%s1 + $0xc] sm:$0xf]
    %v97 = vld [vmem:[#allocation2] sm:$0xff]
    %v98 = vld [vmem:[#allocation2 + $0x8] sm:$0xf]
    %s99 = scalar_lea.vmem %s1, 16
    %v100 = vld [vmem:[%s99] sm:$0xf]
    %v101 = vld [vmem:[%s99 + $0x4] sm:$0xf]
    %v102 = vld [vmem:[%s99 + $0x8] sm:$0xf]
    %v103 = vld [vmem:[%s99 + $0xc] sm:$0xf]
    %v108 = vunpack.c.l.b16 %v100
    %v109 = vunpack.c.l.b16 %v101
    %v110 = vunpack.c.l.b16 %v102
    %v111 = vunpack.c.l.b16 %v103
    %v112 = vpack.c.b16 %v109, %v108
    %v113 = vpack.c.b16 %v111, %v110
    %v116 = vunpack.c.l.b16 %v97
    %v117 = vunpack.c.h.b16 %v97
    %v118 = vunpack.c.l.b16 %v98
    %v119 = vpack.c.b16 %v116, %v116
    %v120 = vpack.c.b16 %v117, %v117
    %v121 = vpack.c.b16 %v118, %v118
    %122 = vrot.lane.b32.xlu0 %v119, 1
    %v123 = vpop.permute.xlu0 %122
    %124 = vrot.lane.b32.xlu0 %v120, 1
    %v125 = vpop.permute.xlu0 %124
    %126 = vrot.lane.b32.xlu0 %v121, 1
    %v127 = vpop.permute.xlu0 %126
    %vm128 = vcmask 7168
    %v129 = vsel %vm128, %v123, %v125
    %v130 = vsel %vm128, %v125, %v127
    %vm131 = vcmask 64512
    %v133 = vsel %vm131, %v112, 0
    %v136 = vsel %vm131, %v113, 0
    %vm138 = vcmask 1043456
    %v140 = vsel %vm138, %v129, 0
    %v143 = vsel %vm138, %v130, 0
    %145 = vmatprep.subr.bf16.mxu0 0
    %146 = vmatpush1.bf16.msra.mxu0 0
    %147 = vmatprep.subr.bf16.mxu0 0
    %148 = vmatpush1.bf16.msra.mxu0 0
    %149 = vmatprep.subr.bf16.mxu0 0
    %150 = vmatpush1.bf16.msra.mxu0 0
    %151 = vmatprep.subr.bf16.mxu0 0
    %152 = vmatpush1.bf16.msra.mxu0 0
    %153 = vmatprep.subr.bf16.mxu0 0
    %154 = vmatpush1.bf16.msra.mxu0 0
    %155 = vmatprep.subr.bf16.mxu0 0
    %156 = vmatpush1.bf16.msra.mxu0 0
    %157 = vmatprep.subr.bf16.mxu0 0
    %158 = vmatpush1.bf16.msra.mxu0 0
    %159 = vmatprep.subr.bf16.mxu0 %v143
    %160 = vmatpush1.bf16.msra.mxu0 %v140
    %161 = vmatprep.subr.bf16.mxu0 0
    %162 = vmatpush2.bf16.msra.mxu0 0
    %163 = vmatprep.subr.bf16.mxu0 0
    %164 = vmatpush2.bf16.msra.mxu0 0
    %165 = vmatprep.subr.bf16.mxu0 0
    %166 = vmatpush2.bf16.msra.mxu0 0
    %167 = vmatprep.subr.bf16.mxu0 0
    %168 = vmatpush2.bf16.msra.mxu0 0
    %169 = vmatprep.subr.bf16.mxu0 0
    %170 = vmatpush2.bf16.msra.mxu0 0
    %171 = vmatprep.subr.bf16.mxu0 0
    %172 = vmatpush2.bf16.msra.mxu0 0
    %173 = vmatprep.subr.bf16.mxu0 0
    %174 = vmatpush2.bf16.msra.mxu0 0
    %175 = vmatprep.subr.bf16.mxu0 0
    %176 = vmatpush2.bf16.msra.mxu0 0
    %177 = vmatprep.mubr.bf16.mxu0 0
    %178 = vmatmul.mubr.bf16.gmra.mxu0 %v133
    %v179 = vpop.f32.mrf.mxu0
    %v180 = vadd.f32 0.0, %v179
    %v181 = vpop.f32.mrf.mxu0
    %v182 = vadd.f32 0.0, %v181
    %v183 = vpop.f32.mrf.mxu0
    %v184 = vadd.f32 0.0, %v183
    %v185 = vpop.f32.mrf.mxu0
    %v186 = vadd.f32 0.0, %v185
    %187 = vmatprep.mubr.bf16.mxu0 0
    %188 = vmatmul.mubr.bf16.gmra.mxu0 %v136
    %v189 = vpop.f32.mrf.mxu0
    %v190 = vadd.f32 0.0, %v189
    %v191 = vpop.f32.mrf.mxu0
    %v192 = vadd.f32 0.0, %v191
    %v193 = vpop.f32.mrf.mxu0
    %v194 = vadd.f32 0.0, %v193
    %v195 = vpop.f32.mrf.mxu0
    %v196 = vadd.f32 0.0, %v195
    %197 = vdwg.mxu0
    %v202 = vunpack.c.l.b16 %v93
    %v203 = vunpack.c.l.b16 %v94
    %v204 = vunpack.c.l.b16 %v95
    %v205 = vunpack.c.l.b16 %v96
    %v206 = vpack.c.b16 %v203, %v202
    %v207 = vpack.c.b16 %v205, %v204
    %208 = vrot.lane.b32.xlu0 %v119, 2
    %v209 = vpop.permute.xlu0 %208
    %210 = vrot.lane.b32.xlu0 %v120, 2
    %v211 = vpop.permute.xlu0 %210
    %212 = vrot.lane.b32.xlu0 %v121, 2
    %v213 = vpop.permute.xlu0 %212
    %vm214 = vcmask 15360
    %v215 = vsel %vm214, %v209, %v211
    %v216 = vsel %vm214, %v211, %v213
    %v218 = vsel %vm131, %v206, 0
    %v221 = vsel %vm131, %v207, 0
    %v224 = vsel %vm138, %v215, 0
    %v227 = vsel %vm138, %v216, 0
    %229 = vmatprep.subr.bf16.mxu0 0
    %230 = vmatpush1.bf16.msra.mxu0 0
    %231 = vmatprep.subr.bf16.mxu0 0
    %232 = vmatpush1.bf16.msra.mxu0 0
    %233 = vmatprep.subr.bf16.mxu0 0
    %234 = vmatpush1.bf16.msra.mxu0 0
    %235 = vmatprep.subr.bf16.mxu0 0
    %236 = vmatpush1.bf16.msra.mxu0 0
    %237 = vmatprep.subr.bf16.mxu0 0
    %238 = vmatpush1.bf16.msra.mxu0 0
    %239 = vmatprep.subr.bf16.mxu0 0
    %240 = vmatpush1.bf16.msra.mxu0 0
    %241 = vmatprep.subr.bf16.mxu0 0
    %242 = vmatpush1.bf16.msra.mxu0 0
    %243 = vmatprep.subr.bf16.mxu0 %v227
    %244 = vmatpush1.bf16.msra.mxu0 %v224
    %245 = vmatprep.subr.bf16.mxu0 0
    %246 = vmatpush2.bf16.msra.mxu0 0
    %247 = vmatprep.subr.bf16.mxu0 0
    %248 = vmatpush2.bf16.msra.mxu0 0
    %249 = vmatprep.subr.bf16.mxu0 0
    %250 = vmatpush2.bf16.msra.mxu0 0
    %251 = vmatprep.subr.bf16.mxu0 0
    %252 = vmatpush2.bf16.msra.mxu0 0
    %253 = vmatprep.subr.bf16.mxu0 0
    %254 = vmatpush2.bf16.msra.mxu0 0
    %255 = vmatprep.subr.bf16.mxu0 0
    %256 = vmatpush2.bf16.msra.mxu0 0
    %257 = vmatprep.subr.bf16.mxu0 0
    %258 = vmatpush2.bf16.msra.mxu0 0
    %259 = vmatprep.subr.bf16.mxu0 0
    %260 = vmatpush2.bf16.msra.mxu0 0
    %261 = vmatprep.mubr.bf16.mxu0 0
    %262 = vmatmul.mubr.bf16.gmra.mxu0 %v218
    %v263 = vpop.f32.mrf.mxu0
    %v264 = vadd.f32 %v180, %v263
    %v265 = vpop.f32.mrf.mxu0
    %v266 = vadd.f32 %v182, %v265
    %v267 = vpop.f32.mrf.mxu0
    %v268 = vadd.f32 %v184, %v267
    %v269 = vpop.f32.mrf.mxu0
    %v270 = vadd.f32 %v186, %v269
    %271 = vmatprep.mubr.bf16.mxu0 0
    %272 = vmatmul.mubr.bf16.gmra.mxu0 %v221
    %v273 = vpop.f32.mrf.mxu0
    %v274 = vadd.f32 %v190, %v273
    %v275 = vpop.f32.mrf.mxu0
    %v276 = vadd.f32 %v192, %v275
    %v277 = vpop.f32.mrf.mxu0
    %v278 = vadd.f32 %v194, %v277
    %v279 = vpop.f32.mrf.mxu0
    %v280 = vadd.f32 %v196, %v279
    %281 = vdwg.mxu0
    %s282 = scalar_lea.vmem %s1, 32
    %v283 = vld [vmem:[%s282] sm:$0xf]
    %v284 = vld [vmem:[%s282 + $0x4] sm:$0xf]
    %v285 = vld [vmem:[%s282 + $0x8] sm:$0xf]
    %v286 = vld [vmem:[%s282 + $0xc] sm:$0xf]
    %v287 = vld [vmem:[#allocation2 + $0x4] sm:$0xff]
    %v292 = vunpack.c.l.b16 %v283
    %v293 = vunpack.c.l.b16 %v284
    %v294 = vunpack.c.l.b16 %v285
    %v295 = vunpack.c.l.b16 %v286
    %v296 = vpack.c.b16 %v293, %v292
    %v297 = vpack.c.b16 %v295, %v294
    %v299 = vunpack.c.l.b16 %v287
    %v300 = vunpack.c.h.b16 %v287
    %v301 = vpack.c.b16 %v299, %v299
    %v302 = vpack.c.b16 %v300, %v300
    %v304 = vsel %vm131, %v296, 0
    %v307 = vsel %vm131, %v297, 0
    %v310 = vsel %vm138, %v301, 0
    %v313 = vsel %vm138, %v302, 0
    %315 = vmatprep.subr.bf16.mxu0 0
    %316 = vmatpush1.bf16.msra.mxu0 0
    %317 = vmatprep.subr.bf16.mxu0 0
    %318 = vmatpush1.bf16.msra.mxu0 0
    %319 = vmatprep.subr.bf16.mxu0 0
    %320 = vmatpush1.bf16.msra.mxu0 0
    %321 = vmatprep.subr.bf16.mxu0 0
    %322 = vmatpush1.bf16.msra.mxu0 0
    %323 = vmatprep.subr.bf16.mxu0 0
    %324 = vmatpush1.bf16.msra.mxu0 0
    %325 = vmatprep.subr.bf16.mxu0 0
    %326 = vmatpush1.bf16.msra.mxu0 0
    %327 = vmatprep.subr.bf16.mxu0 0
    %328 = vmatpush1.bf16.msra.mxu0 0
    %329 = vmatprep.subr.bf16.mxu0 %v313
    %330 = vmatpush1.bf16.msra.mxu0 %v310
    %331 = vmatprep.subr.bf16.mxu0 0
    %332 = vmatpush2.bf16.msra.mxu0 0
    %333 = vmatprep.subr.bf16.mxu0 0
    %334 = vmatpush2.bf16.msra.mxu0 0
    %335 = vmatprep.subr.bf16.mxu0 0
    %336 = vmatpush2.bf16.msra.mxu0 0
    %337 = vmatprep.subr.bf16.mxu0 0
    %338 = vmatpush2.bf16.msra.mxu0 0
    %339 = vmatprep.subr.bf16.mxu0 0
    %340 = vmatpush2.bf16.msra.mxu0 0
    %341 = vmatprep.subr.bf16.mxu0 0
    %342 = vmatpush2.bf16.msra.mxu0 0
    %343 = vmatprep.subr.bf16.mxu0 0
    %344 = vmatpush2.bf16.msra.mxu0 0
    %345 = vmatprep.subr.bf16.mxu0 0
    %346 = vmatpush2.bf16.msra.mxu0 0
    %347 = vmatprep.mubr.bf16.mxu0 0
    %348 = vmatmul.mubr.bf16.gmra.mxu0 %v304
    %v349 = vpop.f32.mrf.mxu0
    %v350 = vadd.f32 0.0, %v349
    %v351 = vpop.f32.mrf.mxu0
    %v352 = vadd.f32 0.0, %v351
    %v353 = vpop.f32.mrf.mxu0
    %v354 = vadd.f32 0.0, %v353
    %v355 = vpop.f32.mrf.mxu0
    %v356 = vadd.f32 0.0, %v355
    %357 = vmatprep.mubr.bf16.mxu0 0
    %358 = vmatmul.mubr.bf16.gmra.mxu0 %v307
    %v359 = vpop.f32.mrf.mxu0
    %v360 = vadd.f32 0.0, %v359
    %v361 = vpop.f32.mrf.mxu0
    %v362 = vadd.f32 0.0, %v361
    %v363 = vpop.f32.mrf.mxu0
    %v364 = vadd.f32 0.0, %v363
    %v365 = vpop.f32.mrf.mxu0
    %v366 = vadd.f32 0.0, %v365
    %367 = vdwg.mxu0
    %v368 = vadd.f32 %v264, %v350
    %v369 = vadd.f32 %v266, %v352
    %v370 = vadd.f32 %v268, %v354
    %v371 = vadd.f32 %v270, %v356
    %v372 = vadd.f32 %v274, %v360
    %v373 = vadd.f32 %v276, %v362
    %v374 = vadd.f32 %v278, %v364
    %v375 = vadd.f32 %v280, %v366
    %s376 = scalar_lea.vmem %s1, 48
    %v377 = vld [vmem:[%s376] sm:$0xf]
    %v378 = vld [vmem:[%s376 + $0x4] sm:$0xf]
    %v379 = vld [vmem:[%s376 + $0x8] sm:$0xf]
    %v380 = vld [vmem:[%s376 + $0xc] sm:$0xf]
    %v381 = vld [vmem:[#allocation2 + $0x4] sm:$0xff]
    %v382 = vld [vmem:[#allocation2 + $0xc] sm:$0xf]
    %v387 = vunpack.c.l.b16 %v377
    %v388 = vunpack.c.l.b16 %v378
    %v389 = vunpack.c.l.b16 %v379
    %v390 = vunpack.c.l.b16 %v380
    %v391 = vpack.c.b16 %v388, %v387
    %v392 = vpack.c.b16 %v390, %v389
    %v395 = vunpack.c.l.b16 %v381
    %v396 = vunpack.c.h.b16 %v381
    %v397 = vunpack.c.l.b16 %v382
    %v398 = vpack.c.b16 %v395, %v395
    %v399 = vpack.c.b16 %v396, %v396
    %v400 = vpack.c.b16 %v397, %v397
    %401 = vrot.lane.b32.xlu0 %v398, 127
    %v402 = vpop.permute.xlu0 %401
    %403 = vrot.lane.b32.xlu0 %v399, 127
    %v404 = vpop.permute.xlu0 %403
    %405 = vrot.lane.b32.xlu0 %v400, 127
    %v406 = vpop.permute.xlu0 %405
    %vm407 = vcmask 1039360
    %v408 = vsel %vm407, %v402, %v404
    %v409 = vsel %vm407, %v404, %v406
    %v411 = vsel %vm131, %v391, 0
    %v414 = vsel %vm131, %v392, 0
    %v417 = vsel %vm138, %v408, 0
    %v420 = vsel %vm138, %v409, 0
    %422 = vmatprep.subr.bf16.mxu0 0
    %423 = vmatpush1.bf16.msra.mxu0 0
    %424 = vmatprep.subr.bf16.mxu0 0
    %425 = vmatpush1.bf16.msra.mxu0 0
    %426 = vmatprep.subr.bf16.mxu0 0
    %427 = vmatpush1.bf16.msra.mxu0 0
    %428 = vmatprep.subr.bf16.mxu0 0
    %429 = vmatpush1.bf16.msra.mxu0 0
    %430 = vmatprep.subr.bf16.mxu0 0
    %431 = vmatpush1.bf16.msra.mxu0 0
    %432 = vmatprep.subr.bf16.mxu0 0
    %433 = vmatpush1.bf16.msra.mxu0 0
    %434 = vmatprep.subr.bf16.mxu0 0
    %435 = vmatpush1.bf16.msra.mxu0 0
    %436 = vmatprep.subr.bf16.mxu0 %v420
    %437 = vmatpush1.bf16.msra.mxu0 %v417
    %438 = vmatprep.subr.bf16.mxu0 0
    %439 = vmatpush2.bf16.msra.mxu0 0
    %440 = vmatprep.subr.bf16.mxu0 0
    %441 = vmatpush2.bf16.msra.mxu0 0
    %442 = vmatprep.subr.bf16.mxu0 0
    %443 = vmatpush2.bf16.msra.mxu0 0
    %444 = vmatprep.subr.bf16.mxu0 0
    %445 = vmatpush2.bf16.msra.mxu0 0
    %446 = vmatprep.subr.bf16.mxu0 0
    %447 = vmatpush2.bf16.msra.mxu0 0
    %448 = vmatprep.subr.bf16.mxu0 0
    %449 = vmatpush2.bf16.msra.mxu0 0
    %450 = vmatprep.subr.bf16.mxu0 0
    %451 = vmatpush2.bf16.msra.mxu0 0
    %452 = vmatprep.subr.bf16.mxu0 0
    %453 = vmatpush2.bf16.msra.mxu0 0
    %454 = vmatprep.mubr.bf16.mxu0 0
    %455 = vmatmul.mubr.bf16.gmra.mxu0 %v411
    %v456 = vpop.f32.mrf.mxu0
    %v457 = vadd.f32 0.0, %v456
    %v458 = vpop.f32.mrf.mxu0
    %v459 = vadd.f32 0.0, %v458
    %v460 = vpop.f32.mrf.mxu0
    %v461 = vadd.f32 0.0, %v460
    %v462 = vpop.f32.mrf.mxu0
    %v463 = vadd.f32 0.0, %v462
    %464 = vmatprep.mubr.bf16.mxu0 0
    %465 = vmatmul.mubr.bf16.gmra.mxu0 %v414
    %v466 = vpop.f32.mrf.mxu0
    %v467 = vadd.f32 0.0, %v466
    %v468 = vpop.f32.mrf.mxu0
    %v469 = vadd.f32 0.0, %v468
    %v470 = vpop.f32.mrf.mxu0
    %v471 = vadd.f32 0.0, %v470
    %v472 = vpop.f32.mrf.mxu0
    %v473 = vadd.f32 0.0, %v472
    %474 = vdwg.mxu0
    %v475 = vadd.f32 %v368, %v457
    %v476 = vadd.f32 %v369, %v459
    %v477 = vadd.f32 %v370, %v461
    %v478 = vadd.f32 %v371, %v463
    %v479 = vadd.f32 %v372, %v467
    %v480 = vadd.f32 %v373, %v469
    %v481 = vadd.f32 %v374, %v471
    %v482 = vadd.f32 %v375, %v473
    %s483 = scalar_lea.vmem %s1, 64
    %v484 = vld [vmem:[%s483] sm:$0xf]
    %v485 = vld [vmem:[%s483 + $0x4] sm:$0xf]
    %v486 = vld [vmem:[%s483 + $0x8] sm:$0xf]
    %v487 = vld [vmem:[%s483 + $0xc] sm:$0xf]
    %v492 = vunpack.c.l.b16 %v484
    %v493 = vunpack.c.l.b16 %v485
    %v494 = vunpack.c.l.b16 %v486
    %v495 = vunpack.c.l.b16 %v487
    %v496 = vpack.c.b16 %v493, %v492
    %v497 = vpack.c.b16 %v495, %v494
    %498 = vrot.lane.b32.xlu0 %v398, 126
    %v499 = vpop.permute.xlu0 %498
    %500 = vrot.lane.b32.xlu0 %v399, 126
    %v501 = vpop.permute.xlu0 %500
    %502 = vrot.lane.b32.xlu0 %v400, 126
    %v503 = vpop.permute.xlu0 %502
    %vm504 = vcmask 1031168
    %v505 = vsel %vm504, %v499, %v501
    %v506 = vsel %vm504, %v501, %v503
    %v508 = vsel %vm131, %v496, 0
    %v511 = vsel %vm131, %v497, 0
    %v514 = vsel %vm138, %v505, 0
    %v517 = vsel %vm138, %v506, 0
    %519 = vmatprep.subr.bf16.mxu0 0
    %520 = vmatpush1.bf16.msra.mxu0 0
    %521 = vmatprep.subr.bf16.mxu0 0
    %522 = vmatpush1.bf16.msra.mxu0 0
    %523 = vmatprep.subr.bf16.mxu0 0
    %524 = vmatpush1.bf16.msra.mxu0 0
    %525 = vmatprep.subr.bf16.mxu0 0
    %526 = vmatpush1.bf16.msra.mxu0 0
    %527 = vmatprep.subr.bf16.mxu0 0
    %528 = vmatpush1.bf16.msra.mxu0 0
    %529 = vmatprep.subr.bf16.mxu0 0
    %530 = vmatpush1.bf16.msra.mxu0 0
    %531 = vmatprep.subr.bf16.mxu0 0
    %532 = vmatpush1.bf16.msra.mxu0 0
    %533 = vmatprep.subr.bf16.mxu0 %v517
    %534 = vmatpush1.bf16.msra.mxu0 %v514
    %535 = vmatprep.subr.bf16.mxu0 0
    %536 = vmatpush2.bf16.msra.mxu0 0
    %537 = vmatprep.subr.bf16.mxu0 0
    %538 = vmatpush2.bf16.msra.mxu0 0
    %539 = vmatprep.subr.bf16.mxu0 0
    %540 = vmatpush2.bf16.msra.mxu0 0
    %541 = vmatprep.subr.bf16.mxu0 0
    %542 = vmatpush2.bf16.msra.mxu0 0
    %543 = vmatprep.subr.bf16.mxu0 0
    %544 = vmatpush2.bf16.msra.mxu0 0
    %545 = vmatprep.subr.bf16.mxu0 0
    %546 = vmatpush2.bf16.msra.mxu0 0
    %547 = vmatprep.subr.bf16.mxu0 0
    %548 = vmatpush2.bf16.msra.mxu0 0
    %549 = vmatprep.subr.bf16.mxu0 0
    %550 = vmatpush2.bf16.msra.mxu0 0
    %551 = vmatprep.mubr.bf16.mxu0 0
    %552 = vmatmul.mubr.bf16.gmra.mxu0 %v508
    %v553 = vpop.f32.mrf.mxu0
    %v554 = vadd.f32 0.0, %v553
    %v555 = vpop.f32.mrf.mxu0
    %v556 = vadd.f32 0.0, %v555
    %v557 = vpop.f32.mrf.mxu0
    %v558 = vadd.f32 0.0, %v557
    %v559 = vpop.f32.mrf.mxu0
    %v560 = vadd.f32 0.0, %v559
    %561 = vmatprep.mubr.bf16.mxu0 0
    %562 = vmatmul.mubr.bf16.gmra.mxu0 %v511
    %v563 = vpop.f32.mrf.mxu0
    %v564 = vadd.f32 0.0, %v563
    %v565 = vpop.f32.mrf.mxu0
    %v566 = vadd.f32 0.0, %v565
    %v567 = vpop.f32.mrf.mxu0
    %v568 = vadd.f32 0.0, %v567
    %v569 = vpop.f32.mrf.mxu0
    %v570 = vadd.f32 0.0, %v569
    %571 = vdwg.mxu0
    %v572 = vadd.f32 %v475, %v554
    %v573 = vadd.f32 %v476, %v556
    %v574 = vadd.f32 %v477, %v558
    %v575 = vadd.f32 %v478, %v560
    %v576 = vadd.f32 %v479, %v564
    %v577 = vadd.f32 %v480, %v566
    %v578 = vadd.f32 %v481, %v568
    %v579 = vadd.f32 %v482, %v570
    %v580 = vld [vmem:[%s2] sm:$0xff]
    %v581 = vld [vmem:[%s2 + $0x8] sm:$0xff]
    %v582 = vld [vmem:[%s2 + $0x10] sm:$0xff]
    %v583 = vld [vmem:[%s2 + $0x18] sm:$0xff]
    %585 = vset.pattern.permute.xlu0 0
    %586 = vperm.xlu0 %585, %v580
    %v587 = vpop.permute.xlu0 %586
    %590 = vset.pattern.permute.xlu0 0
    %591 = vperm.xlu0 %590, %v581
    %v592 = vpop.permute.xlu0 %591
    %595 = vset.pattern.permute.xlu0 0
    %596 = vperm.xlu0 %595, %v582
    %v597 = vpop.permute.xlu0 %596
    %600 = vset.pattern.permute.xlu0 0
    %601 = vperm.xlu0 %600, %v583
    %v602 = vpop.permute.xlu0 %601
    %v604 = vadd.f32 %v572, %v587
    %v605 = vadd.f32 %v573, %v587
    %v606 = vadd.f32 %v574, %v592
    %v607 = vadd.f32 %v575, %v592
    %v608 = vadd.f32 %v576, %v597
    %v609 = vadd.f32 %v577, %v597
    %v610 = vadd.f32 %v578, %v602
    %v611 = vadd.f32 %v579, %v602
    %v612 = vpack.c.bf16 %v606, %v604
    %v613 = vpack.c.bf16 %v610, %v608
    %v616 = vunpack.c.l.b16 %v612
    %v617 = vunpack.c.h.b16 %v612
    %v618 = vunpack.c.l.b16 %v613
    %v619 = vunpack.c.h.b16 %v613
    %v620 = vpack.c.b16 %v616, %v616
    %v621 = vpack.c.b16 %v617, %v617
    %v622 = vpack.c.b16 %v618, %v618
    %v623 = vpack.c.b16 %v619, %v619
    %628 = vst.msk [vmem:[#allocation2 + $0x4] sm:$0xf] %vm87, %v620
    %629 = vst.msk [vmem:[#allocation2 + $0x14] sm:$0xf] %vm87, %v621
    %630 = vst.msk [vmem:[#allocation2 + $0x24] sm:$0xf] %vm87, %v622
    %631 = vst.msk [vmem:[#allocation2 + $0x34] sm:$0xf] %vm87, %v623
    %v632 = vpack.c.bf16 %v607, %v605
    %v633 = vpack.c.bf16 %v611, %v609
    %v636 = vunpack.c.l.b16 %v632
    %v637 = vunpack.c.h.b16 %v632
    %v638 = vunpack.c.l.b16 %v633
    %v639 = vunpack.c.h.b16 %v633
    %v640 = vpack.c.b16 %v636, %v636
    %v641 = vpack.c.b16 %v637, %v637
    %v642 = vpack.c.b16 %v638, %v638
    %v643 = vpack.c.b16 %v639, %v639
    %648 = vst.msk [vmem:[#allocation2 + $0x8] sm:$0xf] %vm87, %v640
    %649 = vst.msk [vmem:[#allocation2 + $0x18] sm:$0xf] %vm87, %v641
    %650 = vst.msk [vmem:[#allocation2 + $0x28] sm:$0xf] %vm87, %v642
    %651 = vst.msk [vmem:[#allocation2 + $0x38] sm:$0xf] %vm87, %v643
    %v652 = vld [vmem:[%s3] sm:$0xf]
    %v653 = vld [vmem:[%s3 + $0x4] sm:$0xf]
    %v654 = vld [vmem:[%s3 + $0x8] sm:$0xf]
    %v655 = vld [vmem:[%s3 + $0xc] sm:$0xf]
    %v656 = vld [vmem:[#allocation2] sm:$0xff]
    %v657 = vld [vmem:[#allocation2 + $0x8] sm:$0xf]
    %v658 = vld [vmem:[#allocation2 + $0x10] sm:$0xff]
    %v659 = vld [vmem:[#allocation2 + $0x18] sm:$0xf]
    %v660 = vld [vmem:[#allocation2 + $0x20] sm:$0xff]
    %v661 = vld [vmem:[#allocation2 + $0x28] sm:$0xf]
    %v662 = vld [vmem:[#allocation2 + $0x30] sm:$0xff]
    %v663 = vld [vmem:[#allocation2 + $0x38] sm:$0xf]
    %s664 = scalar_lea.vmem %s3, 16
    %v665 = vld [vmem:[%s664] sm:$0xf]
    %v666 = vld [vmem:[%s664 + $0x4] sm:$0xf]
    %v667 = vld [vmem:[%s664 + $0x8] sm:$0xf]
    %v668 = vld [vmem:[%s664 + $0xc] sm:$0xf]
    %v673 = vunpack.c.l.b16 %v665
    %v674 = vunpack.c.l.b16 %v666
    %v675 = vunpack.c.l.b16 %v667
    %v676 = vunpack.c.l.b16 %v668
    %v677 = vpack.c.b16 %v674, %v673
    %v678 = vpack.c.b16 %v676, %v675
    %v687 = vunpack.c.l.b16 %v656
    %v688 = vunpack.c.h.b16 %v656
    %v689 = vunpack.c.l.b16 %v657
    %v690 = vunpack.c.l.b16 %v658
    %v691 = vunpack.c.h.b16 %v658
    %v692 = vunpack.c.l.b16 %v659
    %v693 = vunpack.c.l.b16 %v660
    %v694 = vunpack.c.h.b16 %v660
    %v695 = vunpack.c.l.b16 %v661
    %v696 = vunpack.c.l.b16 %v662
    %v697 = vunpack.c.h.b16 %v662
    %v698 = vunpack.c.l.b16 %v663
    %v699 = vpack.c.b16 %v690, %v687
    %v700 = vpack.c.b16 %v691, %v688
    %v701 = vpack.c.b16 %v692, %v689
    %v702 = vpack.c.b16 %v696, %v693
    %v703 = vpack.c.b16 %v697, %v694
    %v704 = vpack.c.b16 %v698, %v695
    %705 = vrot.lane.b32.xlu0 %v699, 1
    %v706 = vpop.permute.xlu0 %705
    %707 = vrot.lane.b32.xlu0 %v700, 1
    %v708 = vpop.permute.xlu0 %707
    %709 = vrot.lane.b32.xlu0 %v701, 1
    %v710 = vpop.permute.xlu0 %709
    %711 = vrot.lane.b32.xlu0 %v702, 1
    %v712 = vpop.permute.xlu0 %711
    %713 = vrot.lane.b32.xlu0 %v703, 1
    %v714 = vpop.permute.xlu0 %713
    %715 = vrot.lane.b32.xlu0 %v704, 1
    %v716 = vpop.permute.xlu0 %715
    %v717 = vsel %vm128, %v706, %v708
    %v718 = vsel %vm128, %v708, %v710
    %v719 = vsel %vm128, %v712, %v714
    %v720 = vsel %vm128, %v714, %v716
    %vm725 = vcmask 261120
    %v727 = vsel %vm725, %v677, 0
    %v730 = vsel %vm725, %v678, 0
    %732 = vmatprep.subr.bf16.mxu0 0
    %733 = vmatpush1.bf16.msra.mxu0 0
    %734 = vmatprep.subr.bf16.mxu0 0
    %735 = vmatpush1.bf16.msra.mxu0 0
    %736 = vmatprep.subr.bf16.mxu0 0
    %737 = vmatpush1.bf16.msra.mxu0 0
    %738 = vmatprep.subr.bf16.mxu0 0
    %739 = vmatpush1.bf16.msra.mxu0 0
    %740 = vmatprep.subr.bf16.mxu0 0
    %741 = vmatpush1.bf16.msra.mxu0 0
    %742 = vmatprep.subr.bf16.mxu0 0
    %743 = vmatpush1.bf16.msra.mxu0 0
    %744 = vmatprep.subr.bf16.mxu0 %v720
    %745 = vmatpush1.bf16.msra.mxu0 %v719
    %746 = vmatprep.subr.bf16.mxu0 %v718
    %747 = vmatpush1.bf16.msra.mxu0 %v717
    %748 = vmatprep.subr.bf16.mxu0 0
    %749 = vmatpush2.bf16.msra.mxu0 0
    %750 = vmatprep.subr.bf16.mxu0 0
    %751 = vmatpush2.bf16.msra.mxu0 0
    %752 = vmatprep.subr.bf16.mxu0 0
    %753 = vmatpush2.bf16.msra.mxu0 0
    %754 = vmatprep.subr.bf16.mxu0 0
    %755 = vmatpush2.bf16.msra.mxu0 0
    %756 = vmatprep.subr.bf16.mxu0 0
    %757 = vmatpush2.bf16.msra.mxu0 0
    %758 = vmatprep.subr.bf16.mxu0 0
    %759 = vmatpush2.bf16.msra.mxu0 0
    %760 = vmatprep.subr.bf16.mxu0 0
    %761 = vmatpush2.bf16.msra.mxu0 0
    %762 = vmatprep.subr.bf16.mxu0 0
    %763 = vmatpush2.bf16.msra.mxu0 0
    %764 = vmatprep.mubr.bf16.mxu0 0
    %765 = vmatmul.mubr.bf16.gmra.mxu0 %v727
    %v766 = vpop.f32.mrf.mxu0
    %v767 = vadd.f32 0.0, %v766
    %v768 = vpop.f32.mrf.mxu0
    %v769 = vadd.f32 0.0, %v768
    %v770 = vpop.f32.mrf.mxu0
    %v771 = vadd.f32 0.0, %v770
    %v772 = vpop.f32.mrf.mxu0
    %v773 = vadd.f32 0.0, %v772
    %774 = vmatprep.mubr.bf16.mxu0 0
    %775 = vmatmul.mubr.bf16.gmra.mxu0 %v730
    %v776 = vpop.f32.mrf.mxu0
    %v777 = vadd.f32 0.0, %v776
    %v778 = vpop.f32.mrf.mxu0
    %v779 = vadd.f32 0.0, %v778
    %v780 = vpop.f32.mrf.mxu0
    %v781 = vadd.f32 0.0, %v780
    %v782 = vpop.f32.mrf.mxu0
    %v783 = vadd.f32 0.0, %v782
    %784 = vdwg.mxu0
    %v789 = vunpack.c.l.b16 %v652
    %v790 = vunpack.c.l.b16 %v653
    %v791 = vunpack.c.l.b16 %v654
    %v792 = vunpack.c.l.b16 %v655
    %v793 = vpack.c.b16 %v790, %v789
    %v794 = vpack.c.b16 %v792, %v791
    %795 = vrot.lane.b32.xlu0 %v699, 2
    %v796 = vpop.permute.xlu0 %795
    %797 = vrot.lane.b32.xlu0 %v700, 2
    %v798 = vpop.permute.xlu0 %797
    %799 = vrot.lane.b32.xlu0 %v701, 2
    %v800 = vpop.permute.xlu0 %799
    %801 = vrot.lane.b32.xlu0 %v702, 2
    %v802 = vpop.permute.xlu0 %801
    %803 = vrot.lane.b32.xlu0 %v703, 2
    %v804 = vpop.permute.xlu0 %803
    %805 = vrot.lane.b32.xlu0 %v704, 2
    %v806 = vpop.permute.xlu0 %805
    %v807 = vsel %vm214, %v796, %v798
    %v808 = vsel %vm214, %v798, %v800
    %v809 = vsel %vm214, %v802, %v804
    %v810 = vsel %vm214, %v804, %v806
    %v816 = vsel %vm725, %v793, 0
    %v819 = vsel %vm725, %v794, 0
    %821 = vmatprep.subr.bf16.mxu0 0
    %822 = vmatpush1.bf16.msra.mxu0 0
    %823 = vmatprep.subr.bf16.mxu0 0
    %824 = vmatpush1.bf16.msra.mxu0 0
    %825 = vmatprep.subr.bf16.mxu0 0
    %826 = vmatpush1.bf16.msra.mxu0 0
    %827 = vmatprep.subr.bf16.mxu0 0
    %828 = vmatpush1.bf16.msra.mxu0 0
    %829 = vmatprep.subr.bf16.mxu0 0
    %830 = vmatpush1.bf16.msra.mxu0 0
    %831 = vmatprep.subr.bf16.mxu0 0
    %832 = vmatpush1.bf16.msra.mxu0 0
    %833 = vmatprep.subr.bf16.mxu0 %v810
    %834 = vmatpush1.bf16.msra.mxu0 %v809
    %835 = vmatprep.subr.bf16.mxu0 %v808
    %836 = vmatpush1.bf16.msra.mxu0 %v807
    %837 = vmatprep.subr.bf16.mxu0 0
    %838 = vmatpush2.bf16.msra.mxu0 0
    %839 = vmatprep.subr.bf16.mxu0 0
    %840 = vmatpush2.bf16.msra.mxu0 0
    %841 = vmatprep.subr.bf16.mxu0 0
    %842 = vmatpush2.bf16.msra.mxu0 0
    %843 = vmatprep.subr.bf16.mxu0 0
    %844 = vmatpush2.bf16.msra.mxu0 0
    %845 = vmatprep.subr.bf16.mxu0 0
    %846 = vmatpush2.bf16.msra.mxu0 0
    %847 = vmatprep.subr.bf16.mxu0 0
    %848 = vmatpush2.bf16.msra.mxu0 0
    %849 = vmatprep.subr.bf16.mxu0 0
    %850 = vmatpush2.bf16.msra.mxu0 0
    %851 = vmatprep.subr.bf16.mxu0 0
    %852 = vmatpush2.bf16.msra.mxu0 0
    %853 = vmatprep.mubr.bf16.mxu0 0
    %854 = vmatmul.mubr.bf16.gmra.mxu0 %v816
    %v855 = vpop.f32.mrf.mxu0
    %v856 = vadd.f32 %v767, %v855
    %v857 = vpop.f32.mrf.mxu0
    %v858 = vadd.f32 %v769, %v857
    %v859 = vpop.f32.mrf.mxu0
    %v860 = vadd.f32 %v771, %v859
    %v861 = vpop.f32.mrf.mxu0
    %v862 = vadd.f32 %v773, %v861
    %863 = vmatprep.mubr.bf16.mxu0 0
    %864 = vmatmul.mubr.bf16.gmra.mxu0 %v819
    %v865 = vpop.f32.mrf.mxu0
    %v866 = vadd.f32 %v777, %v865
    %v867 = vpop.f32.mrf.mxu0
    %v868 = vadd.f32 %v779, %v867
    %v869 = vpop.f32.mrf.mxu0
    %v870 = vadd.f32 %v781, %v869
    %v871 = vpop.f32.mrf.mxu0
    %v872 = vadd.f32 %v783, %v871
    %873 = vdwg.mxu0
    %s874 = scalar_lea.vmem %s3, 32
    %v875 = vld [vmem:[%s874] sm:$0xf]
    %v876 = vld [vmem:[%s874 + $0x4] sm:$0xf]
    %v877 = vld [vmem:[%s874 + $0x8] sm:$0xf]
    %v878 = vld [vmem:[%s874 + $0xc] sm:$0xf]
    %v879 = vld [vmem:[#allocation2 + $0x4] sm:$0xff]
    %v880 = vld [vmem:[#allocation2 + $0x14] sm:$0xff]
    %v881 = vld [vmem:[#allocation2 + $0x24] sm:$0xff]
    %v882 = vld [vmem:[#allocation2 + $0x34] sm:$0xff]
    %v887 = vunpack.c.l.b16 %v875
    %v888 = vunpack.c.l.b16 %v876
    %v889 = vunpack.c.l.b16 %v877
    %v890 = vunpack.c.l.b16 %v878
    %v891 = vpack.c.b16 %v888, %v887
    %v892 = vpack.c.b16 %v890, %v889
    %v897 = vunpack.c.l.b16 %v879
    %v898 = vunpack.c.h.b16 %v879
    %v899 = vunpack.c.l.b16 %v880
    %v900 = vunpack.c.h.b16 %v880
    %v901 = vunpack.c.l.b16 %v881
    %v902 = vunpack.c.h.b16 %v881
    %v903 = vunpack.c.l.b16 %v882
    %v904 = vunpack.c.h.b16 %v882
    %v905 = vpack.c.b16 %v899, %v897
    %v906 = vpack.c.b16 %v900, %v898
    %v907 = vpack.c.b16 %v903, %v901
    %v908 = vpack.c.b16 %v904, %v902
    %v914 = vsel %vm725, %v891, 0
    %v917 = vsel %vm725, %v892, 0
    %919 = vmatprep.subr.bf16.mxu0 0
    %920 = vmatpush1.bf16.msra.mxu0 0
    %921 = vmatprep.subr.bf16.mxu0 0
    %922 = vmatpush1.bf16.msra.mxu0 0
    %923 = vmatprep.subr.bf16.mxu0 0
    %924 = vmatpush1.bf16.msra.mxu0 0
    %925 = vmatprep.subr.bf16.mxu0 0
    %926 = vmatpush1.bf16.msra.mxu0 0
    %927 = vmatprep.subr.bf16.mxu0 0
    %928 = vmatpush1.bf16.msra.mxu0 0
    %929 = vmatprep.subr.bf16.mxu0 0
    %930 = vmatpush1.bf16.msra.mxu0 0
    %931 = vmatprep.subr.bf16.mxu0 %v908
    %932 = vmatpush1.bf16.msra.mxu0 %v907
    %933 = vmatprep.subr.bf16.mxu0 %v906
    %934 = vmatpush1.bf16.msra.mxu0 %v905
    %935 = vmatprep.subr.bf16.mxu0 0
    %936 = vmatpush2.bf16.msra.mxu0 0
    %937 = vmatprep.subr.bf16.mxu0 0
    %938 = vmatpush2.bf16.msra.mxu0 0
    %939 = vmatprep.subr.bf16.mxu0 0
    %940 = vmatpush2.bf16.msra.mxu0 0
    %941 = vmatprep.subr.bf16.mxu0 0
    %942 = vmatpush2.bf16.msra.mxu0 0
    %943 = vmatprep.subr.bf16.mxu0 0
    %944 = vmatpush2.bf16.msra.mxu0 0
    %945 = vmatprep.subr.bf16.mxu0 0
    %946 = vmatpush2.bf16.msra.mxu0 0
    %947 = vmatprep.subr.bf16.mxu0 0
    %948 = vmatpush2.bf16.msra.mxu0 0
    %949 = vmatprep.subr.bf16.mxu0 0
    %950 = vmatpush2.bf16.msra.mxu0 0
    %951 = vmatprep.mubr.bf16.mxu0 0
    %952 = vmatmul.mubr.bf16.gmra.mxu0 %v914
    %v953 = vpop.f32.mrf.mxu0
    %v954 = vadd.f32 0.0, %v953
    %v955 = vpop.f32.mrf.mxu0
    %v956 = vadd.f32 0.0, %v955
    %v957 = vpop.f32.mrf.mxu0
    %v958 = vadd.f32 0.0, %v957
    %v959 = vpop.f32.mrf.mxu0
    %v960 = vadd.f32 0.0, %v959
    %961 = vmatprep.mubr.bf16.mxu0 0
    %962 = vmatmul.mubr.bf16.gmra.mxu0 %v917
    %v963 = vpop.f32.mrf.mxu0
    %v964 = vadd.f32 0.0, %v963
    %v965 = vpop.f32.mrf.mxu0
    %v966 = vadd.f32 0.0, %v965
    %v967 = vpop.f32.mrf.mxu0
    %v968 = vadd.f32 0.0, %v967
    %v969 = vpop.f32.mrf.mxu0
    %v970 = vadd.f32 0.0, %v969
    %971 = vdwg.mxu0
    %v972 = vadd.f32 %v856, %v954
    %v973 = vadd.f32 %v858, %v956
    %v974 = vadd.f32 %v860, %v958
    %v975 = vadd.f32 %v862, %v960
    %v976 = vadd.f32 %v866, %v964
    %v977 = vadd.f32 %v868, %v966
    %v978 = vadd.f32 %v870, %v968
    %v979 = vadd.f32 %v872, %v970
    %s980 = scalar_lea.vmem %s3, 48
    %v981 = vld [vmem:[%s980] sm:$0xf]
    %v982 = vld [vmem:[%s980 + $0x4] sm:$0xf]
    %v983 = vld [vmem:[%s980 + $0x8] sm:$0xf]
    %v984 = vld [vmem:[%s980 + $0xc] sm:$0xf]
    %v985 = vld [vmem:[#allocation2 + $0x4] sm:$0xff]
    %v986 = vld [vmem:[#allocation2 + $0xc] sm:$0xf]
    %v987 = vld [vmem:[#allocation2 + $0x14] sm:$0xff]
    %v988 = vld [vmem:[#allocation2 + $0x1c] sm:$0xf]
    %v989 = vld [vmem:[#allocation2 + $0x24] sm:$0xff]
    %v990 = vld [vmem:[#allocation2 + $0x2c] sm:$0xf]
    %v991 = vld [vmem:[#allocation2 + $0x34] sm:$0xff]
    %v992 = vld [vmem:[#allocation2 + $0x3c] sm:$0xf]
    %v997 = vunpack.c.l.b16 %v981
    %v998 = vunpack.c.l.b16 %v982
    %v999 = vunpack.c.l.b16 %v983
    %v1000 = vunpack.c.l.b16 %v984
    %v1001 = vpack.c.b16 %v998, %v997
    %v1002 = vpack.c.b16 %v1000, %v999
    %v1011 = vunpack.c.l.b16 %v985
    %v1012 = vunpack.c.h.b16 %v985
    %v1013 = vunpack.c.l.b16 %v986
    %v1014 = vunpack.c.l.b16 %v987
    %v1015 = vunpack.c.h.b16 %v987
    %v1016 = vunpack.c.l.b16 %v988
    %v1017 = vunpack.c.l.b16 %v989
    %v1018 = vunpack.c.h.b16 %v989
    %v1019 = vunpack.c.l.b16 %v990
    %v1020 = vunpack.c.l.b16 %v991
    %v1021 = vunpack.c.h.b16 %v991
    %v1022 = vunpack.c.l.b16 %v992
    %v1023 = vpack.c.b16 %v1014, %v1011
    %v1024 = vpack.c.b16 %v1015, %v1012
    %v1025 = vpack.c.b16 %v1016, %v1013
    %v1026 = vpack.c.b16 %v1020, %v1017
    %v1027 = vpack.c.b16 %v1021, %v1018
    %v1028 = vpack.c.b16 %v1022, %v1019
    %1029 = vrot.lane.b32.xlu0 %v1023, 127
    %v1030 = vpop.permute.xlu0 %1029
    %1031 = vrot.lane.b32.xlu0 %v1024, 127
    %v1032 = vpop.permute.xlu0 %1031
    %1033 = vrot.lane.b32.xlu0 %v1025, 127
    %v1034 = vpop.permute.xlu0 %1033
    %1035 = vrot.lane.b32.xlu0 %v1026, 127
    %v1036 = vpop.permute.xlu0 %1035
    %1037 = vrot.lane.b32.xlu0 %v1027, 127
    %v1038 = vpop.permute.xlu0 %1037
    %1039 = vrot.lane.b32.xlu0 %v1028, 127
    %v1040 = vpop.permute.xlu0 %1039
    %v1041 = vsel %vm407, %v1030, %v1032
    %v1042 = vsel %vm407, %v1032, %v1034
    %v1043 = vsel %vm407, %v1036, %v1038
    %v1044 = vsel %vm407, %v1038, %v1040
    %v1050 = vsel %vm725, %v1001, 0
    %v1053 = vsel %vm725, %v1002, 0
    %1055 = vmatprep.subr.bf16.mxu0 0
    %1056 = vmatpush1.bf16.msra.mxu0 0
    %1057 = vmatprep.subr.bf16.mxu0 0
    %1058 = vmatpush1.bf16.msra.mxu0 0
    %1059 = vmatprep.subr.bf16.mxu0 0
    %1060 = vmatpush1.bf16.msra.mxu0 0
    %1061 = vmatprep.subr.bf16.mxu0 0
    %1062 = vmatpush1.bf16.msra.mxu0 0
    %1063 = vmatprep.subr.bf16.mxu0 0
    %1064 = vmatpush1.bf16.msra.mxu0 0
    %1065 = vmatprep.subr.bf16.mxu0 0
    %1066 = vmatpush1.bf16.msra.mxu0 0
    %1067 = vmatprep.subr.bf16.mxu0 %v1044
    %1068 = vmatpush1.bf16.msra.mxu0 %v1043
    %1069 = vmatprep.subr.bf16.mxu0 %v1042
    %1070 = vmatpush1.bf16.msra.mxu0 %v1041
    %1071 = vmatprep.subr.bf16.mxu0 0
    %1072 = vmatpush2.bf16.msra.mxu0 0
    %1073 = vmatprep.subr.bf16.mxu0 0
    %1074 = vmatpush2.bf16.msra.mxu0 0
    %1075 = vmatprep.subr.bf16.mxu0 0
    %1076 = vmatpush2.bf16.msra.mxu0 0
    %1077 = vmatprep.subr.bf16.mxu0 0
    %1078 = vmatpush2.bf16.msra.mxu0 0
    %1079 = vmatprep.subr.bf16.mxu0 0
    %1080 = vmatpush2.bf16.msra.mxu0 0
    %1081 = vmatprep.subr.bf16.mxu0 0
    %1082 = vmatpush2.bf16.msra.mxu0 0
    %1083 = vmatprep.subr.bf16.mxu0 0
    %1084 = vmatpush2.bf16.msra.mxu0 0
    %1085 = vmatprep.subr.bf16.mxu0 0
    %1086 = vmatpush2.bf16.msra.mxu0 0
    %1087 = vmatprep.mubr.bf16.mxu0 0
    %1088 = vmatmul.mubr.bf16.gmra.mxu0 %v1050
    %v1089 = vpop.f32.mrf.mxu0
    %v1090 = vadd.f32 0.0, %v1089
    %v1091 = vpop.f32.mrf.mxu0
    %v1092 = vadd.f32 0.0, %v1091
    %v1093 = vpop.f32.mrf.mxu0
    %v1094 = vadd.f32 0.0, %v1093
    %v1095 = vpop.f32.mrf.mxu0
    %v1096 = vadd.f32 0.0, %v1095
    %1097 = vmatprep.mubr.bf16.mxu0 0
    %1098 = vmatmul.mubr.bf16.gmra.mxu0 %v1053
    %v1099 = vpop.f32.mrf.mxu0
    %v1100 = vadd.f32 0.0, %v1099
    %v1101 = vpop.f32.mrf.mxu0
    %v1102 = vadd.f32 0.0, %v1101
    %v1103 = vpop.f32.mrf.mxu0
    %v1104 = vadd.f32 0.0, %v1103
    %v1105 = vpop.f32.mrf.mxu0
    %v1106 = vadd.f32 0.0, %v1105
    %1107 = vdwg.mxu0
    %v1108 = vadd.f32 %v972, %v1090
    %v1109 = vadd.f32 %v973, %v1092
    %v1110 = vadd.f32 %v974, %v1094
    %v1111 = vadd.f32 %v975, %v1096
    %v1112 = vadd.f32 %v976, %v1100
    %v1113 = vadd.f32 %v977, %v1102
    %v1114 = vadd.f32 %v978, %v1104
    %v1115 = vadd.f32 %v979, %v1106
    %s1116 = scalar_lea.vmem %s3, 64
    %v1117 = vld [vmem:[%s1116] sm:$0xf]
    %v1118 = vld [vmem:[%s1116 + $0x4] sm:$0xf]
    %v1119 = vld [vmem:[%s1116 + $0x8] sm:$0xf]
    %v1120 = vld [vmem:[%s1116 + $0xc] sm:$0xf]
    %v1125 = vunpack.c.l.b16 %v1117
    %v1126 = vunpack.c.l.b16 %v1118
    %v1127 = vunpack.c.l.b16 %v1119
    %v1128 = vunpack.c.l.b16 %v1120
    %v1129 = vpack.c.b16 %v1126, %v1125
    %v1130 = vpack.c.b16 %v1128, %v1127
    %1131 = vrot.lane.b32.xlu0 %v1023, 126
    %v1132 = vpop.permute.xlu0 %1131
    %1133 = vrot.lane.b32.xlu0 %v1024, 126
    %v1134 = vpop.permute.xlu0 %1133
    %1135 = vrot.lane.b32.xlu0 %v1025, 126
    %v1136 = vpop.permute.xlu0 %1135
    %1137 = vrot.lane.b32.xlu0 %v1026, 126
    %v1138 = vpop.permute.xlu0 %1137
    %1139 = vrot.lane.b32.xlu0 %v1027, 126
    %v1140 = vpop.permute.xlu0 %1139
    %1141 = vrot.lane.b32.xlu0 %v1028, 126
    %v1142 = vpop.permute.xlu0 %1141
    %v1143 = vsel %vm504, %v1132, %v1134
    %v1144 = vsel %vm504, %v1134, %v1136
    %v1145 = vsel %vm504, %v1138, %v1140
    %v1146 = vsel %vm504, %v1140, %v1142
    %v1152 = vsel %vm725, %v1129, 0
    %v1155 = vsel %vm725, %v1130, 0
    %1157 = vmatprep.subr.bf16.mxu0 0
    %1158 = vmatpush1.bf16.msra.mxu0 0
    %1159 = vmatprep.subr.bf16.mxu0 0
    %1160 = vmatpush1.bf16.msra.mxu0 0
    %1161 = vmatprep.subr.bf16.mxu0 0
    %1162 = vmatpush1.bf16.msra.mxu0 0
    %1163 = vmatprep.subr.bf16.mxu0 0
    %1164 = vmatpush1.bf16.msra.mxu0 0
    %1165 = vmatprep.subr.bf16.mxu0 0
    %1166 = vmatpush1.bf16.msra.mxu0 0
    %1167 = vmatprep.subr.bf16.mxu0 0
    %1168 = vmatpush1.bf16.msra.mxu0 0
    %1169 = vmatprep.subr.bf16.mxu0 %v1146
    %1170 = vmatpush1.bf16.msra.mxu0 %v1145
    %1171 = vmatprep.subr.bf16.mxu0 %v1144
    %1172 = vmatpush1.bf16.msra.mxu0 %v1143
    %1173 = vmatprep.subr.bf16.mxu0 0
    %1174 = vmatpush2.bf16.msra.mxu0 0
    %1175 = vmatprep.subr.bf16.mxu0 0
    %1176 = vmatpush2.bf16.msra.mxu0 0
    %1177 = vmatprep.subr.bf16.mxu0 0
    %1178 = vmatpush2.bf16.msra.mxu0 0
    %1179 = vmatprep.subr.bf16.mxu0 0
    %1180 = vmatpush2.bf16.msra.mxu0 0
    %1181 = vmatprep.subr.bf16.mxu0 0
    %1182 = vmatpush2.bf16.msra.mxu0 0
    %1183 = vmatprep.subr.bf16.mxu0 0
    %1184 = vmatpush2.bf16.msra.mxu0 0
    %1185 = vmatprep.subr.bf16.mxu0 0
    %1186 = vmatpush2.bf16.msra.mxu0 0
    %1187 = vmatprep.subr.bf16.mxu0 0
    %1188 = vmatpush2.bf16.msra.mxu0 0
    %1189 = vmatprep.mubr.bf16.mxu0 0
    %1190 = vmatmul.mubr.bf16.gmra.mxu0 %v1152
    %v1191 = vpop.f32.mrf.mxu0
    %v1192 = vadd.f32 0.0, %v1191
    %v1193 = vpop.f32.mrf.mxu0
    %v1194 = vadd.f32 0.0, %v1193
    %v1195 = vpop.f32.mrf.mxu0
    %v1196 = vadd.f32 0.0, %v1195
    %v1197 = vpop.f32.mrf.mxu0
    %v1198 = vadd.f32 0.0, %v1197
    %1199 = vmatprep.mubr.bf16.mxu0 0
    %1200 = vmatmul.mubr.bf16.gmra.mxu0 %v1155
    %v1201 = vpop.f32.mrf.mxu0
    %v1202 = vadd.f32 0.0, %v1201
    %v1203 = vpop.f32.mrf.mxu0
    %v1204 = vadd.f32 0.0, %v1203
    %v1205 = vpop.f32.mrf.mxu0
    %v1206 = vadd.f32 0.0, %v1205
    %v1207 = vpop.f32.mrf.mxu0
    %v1208 = vadd.f32 0.0, %v1207
    %1209 = vdwg.mxu0
    %v1210 = vadd.f32 %v1108, %v1192
    %v1211 = vadd.f32 %v1109, %v1194
    %v1212 = vadd.f32 %v1110, %v1196
    %v1213 = vadd.f32 %v1111, %v1198
    %v1214 = vadd.f32 %v1112, %v1202
    %v1215 = vadd.f32 %v1113, %v1204
    %v1216 = vadd.f32 %v1114, %v1206
    %v1217 = vadd.f32 %v1115, %v1208
    %v1218 = vld [vmem:[%s4] sm:$0xff]
    %v1219 = vld [vmem:[%s4 + $0x8] sm:$0xff]
    %v1220 = vld [vmem:[%s4 + $0x10] sm:$0xff]
    %v1221 = vld [vmem:[%s4 + $0x18] sm:$0xff]
    %1223 = vset.pattern.permute.xlu0 0
    %1224 = vperm.xlu0 %1223, %v1218
    %v1225 = vpop.permute.xlu0 %1224
    %1228 = vset.pattern.permute.xlu0 0
    %1229 = vperm.xlu0 %1228, %v1219
    %v1230 = vpop.permute.xlu0 %1229
    %1233 = vset.pattern.permute.xlu0 0
    %1234 = vperm.xlu0 %1233, %v1220
    %v1235 = vpop.permute.xlu0 %1234
    %1238 = vset.pattern.permute.xlu0 0
    %1239 = vperm.xlu0 %1238, %v1221
    %v1240 = vpop.permute.xlu0 %1239
    %v1242 = vadd.f32 %v1210, %v1225
    %v1243 = vadd.f32 %v1211, %v1225
    %v1244 = vadd.f32 %v1212, %v1230
    %v1245 = vadd.f32 %v1213, %v1230
    %v1246 = vadd.f32 %v1214, %v1235
    %v1247 = vadd.f32 %v1215, %v1235
    %v1248 = vadd.f32 %v1216, %v1240
    %v1249 = vadd.f32 %v1217, %v1240
    %v1250 = vpack.c.bf16 %v1244, %v1242
    %v1251 = vpack.c.bf16 %v1248, %v1246
    %v1254 = vunpack.c.l.b16 %v1250
    %v1255 = vunpack.c.h.b16 %v1250
    %v1256 = vunpack.c.l.b16 %v1251
    %v1257 = vunpack.c.h.b16 %v1251
    %v1258 = vpack.c.b16 %v1254, %v1254
    %v1259 = vpack.c.b16 %v1255, %v1255
    %v1260 = vpack.c.b16 %v1256, %v1256
    %v1261 = vpack.c.b16 %v1257, %v1257
    %1266 = vst.msk [vmem:[#allocation2 + $0x4] sm:$0xf] %vm87, %v1258
    %1267 = vst.msk [vmem:[#allocation2 + $0x14] sm:$0xf] %vm87, %v1259
    %1268 = vst.msk [vmem:[#allocation2 + $0x24] sm:$0xf] %vm87, %v1260
    %1269 = vst.msk [vmem:[#allocation2 + $0x34] sm:$0xf] %vm87, %v1261
    %v1270 = vpack.c.bf16 %v1245, %v1243
    %v1271 = vpack.c.bf16 %v1249, %v1247
    %v1274 = vunpack.c.l.b16 %v1270
    %v1275 = vunpack.c.h.b16 %v1270
    %v1276 = vunpack.c.l.b16 %v1271
    %v1277 = vunpack.c.h.b16 %v1271
    %v1278 = vpack.c.b16 %v1274, %v1274
    %v1279 = vpack.c.b16 %v1275, %v1275
    %v1280 = vpack.c.b16 %v1276, %v1276
    %v1281 = vpack.c.b16 %v1277, %v1277
    %1286 = vst.msk [vmem:[#allocation2 + $0x8] sm:$0xf] %vm87, %v1278
    %1287 = vst.msk [vmem:[#allocation2 + $0x18] sm:$0xf] %vm87, %v1279
    %1288 = vst.msk [vmem:[#allocation2 + $0x28] sm:$0xf] %vm87, %v1280
    %1289 = vst.msk [vmem:[#allocation2 + $0x38] sm:$0xf] %vm87, %v1281
    %v1290 = vld [vmem:[%s5] sm:$0xf]
    %v1291 = vld [vmem:[%s5 + $0x4] sm:$0xf]
    %v1292 = vld [vmem:[%s5 + $0x8] sm:$0xf]
    %v1293 = vld [vmem:[%s5 + $0xc] sm:$0xf]
    %v1294 = vld [vmem:[#allocation2] sm:$0xff]
    %v1295 = vld [vmem:[#allocation2 + $0x8] sm:$0xf]
    %v1296 = vld [vmem:[#allocation2 + $0x10] sm:$0xff]
    %v1297 = vld [vmem:[#allocation2 + $0x18] sm:$0xf]
    %v1298 = vld [vmem:[#allocation2 + $0x20] sm:$0xff]
    %v1299 = vld [vmem:[#allocation2 + $0x28] sm:$0xf]
    %v1300 = vld [vmem:[#allocation2 + $0x30] sm:$0xff]
    %v1301 = vld [vmem:[#allocation2 + $0x38] sm:$0xf]
    %s1302 = scalar_lea.vmem %s5, 16
    %v1303 = vld [vmem:[%s1302] sm:$0xf]
    %v1304 = vld [vmem:[%s1302 + $0x4] sm:$0xf]
    %v1305 = vld [vmem:[%s1302 + $0x8] sm:$0xf]
    %v1306 = vld [vmem:[%s1302 + $0xc] sm:$0xf]
    %v1311 = vunpack.c.l.b16 %v1303
    %v1312 = vunpack.c.l.b16 %v1304
    %v1313 = vunpack.c.l.b16 %v1305
    %v1314 = vunpack.c.l.b16 %v1306
    %v1315 = vpack.c.b16 %v1312, %v1311
    %v1316 = vpack.c.b16 %v1314, %v1313
    %v1325 = vunpack.c.l.b16 %v1294
    %v1326 = vunpack.c.h.b16 %v1294
    %v1327 = vunpack.c.l.b16 %v1295
    %v1328 = vunpack.c.l.b16 %v1296
    %v1329 = vunpack.c.h.b16 %v1296
    %v1330 = vunpack.c.l.b16 %v1297
    %v1331 = vunpack.c.l.b16 %v1298
    %v1332 = vunpack.c.h.b16 %v1298
    %v1333 = vunpack.c.l.b16 %v1299
    %v1334 = vunpack.c.l.b16 %v1300
    %v1335 = vunpack.c.h.b16 %v1300
    %v1336 = vunpack.c.l.b16 %v1301
    %v1337 = vpack.c.b16 %v1328, %v1325
    %v1338 = vpack.c.b16 %v1329, %v1326
    %v1339 = vpack.c.b16 %v1330, %v1327
    %v1340 = vpack.c.b16 %v1334, %v1331
    %v1341 = vpack.c.b16 %v1335, %v1332
    %v1342 = vpack.c.b16 %v1336, %v1333
    %1343 = vrot.lane.b32.xlu0 %v1337, 1
    %v1344 = vpop.permute.xlu0 %1343
    %1345 = vrot.lane.b32.xlu0 %v1338, 1
    %v1346 = vpop.permute.xlu0 %1345
    %1347 = vrot.lane.b32.xlu0 %v1339, 1
    %v1348 = vpop.permute.xlu0 %1347
    %1349 = vrot.lane.b32.xlu0 %v1340, 1
    %v1350 = vpop.permute.xlu0 %1349
    %1351 = vrot.lane.b32.xlu0 %v1341, 1
    %v1352 = vpop.permute.xlu0 %1351
    %1353 = vrot.lane.b32.xlu0 %v1342, 1
    %v1354 = vpop.permute.xlu0 %1353
    %v1355 = vsel %vm128, %v1344, %v1346
    %v1356 = vsel %vm128, %v1346, %v1348
    %v1357 = vsel %vm128, %v1350, %v1352
    %v1358 = vsel %vm128, %v1352, %v1354
    %v1364 = vsel %vm725, %v1315, 0
    %v1367 = vsel %vm725, %v1316, 0
    %1369 = vmatprep.subr.bf16.mxu0 0
    %1370 = vmatpush1.bf16.msra.mxu0 0
    %1371 = vmatprep.subr.bf16.mxu0 0
    %1372 = vmatpush1.bf16.msra.mxu0 0
    %1373 = vmatprep.subr.bf16.mxu0 0
    %1374 = vmatpush1.bf16.msra.mxu0 0
    %1375 = vmatprep.subr.bf16.mxu0 0
    %1376 = vmatpush1.bf16.msra.mxu0 0
    %1377 = vmatprep.subr.bf16.mxu0 0
    %1378 = vmatpush1.bf16.msra.mxu0 0
    %1379 = vmatprep.subr.bf16.mxu0 0
    %1380 = vmatpush1.bf16.msra.mxu0 0
    %1381 = vmatprep.subr.bf16.mxu0 %v1358
    %1382 = vmatpush1.bf16.msra.mxu0 %v1357
    %1383 = vmatprep.subr.bf16.mxu0 %v1356
    %1384 = vmatpush1.bf16.msra.mxu0 %v1355
    %1385 = vmatprep.subr.bf16.mxu0 0
    %1386 = vmatpush2.bf16.msra.mxu0 0
    %1387 = vmatprep.subr.bf16.mxu0 0
    %1388 = vmatpush2.bf16.msra.mxu0 0
    %1389 = vmatprep.subr.bf16.mxu0 0
    %1390 = vmatpush2.bf16.msra.mxu0 0
    %1391 = vmatprep.subr.bf16.mxu0 0
    %1392 = vmatpush2.bf16.msra.mxu0 0
    %1393 = vmatprep.subr.bf16.mxu0 0
    %1394 = vmatpush2.bf16.msra.mxu0 0
    %1395 = vmatprep.subr.bf16.mxu0 0
    %1396 = vmatpush2.bf16.msra.mxu0 0
    %1397 = vmatprep.subr.bf16.mxu0 0
    %1398 = vmatpush2.bf16.msra.mxu0 0
    %1399 = vmatprep.subr.bf16.mxu0 0
    %1400 = vmatpush2.bf16.msra.mxu0 0
    %1401 = vmatprep.mubr.bf16.mxu0 0
    %1402 = vmatmul.mubr.bf16.gmra.mxu0 %v1364
    %v1403 = vpop.f32.mrf.mxu0
    %v1404 = vadd.f32 0.0, %v1403
    %v1405 = vpop.f32.mrf.mxu0
    %v1406 = vadd.f32 0.0, %v1405
    %v1407 = vpop.f32.mrf.mxu0
    %v1408 = vadd.f32 0.0, %v1407
    %v1409 = vpop.f32.mrf.mxu0
    %v1410 = vadd.f32 0.0, %v1409
    %1411 = vmatprep.mubr.bf16.mxu0 0
    %1412 = vmatmul.mubr.bf16.gmra.mxu0 %v1367
    %v1413 = vpop.f32.mrf.mxu0
    %v1414 = vadd.f32 0.0, %v1413
    %v1415 = vpop.f32.mrf.mxu0
    %v1416 = vadd.f32 0.0, %v1415
    %v1417 = vpop.f32.mrf.mxu0
    %v1418 = vadd.f32 0.0, %v1417
    %v1419 = vpop.f32.mrf.mxu0
    %v1420 = vadd.f32 0.0, %v1419
    %1421 = vdwg.mxu0
    %v1426 = vunpack.c.l.b16 %v1290
    %v1427 = vunpack.c.l.b16 %v1291
    %v1428 = vunpack.c.l.b16 %v1292
    %v1429 = vunpack.c.l.b16 %v1293
    %v1430 = vpack.c.b16 %v1427, %v1426
    %v1431 = vpack.c.b16 %v1429, %v1428
    %1432 = vrot.lane.b32.xlu0 %v1337, 2
    %v1433 = vpop.permute.xlu0 %1432
    %1434 = vrot.lane.b32.xlu0 %v1338, 2
    %v1435 = vpop.permute.xlu0 %1434
    %1436 = vrot.lane.b32.xlu0 %v1339, 2
    %v1437 = vpop.permute.xlu0 %1436
    %1438 = vrot.lane.b32.xlu0 %v1340, 2
    %v1439 = vpop.permute.xlu0 %1438
    %1440 = vrot.lane.b32.xlu0 %v1341, 2
    %v1441 = vpop.permute.xlu0 %1440
    %1442 = vrot.lane.b32.xlu0 %v1342, 2
    %v1443 = vpop.permute.xlu0 %1442
    %v1444 = vsel %vm214, %v1433, %v1435
    %v1445 = vsel %vm214, %v1435, %v1437
    %v1446 = vsel %vm214, %v1439, %v1441
    %v1447 = vsel %vm214, %v1441, %v1443
    %v1453 = vsel %vm725, %v1430, 0
    %v1456 = vsel %vm725, %v1431, 0
    %1458 = vmatprep.subr.bf16.mxu0 0
    %1459 = vmatpush1.bf16.msra.mxu0 0
    %1460 = vmatprep.subr.bf16.mxu0 0
    %1461 = vmatpush1.bf16.msra.mxu0 0
    %1462 = vmatprep.subr.bf16.mxu0 0
    %1463 = vmatpush1.bf16.msra.mxu0 0
    %1464 = vmatprep.subr.bf16.mxu0 0
    %1465 = vmatpush1.bf16.msra.mxu0 0
    %1466 = vmatprep.subr.bf16.mxu0 0
    %1467 = vmatpush1.bf16.msra.mxu0 0
    %1468 = vmatprep.subr.bf16.mxu0 0
    %1469 = vmatpush1.bf16.msra.mxu0 0
    %1470 = vmatprep.subr.bf16.mxu0 %v1447
    %1471 = vmatpush1.bf16.msra.mxu0 %v1446
    %1472 = vmatprep.subr.bf16.mxu0 %v1445
    %1473 = vmatpush1.bf16.msra.mxu0 %v1444
    %1474 = vmatprep.subr.bf16.mxu0 0
    %1475 = vmatpush2.bf16.msra.mxu0 0
    %1476 = vmatprep.subr.bf16.mxu0 0
    %1477 = vmatpush2.bf16.msra.mxu0 0
    %1478 = vmatprep.subr.bf16.mxu0 0
    %1479 = vmatpush2.bf16.msra.mxu0 0
    %1480 = vmatprep.subr.bf16.mxu0 0
    %1481 = vmatpush2.bf16.msra.mxu0 0
    %1482 = vmatprep.subr.bf16.mxu0 0
    %1483 = vmatpush2.bf16.msra.mxu0 0
    %1484 = vmatprep.subr.bf16.mxu0 0
    %1485 = vmatpush2.bf16.msra.mxu0 0
    %1486 = vmatprep.subr.bf16.mxu0 0
    %1487 = vmatpush2.bf16.msra.mxu0 0
    %1488 = vmatprep.subr.bf16.mxu0 0
    %1489 = vmatpush2.bf16.msra.mxu0 0
    %1490 = vmatprep.mubr.bf16.mxu0 0
    %1491 = vmatmul.mubr.bf16.gmra.mxu0 %v1453
    %v1492 = vpop.f32.mrf.mxu0
    %v1493 = vadd.f32 %v1404, %v1492
    %v1494 = vpop.f32.mrf.mxu0
    %v1495 = vadd.f32 %v1406, %v1494
    %v1496 = vpop.f32.mrf.mxu0
    %v1497 = vadd.f32 %v1408, %v1496
    %v1498 = vpop.f32.mrf.mxu0
    %v1499 = vadd.f32 %v1410, %v1498
    %1500 = vmatprep.mubr.bf16.mxu0 0
    %1501 = vmatmul.mubr.bf16.gmra.mxu0 %v1456
    %v1502 = vpop.f32.mrf.mxu0
    %v1503 = vadd.f32 %v1414, %v1502
    %v1504 = vpop.f32.mrf.mxu0
    %v1505 = vadd.f32 %v1416, %v1504
    %v1506 = vpop.f32.mrf.mxu0
    %v1507 = vadd.f32 %v1418, %v1506
    %v1508 = vpop.f32.mrf.mxu0
    %v1509 = vadd.f32 %v1420, %v1508
    %1510 = vdwg.mxu0
    %s1511 = scalar_lea.vmem %s5, 32
    %v1512 = vld [vmem:[%s1511] sm:$0xf]
    %v1513 = vld [vmem:[%s1511 + $0x4] sm:$0xf]
    %v1514 = vld [vmem:[%s1511 + $0x8] sm:$0xf]
    %v1515 = vld [vmem:[%s1511 + $0xc] sm:$0xf]
    %v1516 = vld [vmem:[#allocation2 + $0x4] sm:$0xff]
    %v1517 = vld [vmem:[#allocation2 + $0x14] sm:$0xff]
    %v1518 = vld [vmem:[#allocation2 + $0x24] sm:$0xff]
    %v1519 = vld [vmem:[#allocation2 + $0x34] sm:$0xff]
    %v1524 = vunpack.c.l.b16 %v1512
    %v1525 = vunpack.c.l.b16 %v1513
    %v1526 = vunpack.c.l.b16 %v1514
    %v1527 = vunpack.c.l.b16 %v1515
    %v1528 = vpack.c.b16 %v1525, %v1524
    %v1529 = vpack.c.b16 %v1527, %v1526
    %v1534 = vunpack.c.l.b16 %v1516
    %v1535 = vunpack.c.h.b16 %v1516
    %v1536 = vunpack.c.l.b16 %v1517
    %v1537 = vunpack.c.h.b16 %v1517
    %v1538 = vunpack.c.l.b16 %v1518
    %v1539 = vunpack.c.h.b16 %v1518
    %v1540 = vunpack.c.l.b16 %v1519
    %v1541 = vunpack.c.h.b16 %v1519
    %v1542 = vpack.c.b16 %v1536, %v1534
    %v1543 = vpack.c.b16 %v1537, %v1535
    %v1544 = vpack.c.b16 %v1540, %v1538
    %v1545 = vpack.c.b16 %v1541, %v1539
    %v1551 = vsel %vm725, %v1528, 0
    %v1554 = vsel %vm725, %v1529, 0
    %1556 = vmatprep.subr.bf16.mxu0 0
    %1557 = vmatpush1.bf16.msra.mxu0 0
    %1558 = vmatprep.subr.bf16.mxu0 0
    %1559 = vmatpush1.bf16.msra.mxu0 0
    %1560 = vmatprep.subr.bf16.mxu0 0
    %1561 = vmatpush1.bf16.msra.mxu0 0
    %1562 = vmatprep.subr.bf16.mxu0 0
    %1563 = vmatpush1.bf16.msra.mxu0 0
    %1564 = vmatprep.subr.bf16.mxu0 0
    %1565 = vmatpush1.bf16.msra.mxu0 0
    %1566 = vmatprep.subr.bf16.mxu0 0
    %1567 = vmatpush1.bf16.msra.mxu0 0
    %1568 = vmatprep.subr.bf16.mxu0 %v1545
    %1569 = vmatpush1.bf16.msra.mxu0 %v1544
    %1570 = vmatprep.subr.bf16.mxu0 %v1543
    %1571 = vmatpush1.bf16.msra.mxu0 %v1542
    %1572 = vmatprep.subr.bf16.mxu0 0
    %1573 = vmatpush2.bf16.msra.mxu0 0
    %1574 = vmatprep.subr.bf16.mxu0 0
    %1575 = vmatpush2.bf16.msra.mxu0 0
    %1576 = vmatprep.subr.bf16.mxu0 0
    %1577 = vmatpush2.bf16.msra.mxu0 0
    %1578 = vmatprep.subr.bf16.mxu0 0
    %1579 = vmatpush2.bf16.msra.mxu0 0
    %1580 = vmatprep.subr.bf16.mxu0 0
    %1581 = vmatpush2.bf16.msra.mxu0 0
    %1582 = vmatprep.subr.bf16.mxu0 0
    %1583 = vmatpush2.bf16.msra.mxu0 0
    %1584 = vmatprep.subr.bf16.mxu0 0
    %1585 = vmatpush2.bf16.msra.mxu0 0
    %1586 = vmatprep.subr.bf16.mxu0 0
    %1587 = vmatpush2.bf16.msra.mxu0 0
    %1588 = vmatprep.mubr.bf16.mxu0 0
    %1589 = vmatmul.mubr.bf16.gmra.mxu0 %v1551
    %v1590 = vpop.f32.mrf.mxu0
    %v1591 = vadd.f32 0.0, %v1590
    %v1592 = vpop.f32.mrf.mxu0
    %v1593 = vadd.f32 0.0, %v1592
    %v1594 = vpop.f32.mrf.mxu0
    %v1595 = vadd.f32 0.0, %v1594
    %v1596 = vpop.f32.mrf.mxu0
    %v1597 = vadd.f32 0.0, %v1596
    %1598 = vmatprep.mubr.bf16.mxu0 0
    %1599 = vmatmul.mubr.bf16.gmra.mxu0 %v1554
    %v1600 = vpop.f32.mrf.mxu0
    %v1601 = vadd.f32 0.0, %v1600
    %v1602 = vpop.f32.mrf.mxu0
    %v1603 = vadd.f32 0.0, %v1602
    %v1604 = vpop.f32.mrf.mxu0
    %v1605 = vadd.f32 0.0, %v1604
    %v1606 = vpop.f32.mrf.mxu0
    %v1607 = vadd.f32 0.0, %v1606
    %1608 = vdwg.mxu0
    %v1609 = vadd.f32 %v1493, %v1591
    %v1610 = vadd.f32 %v1495, %v1593
    %v1611 = vadd.f32 %v1497, %v1595
    %v1612 = vadd.f32 %v1499, %v1597
    %v1613 = vadd.f32 %v1503, %v1601
    %v1614 = vadd.f32 %v1505, %v1603
    %v1615 = vadd.f32 %v1507, %v1605
    %v1616 = vadd.f32 %v1509, %v1607
    %s1617 = scalar_lea.vmem %s5, 48
    %v1618 = vld [vmem:[%s1617] sm:$0xf]
    %v1619 = vld [vmem:[%s1617 + $0x4] sm:$0xf]
    %v1620 = vld [vmem:[%s1617 + $0x8] sm:$0xf]
    %v1621 = vld [vmem:[%s1617 + $0xc] sm:$0xf]
    %v1622 = vld [vmem:[#allocation2 + $0x4] sm:$0xff]
    %v1623 = vld [vmem:[#allocation2 + $0xc] sm:$0xf]
    %v1624 = vld [vmem:[#allocation2 + $0x14] sm:$0xff]
    %v1625 = vld [vmem:[#allocation2 + $0x1c] sm:$0xf]
    %v1626 = vld [vmem:[#allocation2 + $0x24] sm:$0xff]
    %v1627 = vld [vmem:[#allocation2 + $0x2c] sm:$0xf]
    %v1628 = vld [vmem:[#allocation2 + $0x34] sm:$0xff]
    %v1629 = vld [vmem:[#allocation2 + $0x3c] sm:$0xf]
    %v1634 = vunpack.c.l.b16 %v1618
    %v1635 = vunpack.c.l.b16 %v1619
    %v1636 = vunpack.c.l.b16 %v1620
    %v1637 = vunpack.c.l.b16 %v1621
    %v1638 = vpack.c.b16 %v1635, %v1634
    %v1639 = vpack.c.b16 %v1637, %v1636
    %v1648 = vunpack.c.l.b16 %v1622
    %v1649 = vunpack.c.h.b16 %v1622
    %v1650 = vunpack.c.l.b16 %v1623
    %v1651 = vunpack.c.l.b16 %v1624
    %v1652 = vunpack.c.h.b16 %v1624
    %v1653 = vunpack.c.l.b16 %v1625
    %v1654 = vunpack.c.l.b16 %v1626
    %v1655 = vunpack.c.h.b16 %v1626
    %v1656 = vunpack.c.l.b16 %v1627
    %v1657 = vunpack.c.l.b16 %v1628
    %v1658 = vunpack.c.h.b16 %v1628
    %v1659 = vunpack.c.l.b16 %v1629
    %v1660 = vpack.c.b16 %v1651, %v1648
    %v1661 = vpack.c.b16 %v1652, %v1649
    %v1662 = vpack.c.b16 %v1653, %v1650
    %v1663 = vpack.c.b16 %v1657, %v1654
    %v1664 = vpack.c.b16 %v1658, %v1655
    %v1665 = vpack.c.b16 %v1659, %v1656
    %1666 = vrot.lane.b32.xlu0 %v1660, 127
    %v1667 = vpop.permute.xlu0 %1666
    %1668 = vrot.lane.b32.xlu0 %v1661, 127
    %v1669 = vpop.permute.xlu0 %1668
    %1670 = vrot.lane.b32.xlu0 %v1662, 127
    %v1671 = vpop.permute.xlu0 %1670
    %1672 = vrot.lane.b32.xlu0 %v1663, 127
    %v1673 = vpop.permute.xlu0 %1672
    %1674 = vrot.lane.b32.xlu0 %v1664, 127
    %v1675 = vpop.permute.xlu0 %1674
    %1676 = vrot.lane.b32.xlu0 %v1665, 127
    %v1677 = vpop.permute.xlu0 %1676
    %v1678 = vsel %vm407, %v1667, %v1669
    %v1679 = vsel %vm407, %v1669, %v1671
    %v1680 = vsel %vm407, %v1673, %v1675
    %v1681 = vsel %vm407, %v1675, %v1677
    %v1687 = vsel %vm725, %v1638, 0
    %v1690 = vsel %vm725, %v1639, 0
    %1692 = vmatprep.subr.bf16.mxu0 0
    %1693 = vmatpush1.bf16.msra.mxu0 0
    %1694 = vmatprep.subr.bf16.mxu0 0
    %1695 = vmatpush1.bf16.msra.mxu0 0
    %1696 = vmatprep.subr.bf16.mxu0 0
    %1697 = vmatpush1.bf16.msra.mxu0 0
    %1698 = vmatprep.subr.bf16.mxu0 0
    %1699 = vmatpush1.bf16.msra.mxu0 0
    %1700 = vmatprep.subr.bf16.mxu0 0
    %1701 = vmatpush1.bf16.msra.mxu0 0
    %1702 = vmatprep.subr.bf16.mxu0 0
    %1703 = vmatpush1.bf16.msra.mxu0 0
    %1704 = vmatprep.subr.bf16.mxu0 %v1681
    %1705 = vmatpush1.bf16.msra.mxu0 %v1680
    %1706 = vmatprep.subr.bf16.mxu0 %v1679
    %1707 = vmatpush1.bf16.msra.mxu0 %v1678
    %1708 = vmatprep.subr.bf16.mxu0 0
    %1709 = vmatpush2.bf16.msra.mxu0 0
    %1710 = vmatprep.subr.bf16.mxu0 0
    %1711 = vmatpush2.bf16.msra.mxu0 0
    %1712 = vmatprep.subr.bf16.mxu0 0
    %1713 = vmatpush2.bf16.msra.mxu0 0
    %1714 = vmatprep.subr.bf16.mxu0 0
    %1715 = vmatpush2.bf16.msra.mxu0 0
    %1716 = vmatprep.subr.bf16.mxu0 0
    %1717 = vmatpush2.bf16.msra.mxu0 0
    %1718 = vmatprep.subr.bf16.mxu0 0
    %1719 = vmatpush2.bf16.msra.mxu0 0
    %1720 = vmatprep.subr.bf16.mxu0 0
    %1721 = vmatpush2.bf16.msra.mxu0 0
    %1722 = vmatprep.subr.bf16.mxu0 0
    %1723 = vmatpush2.bf16.msra.mxu0 0
    %1724 = vmatprep.mubr.bf16.mxu0 0
    %1725 = vmatmul.mubr.bf16.gmra.mxu0 %v1687
    %v1726 = vpop.f32.mrf.mxu0
    %v1727 = vadd.f32 0.0, %v1726
    %v1728 = vpop.f32.mrf.mxu0
    %v1729 = vadd.f32 0.0, %v1728
    %v1730 = vpop.f32.mrf.mxu0
    %v1731 = vadd.f32 0.0, %v1730
    %v1732 = vpop.f32.mrf.mxu0
    %v1733 = vadd.f32 0.0, %v1732
    %1734 = vmatprep.mubr.bf16.mxu0 0
    %1735 = vmatmul.mubr.bf16.gmra.mxu0 %v1690
    %v1736 = vpop.f32.mrf.mxu0
    %v1737 = vadd.f32 0.0, %v1736
    %v1738 = vpop.f32.mrf.mxu0
    %v1739 = vadd.f32 0.0, %v1738
    %v1740 = vpop.f32.mrf.mxu0
    %v1741 = vadd.f32 0.0, %v1740
    %v1742 = vpop.f32.mrf.mxu0
    %v1743 = vadd.f32 0.0, %v1742
    %1744 = vdwg.mxu0
    %v1745 = vadd.f32 %v1609, %v1727
    %v1746 = vadd.f32 %v1610, %v1729
    %v1747 = vadd.f32 %v1611, %v1731
    %v1748 = vadd.f32 %v1612, %v1733
    %v1749 = vadd.f32 %v1613, %v1737
    %v1750 = vadd.f32 %v1614, %v1739
    %v1751 = vadd.f32 %v1615, %v1741
    %v1752 = vadd.f32 %v1616, %v1743
    %s1753 = scalar_lea.vmem %s5, 64
    %v1754 = vld [vmem:[%s1753] sm:$0xf]
    %v1755 = vld [vmem:[%s1753 + $0x4] sm:$0xf]
    %v1756 = vld [vmem:[%s1753 + $0x8] sm:$0xf]
    %v1757 = vld [vmem:[%s1753 + $0xc] sm:$0xf]
    %v1762 = vunpack.c.l.b16 %v1754
    %v1763 = vunpack.c.l.b16 %v1755
    %v1764 = vunpack.c.l.b16 %v1756
    %v1765 = vunpack.c.l.b16 %v1757
    %v1766 = vpack.c.b16 %v1763, %v1762
    %v1767 = vpack.c.b16 %v1765, %v1764
    %1768 = vrot.lane.b32.xlu0 %v1660, 126
    %v1769 = vpop.permute.xlu0 %1768
    %1770 = vrot.lane.b32.xlu0 %v1661, 126
    %v1771 = vpop.permute.xlu0 %1770
    %1772 = vrot.lane.b32.xlu0 %v1662, 126
    %v1773 = vpop.permute.xlu0 %1772
    %1774 = vrot.lane.b32.xlu0 %v1663, 126
    %v1775 = vpop.permute.xlu0 %1774
    %1776 = vrot.lane.b32.xlu0 %v1664, 126
    %v1777 = vpop.permute.xlu0 %1776
    %1778 = vrot.lane.b32.xlu0 %v1665, 126
    %v1779 = vpop.permute.xlu0 %1778
    %v1780 = vsel %vm504, %v1769, %v1771
    %v1781 = vsel %vm504, %v1771, %v1773
    %v1782 = vsel %vm504, %v1775, %v1777
    %v1783 = vsel %vm504, %v1777, %v1779
    %v1789 = vsel %vm725, %v1766, 0
    %v1792 = vsel %vm725, %v1767, 0
    %1794 = vmatprep.subr.bf16.mxu0 0
    %1795 = vmatpush1.bf16.msra.mxu0 0
    %1796 = vmatprep.subr.bf16.mxu0 0
    %1797 = vmatpush1.bf16.msra.mxu0 0
    %1798 = vmatprep.subr.bf16.mxu0 0
    %1799 = vmatpush1.bf16.msra.mxu0 0
    %1800 = vmatprep.subr.bf16.mxu0 0
    %1801 = vmatpush1.bf16.msra.mxu0 0
    %1802 = vmatprep.subr.bf16.mxu0 0
    %1803 = vmatpush1.bf16.msra.mxu0 0
    %1804 = vmatprep.subr.bf16.mxu0 0
    %1805 = vmatpush1.bf16.msra.mxu0 0
    %1806 = vmatprep.subr.bf16.mxu0 %v1783
    %1807 = vmatpush1.bf16.msra.mxu0 %v1782
    %1808 = vmatprep.subr.bf16.mxu0 %v1781
    %1809 = vmatpush1.bf16.msra.mxu0 %v1780
    %1810 = vmatprep.subr.bf16.mxu0 0
    %1811 = vmatpush2.bf16.msra.mxu0 0
    %1812 = vmatprep.subr.bf16.mxu0 0
    %1813 = vmatpush2.bf16.msra.mxu0 0
    %1814 = vmatprep.subr.bf16.mxu0 0
    %1815 = vmatpush2.bf16.msra.mxu0 0
    %1816 = vmatprep.subr.bf16.mxu0 0
    %1817 = vmatpush2.bf16.msra.mxu0 0
    %1818 = vmatprep.subr.bf16.mxu0 0
    %1819 = vmatpush2.bf16.msra.mxu0 0
    %1820 = vmatprep.subr.bf16.mxu0 0
    %1821 = vmatpush2.bf16.msra.mxu0 0
    %1822 = vmatprep.subr.bf16.mxu0 0
    %1823 = vmatpush2.bf16.msra.mxu0 0
    %1824 = vmatprep.subr.bf16.mxu0 0
    %1825 = vmatpush2.bf16.msra.mxu0 0
    %1826 = vmatprep.mubr.bf16.mxu0 0
    %1827 = vmatmul.mubr.bf16.gmra.mxu0 %v1789
    %v1828 = vpop.f32.mrf.mxu0
    %v1829 = vadd.f32 0.0, %v1828
    %v1830 = vpop.f32.mrf.mxu0
    %v1831 = vadd.f32 0.0, %v1830
    %v1832 = vpop.f32.mrf.mxu0
    %v1833 = vadd.f32 0.0, %v1832
    %v1834 = vpop.f32.mrf.mxu0
    %v1835 = vadd.f32 0.0, %v1834
    %1836 = vmatprep.mubr.bf16.mxu0 0
    %1837 = vmatmul.mubr.bf16.gmra.mxu0 %v1792
    %v1838 = vpop.f32.mrf.mxu0
    %v1839 = vadd.f32 0.0, %v1838
    %v1840 = vpop.f32.mrf.mxu0
    %v1841 = vadd.f32 0.0, %v1840
    %v1842 = vpop.f32.mrf.mxu0
    %v1843 = vadd.f32 0.0, %v1842
    %v1844 = vpop.f32.mrf.mxu0
    %v1845 = vadd.f32 0.0, %v1844
    %1846 = vdwg.mxu0
    %v1847 = vadd.f32 %v1745, %v1829
    %v1848 = vadd.f32 %v1746, %v1831
    %v1849 = vadd.f32 %v1747, %v1833
    %v1850 = vadd.f32 %v1748, %v1835
    %v1851 = vadd.f32 %v1749, %v1839
    %v1852 = vadd.f32 %v1750, %v1841
    %v1853 = vadd.f32 %v1751, %v1843
    %v1854 = vadd.f32 %v1752, %v1845
    %v1855 = vld [vmem:[%s6] sm:$0xff]
    %v1856 = vld [vmem:[%s6 + $0x8] sm:$0xff]
    %v1857 = vld [vmem:[%s6 + $0x10] sm:$0xff]
    %v1858 = vld [vmem:[%s6 + $0x18] sm:$0xff]
    %1860 = vset.pattern.permute.xlu0 0
    %1861 = vperm.xlu0 %1860, %v1855
    %v1862 = vpop.permute.xlu0 %1861
    %1865 = vset.pattern.permute.xlu0 0
    %1866 = vperm.xlu0 %1865, %v1856
    %v1867 = vpop.permute.xlu0 %1866
    %1870 = vset.pattern.permute.xlu0 0
    %1871 = vperm.xlu0 %1870, %v1857
    %v1872 = vpop.permute.xlu0 %1871
    %1875 = vset.pattern.permute.xlu0 0
    %1876 = vperm.xlu0 %1875, %v1858
    %v1877 = vpop.permute.xlu0 %1876
    %v1879 = vadd.f32 %v1847, %v1862
    %v1880 = vadd.f32 %v1848, %v1862
    %v1881 = vadd.f32 %v1849, %v1867
    %v1882 = vadd.f32 %v1850, %v1867
    %v1883 = vadd.f32 %v1851, %v1872
    %v1884 = vadd.f32 %v1852, %v1872
    %v1885 = vadd.f32 %v1853, %v1877
    %v1886 = vadd.f32 %v1854, %v1877
    %v1887 = vpack.c.bf16 %v1881, %v1879
    %v1888 = vpack.c.bf16 %v1885, %v1883
    %v1891 = vunpack.c.l.b16 %v1887
    %v1892 = vunpack.c.h.b16 %v1887
    %v1893 = vunpack.c.l.b16 %v1888
    %v1894 = vunpack.c.h.b16 %v1888
    %v1895 = vpack.c.b16 %v1891, %v1891
    %v1896 = vpack.c.b16 %v1892, %v1892
    %v1897 = vpack.c.b16 %v1893, %v1893
    %v1898 = vpack.c.b16 %v1894, %v1894
    %1903 = vst.msk [vmem:[#allocation2 + $0x4] sm:$0xf] %vm87, %v1895
    %1904 = vst.msk [vmem:[#allocation2 + $0x14] sm:$0xf] %vm87, %v1896
    %1905 = vst.msk [vmem:[#allocation2 + $0x24] sm:$0xf] %vm87, %v1897
    %1906 = vst.msk [vmem:[#allocation2 + $0x34] sm:$0xf] %vm87, %v1898
    %v1907 = vpack.c.bf16 %v1882, %v1880
    %v1908 = vpack.c.bf16 %v1886, %v1884
    %v1911 = vunpack.c.l.b16 %v1907
    %v1912 = vunpack.c.h.b16 %v1907
    %v1913 = vunpack.c.l.b16 %v1908
    %v1914 = vunpack.c.h.b16 %v1908
    %v1915 = vpack.c.b16 %v1911, %v1911
    %v1916 = vpack.c.b16 %v1912, %v1912
    %v1917 = vpack.c.b16 %v1913, %v1913
    %v1918 = vpack.c.b16 %v1914, %v1914
    %1923 = vst.msk [vmem:[#allocation2 + $0x8] sm:$0xf] %vm87, %v1915
    %1924 = vst.msk [vmem:[#allocation2 + $0x18] sm:$0xf] %vm87, %v1916
    %1925 = vst.msk [vmem:[#allocation2 + $0x28] sm:$0xf] %vm87, %v1917
    %1926 = vst.msk [vmem:[#allocation2 + $0x38] sm:$0xf] %vm87, %v1918
    %v1927 = vld [vmem:[%s7] sm:$0xf]
    %v1928 = vld [vmem:[%s7 + $0x4] sm:$0xf]
    %v1929 = vld [vmem:[%s7 + $0x8] sm:$0xf]
    %v1930 = vld [vmem:[%s7 + $0xc] sm:$0xf]
    %v1931 = vld [vmem:[#allocation2] sm:$0xff]
    %v1932 = vld [vmem:[#allocation2 + $0x8] sm:$0xf]
    %v1933 = vld [vmem:[#allocation2 + $0x10] sm:$0xff]
    %v1934 = vld [vmem:[#allocation2 + $0x18] sm:$0xf]
    %v1935 = vld [vmem:[#allocation2 + $0x20] sm:$0xff]
    %v1936 = vld [vmem:[#allocation2 + $0x28] sm:$0xf]
    %v1937 = vld [vmem:[#allocation2 + $0x30] sm:$0xff]
    %v1938 = vld [vmem:[#allocation2 + $0x38] sm:$0xf]
    %s1939 = scalar_lea.vmem %s7, 16
    %v1940 = vld [vmem:[%s1939] sm:$0xf]
    %v1941 = vld [vmem:[%s1939 + $0x4] sm:$0xf]
    %v1942 = vld [vmem:[%s1939 + $0x8] sm:$0xf]
    %v1943 = vld [vmem:[%s1939 + $0xc] sm:$0xf]
    %v1948 = vunpack.c.l.b16 %v1940
    %v1949 = vunpack.c.l.b16 %v1941
    %v1950 = vunpack.c.l.b16 %v1942
    %v1951 = vunpack.c.l.b16 %v1943
    %v1952 = vpack.c.b16 %v1949, %v1948
    %v1953 = vpack.c.b16 %v1951, %v1950
    %v1962 = vunpack.c.l.b16 %v1931
    %v1963 = vunpack.c.h.b16 %v1931
    %v1964 = vunpack.c.l.b16 %v1932
    %v1965 = vunpack.c.l.b16 %v1933
    %v1966 = vunpack.c.h.b16 %v1933
    %v1967 = vunpack.c.l.b16 %v1934
    %v1968 = vunpack.c.l.b16 %v1935
    %v1969 = vunpack.c.h.b16 %v1935
    %v1970 = vunpack.c.l.b16 %v1936
    %v1971 = vunpack.c.l.b16 %v1937
    %v1972 = vunpack.c.h.b16 %v1937
    %v1973 = vunpack.c.l.b16 %v1938
    %v1974 = vpack.c.b16 %v1965, %v1962
    %v1975 = vpack.c.b16 %v1966, %v1963
    %v1976 = vpack.c.b16 %v1967, %v1964
    %v1977 = vpack.c.b16 %v1971, %v1968
    %v1978 = vpack.c.b16 %v1972, %v1969
    %v1979 = vpack.c.b16 %v1973, %v1970
    %1980 = vrot.lane.b32.xlu0 %v1974, 1
    %v1981 = vpop.permute.xlu0 %1980
    %1982 = vrot.lane.b32.xlu0 %v1975, 1
    %v1983 = vpop.permute.xlu0 %1982
    %1984 = vrot.lane.b32.xlu0 %v1976, 1
    %v1985 = vpop.permute.xlu0 %1984
    %1986 = vrot.lane.b32.xlu0 %v1977, 1
    %v1987 = vpop.permute.xlu0 %1986
    %1988 = vrot.lane.b32.xlu0 %v1978, 1
    %v1989 = vpop.permute.xlu0 %1988
    %1990 = vrot.lane.b32.xlu0 %v1979, 1
    %v1991 = vpop.permute.xlu0 %1990
    %v1992 = vsel %vm128, %v1981, %v1983
    %v1993 = vsel %vm128, %v1983, %v1985
    %v1994 = vsel %vm128, %v1987, %v1989
    %v1995 = vsel %vm128, %v1989, %v1991
    %v2001 = vsel %vm725, %v1952, 0
    %v2004 = vsel %vm725, %v1953, 0
    %2006 = vmatprep.subr.bf16.mxu0 0
    %2007 = vmatpush1.bf16.msra.mxu0 0
    %2008 = vmatprep.subr.bf16.mxu0 0
    %2009 = vmatpush1.bf16.msra.mxu0 0
    %2010 = vmatprep.subr.bf16.mxu0 0
    %2011 = vmatpush1.bf16.msra.mxu0 0
    %2012 = vmatprep.subr.bf16.mxu0 0
    %2013 = vmatpush1.bf16.msra.mxu0 0
    %2014 = vmatprep.subr.bf16.mxu0 0
    %2015 = vmatpush1.bf16.msra.mxu0 0
    %2016 = vmatprep.subr.bf16.mxu0 0
    %2017 = vmatpush1.bf16.msra.mxu0 0
    %2018 = vmatprep.subr.bf16.mxu0 %v1995
    %2019 = vmatpush1.bf16.msra.mxu0 %v1994
    %2020 = vmatprep.subr.bf16.mxu0 %v1993
    %2021 = vmatpush1.bf16.msra.mxu0 %v1992
    %2022 = vmatprep.subr.bf16.mxu0 0
    %2023 = vmatpush2.bf16.msra.mxu0 0
    %2024 = vmatprep.subr.bf16.mxu0 0
    %2025 = vmatpush2.bf16.msra.mxu0 0
    %2026 = vmatprep.subr.bf16.mxu0 0
    %2027 = vmatpush2.bf16.msra.mxu0 0
    %2028 = vmatprep.subr.bf16.mxu0 0
    %2029 = vmatpush2.bf16.msra.mxu0 0
    %2030 = vmatprep.subr.bf16.mxu0 0
    %2031 = vmatpush2.bf16.msra.mxu0 0
    %2032 = vmatprep.subr.bf16.mxu0 0
    %2033 = vmatpush2.bf16.msra.mxu0 0
    %2034 = vmatprep.subr.bf16.mxu0 0
    %2035 = vmatpush2.bf16.msra.mxu0 0
    %2036 = vmatprep.subr.bf16.mxu0 0
    %2037 = vmatpush2.bf16.msra.mxu0 0
    %2038 = vmatprep.mubr.bf16.mxu0 0
    %2039 = vmatmul.mubr.bf16.gmra.mxu0 %v2001
    %v2040 = vpop.f32.mrf.mxu0
    %v2041 = vadd.f32 0.0, %v2040
    %v2042 = vpop.f32.mrf.mxu0
    %v2043 = vadd.f32 0.0, %v2042
    %v2044 = vpop.f32.mrf.mxu0
    %v2045 = vadd.f32 0.0, %v2044
    %v2046 = vpop.f32.mrf.mxu0
    %v2047 = vadd.f32 0.0, %v2046
    %2048 = vmatprep.mubr.bf16.mxu0 0
    %2049 = vmatmul.mubr.bf16.gmra.mxu0 %v2004
    %v2050 = vpop.f32.mrf.mxu0
    %v2051 = vadd.f32 0.0, %v2050
    %v2052 = vpop.f32.mrf.mxu0
    %v2053 = vadd.f32 0.0, %v2052
    %v2054 = vpop.f32.mrf.mxu0
    %v2055 = vadd.f32 0.0, %v2054
    %v2056 = vpop.f32.mrf.mxu0
    %v2057 = vadd.f32 0.0, %v2056
    %2058 = vdwg.mxu0
    %v2063 = vunpack.c.l.b16 %v1927
    %v2064 = vunpack.c.l.b16 %v1928
    %v2065 = vunpack.c.l.b16 %v1929
    %v2066 = vunpack.c.l.b16 %v1930
    %v2067 = vpack.c.b16 %v2064, %v2063
    %v2068 = vpack.c.b16 %v2066, %v2065
    %2069 = vrot.lane.b32.xlu0 %v1974, 2
    %v2070 = vpop.permute.xlu0 %2069
    %2071 = vrot.lane.b32.xlu0 %v1975, 2
    %v2072 = vpop.permute.xlu0 %2071
    %2073 = vrot.lane.b32.xlu0 %v1976, 2
    %v2074 = vpop.permute.xlu0 %2073
    %2075 = vrot.lane.b32.xlu0 %v1977, 2
    %v2076 = vpop.permute.xlu0 %2075
    %2077 = vrot.lane.b32.xlu0 %v1978, 2
    %v2078 = vpop.permute.xlu0 %2077
    %2079 = vrot.lane.b32.xlu0 %v1979, 2
    %v2080 = vpop.permute.xlu0 %2079
    %v2081 = vsel %vm214, %v2070, %v2072
    %v2082 = vsel %vm214, %v2072, %v2074
    %v2083 = vsel %vm214, %v2076, %v2078
    %v2084 = vsel %vm214, %v2078, %v2080
    %v2090 = vsel %vm725, %v2067, 0
    %v2093 = vsel %vm725, %v2068, 0
    %2095 = vmatprep.subr.bf16.mxu0 0
    %2096 = vmatpush1.bf16.msra.mxu0 0
    %2097 = vmatprep.subr.bf16.mxu0 0
    %2098 = vmatpush1.bf16.msra.mxu0 0
    %2099 = vmatprep.subr.bf16.mxu0 0
    %2100 = vmatpush1.bf16.msra.mxu0 0
    %2101 = vmatprep.subr.bf16.mxu0 0
    %2102 = vmatpush1.bf16.msra.mxu0 0
    %2103 = vmatprep.subr.bf16.mxu0 0
    %2104 = vmatpush1.bf16.msra.mxu0 0
    %2105 = vmatprep.subr.bf16.mxu0 0
    %2106 = vmatpush1.bf16.msra.mxu0 0
    %2107 = vmatprep.subr.bf16.mxu0 %v2084
    %2108 = vmatpush1.bf16.msra.mxu0 %v2083
    %2109 = vmatprep.subr.bf16.mxu0 %v2082
    %2110 = vmatpush1.bf16.msra.mxu0 %v2081
    %2111 = vmatprep.subr.bf16.mxu0 0
    %2112 = vmatpush2.bf16.msra.mxu0 0
    %2113 = vmatprep.subr.bf16.mxu0 0
    %2114 = vmatpush2.bf16.msra.mxu0 0
    %2115 = vmatprep.subr.bf16.mxu0 0
    %2116 = vmatpush2.bf16.msra.mxu0 0
    %2117 = vmatprep.subr.bf16.mxu0 0
    %2118 = vmatpush2.bf16.msra.mxu0 0
    %2119 = vmatprep.subr.bf16.mxu0 0
    %2120 = vmatpush2.bf16.msra.mxu0 0
    %2121 = vmatprep.subr.bf16.mxu0 0
    %2122 = vmatpush2.bf16.msra.mxu0 0
    %2123 = vmatprep.subr.bf16.mxu0 0
    %2124 = vmatpush2.bf16.msra.mxu0 0
    %2125 = vmatprep.subr.bf16.mxu0 0
    %2126 = vmatpush2.bf16.msra.mxu0 0
    %2127 = vmatprep.mubr.bf16.mxu0 0
    %2128 = vmatmul.mubr.bf16.gmra.mxu0 %v2090
    %v2129 = vpop.f32.mrf.mxu0
    %v2130 = vadd.f32 %v2041, %v2129
    %v2131 = vpop.f32.mrf.mxu0
    %v2132 = vadd.f32 %v2043, %v2131
    %v2133 = vpop.f32.mrf.mxu0
    %v2134 = vadd.f32 %v2045, %v2133
    %v2135 = vpop.f32.mrf.mxu0
    %v2136 = vadd.f32 %v2047, %v2135
    %2137 = vmatprep.mubr.bf16.mxu0 0
    %2138 = vmatmul.mubr.bf16.gmra.mxu0 %v2093
    %v2139 = vpop.f32.mrf.mxu0
    %v2140 = vadd.f32 %v2051, %v2139
    %v2141 = vpop.f32.mrf.mxu0
    %v2142 = vadd.f32 %v2053, %v2141
    %v2143 = vpop.f32.mrf.mxu0
    %v2144 = vadd.f32 %v2055, %v2143
    %v2145 = vpop.f32.mrf.mxu0
    %v2146 = vadd.f32 %v2057, %v2145
    %2147 = vdwg.mxu0
    %s2148 = scalar_lea.vmem %s7, 32
    %v2149 = vld [vmem:[%s2148] sm:$0xf]
    %v2150 = vld [vmem:[%s2148 + $0x4] sm:$0xf]
    %v2151 = vld [vmem:[%s2148 + $0x8] sm:$0xf]
    %v2152 = vld [vmem:[%s2148 + $0xc] sm:$0xf]
    %v2153 = vld [vmem:[#allocation2 + $0x4] sm:$0xff]
    %v2154 = vld [vmem:[#allocation2 + $0x14] sm:$0xff]
    %v2155 = vld [vmem:[#allocation2 + $0x24] sm:$0xff]
    %v2156 = vld [vmem:[#allocation2 + $0x34] sm:$0xff]
    %v2161 = vunpack.c.l.b16 %v2149
    %v2162 = vunpack.c.l.b16 %v2150
    %v2163 = vunpack.c.l.b16 %v2151
    %v2164 = vunpack.c.l.b16 %v2152
    %v2165 = vpack.c.b16 %v2162, %v2161
    %v2166 = vpack.c.b16 %v2164, %v2163
    %v2171 = vunpack.c.l.b16 %v2153
    %v2172 = vunpack.c.h.b16 %v2153
    %v2173 = vunpack.c.l.b16 %v2154
    %v2174 = vunpack.c.h.b16 %v2154
    %v2175 = vunpack.c.l.b16 %v2155
    %v2176 = vunpack.c.h.b16 %v2155
    %v2177 = vunpack.c.l.b16 %v2156
    %v2178 = vunpack.c.h.b16 %v2156
    %v2179 = vpack.c.b16 %v2173, %v2171
    %v2180 = vpack.c.b16 %v2174, %v2172
    %v2181 = vpack.c.b16 %v2177, %v2175
    %v2182 = vpack.c.b16 %v2178, %v2176
    %v2188 = vsel %vm725, %v2165, 0
    %v2191 = vsel %vm725, %v2166, 0
    %2193 = vmatprep.subr.bf16.mxu0 0
    %2194 = vmatpush1.bf16.msra.mxu0 0
    %2195 = vmatprep.subr.bf16.mxu0 0
    %2196 = vmatpush1.bf16.msra.mxu0 0
    %2197 = vmatprep.subr.bf16.mxu0 0
    %2198 = vmatpush1.bf16.msra.mxu0 0
    %2199 = vmatprep.subr.bf16.mxu0 0
    %2200 = vmatpush1.bf16.msra.mxu0 0
    %2201 = vmatprep.subr.bf16.mxu0 0
    %2202 = vmatpush1.bf16.msra.mxu0 0
    %2203 = vmatprep.subr.bf16.mxu0 0
    %2204 = vmatpush1.bf16.msra.mxu0 0
    %2205 = vmatprep.subr.bf16.mxu0 %v2182
    %2206 = vmatpush1.bf16.msra.mxu0 %v2181
    %2207 = vmatprep.subr.bf16.mxu0 %v2180
    %2208 = vmatpush1.bf16.msra.mxu0 %v2179
    %2209 = vmatprep.subr.bf16.mxu0 0
    %2210 = vmatpush2.bf16.msra.mxu0 0
    %2211 = vmatprep.subr.bf16.mxu0 0
    %2212 = vmatpush2.bf16.msra.mxu0 0
    %2213 = vmatprep.subr.bf16.mxu0 0
    %2214 = vmatpush2.bf16.msra.mxu0 0
    %2215 = vmatprep.subr.bf16.mxu0 0
    %2216 = vmatpush2.bf16.msra.mxu0 0
    %2217 = vmatprep.subr.bf16.mxu0 0
    %2218 = vmatpush2.bf16.msra.mxu0 0
    %2219 = vmatprep.subr.bf16.mxu0 0
    %2220 = vmatpush2.bf16.msra.mxu0 0
    %2221 = vmatprep.subr.bf16.mxu0 0
    %2222 = vmatpush2.bf16.msra.mxu0 0
    %2223 = vmatprep.subr.bf16.mxu0 0
    %2224 = vmatpush2.bf16.msra.mxu0 0
    %2225 = vmatprep.mubr.bf16.mxu0 0
    %2226 = vmatmul.mubr.bf16.gmra.mxu0 %v2188
    %v2227 = vpop.f32.mrf.mxu0
    %v2228 = vadd.f32 0.0, %v2227
    %v2229 = vpop.f32.mrf.mxu0
    %v2230 = vadd.f32 0.0, %v2229
    %v2231 = vpop.f32.mrf.mxu0
    %v2232 = vadd.f32 0.0, %v2231
    %v2233 = vpop.f32.mrf.mxu0
    %v2234 = vadd.f32 0.0, %v2233
    %2235 = vmatprep.mubr.bf16.mxu0 0
    %2236 = vmatmul.mubr.bf16.gmra.mxu0 %v2191
    %v2237 = vpop.f32.mrf.mxu0
    %v2238 = vadd.f32 0.0, %v2237
    %v2239 = vpop.f32.mrf.mxu0
    %v2240 = vadd.f32 0.0, %v2239
    %v2241 = vpop.f32.mrf.mxu0
    %v2242 = vadd.f32 0.0, %v2241
    %v2243 = vpop.f32.mrf.mxu0
    %v2244 = vadd.f32 0.0, %v2243
    %2245 = vdwg.mxu0
    %v2246 = vadd.f32 %v2130, %v2228
    %v2247 = vadd.f32 %v2132, %v2230
    %v2248 = vadd.f32 %v2134, %v2232
    %v2249 = vadd.f32 %v2136, %v2234
    %v2250 = vadd.f32 %v2140, %v2238
    %v2251 = vadd.f32 %v2142, %v2240
    %v2252 = vadd.f32 %v2144, %v2242
    %v2253 = vadd.f32 %v2146, %v2244
    %s2254 = scalar_lea.vmem %s7, 48
    %v2255 = vld [vmem:[%s2254] sm:$0xf]
    %v2256 = vld [vmem:[%s2254 + $0x4] sm:$0xf]
    %v2257 = vld [vmem:[%s2254 + $0x8] sm:$0xf]
    %v2258 = vld [vmem:[%s2254 + $0xc] sm:$0xf]
    %v2259 = vld [vmem:[#allocation2 + $0x4] sm:$0xff]
    %v2260 = vld [vmem:[#allocation2 + $0xc] sm:$0xf]
    %v2261 = vld [vmem:[#allocation2 + $0x14] sm:$0xff]
    %v2262 = vld [vmem:[#allocation2 + $0x1c] sm:$0xf]
    %v2263 = vld [vmem:[#allocation2 + $0x24] sm:$0xff]
    %v2264 = vld [vmem:[#allocation2 + $0x2c] sm:$0xf]
    %v2265 = vld [vmem:[#allocation2 + $0x34] sm:$0xff]
    %v2266 = vld [vmem:[#allocation2 + $0x3c] sm:$0xf]
    %v2271 = vunpack.c.l.b16 %v2255
    %v2272 = vunpack.c.l.b16 %v2256
    %v2273 = vunpack.c.l.b16 %v2257
    %v2274 = vunpack.c.l.b16 %v2258
    %v2275 = vpack.c.b16 %v2272, %v2271
    %v2276 = vpack.c.b16 %v2274, %v2273
    %v2285 = vunpack.c.l.b16 %v2259
    %v2286 = vunpack.c.h.b16 %v2259
    %v2287 = vunpack.c.l.b16 %v2260
    %v2288 = vunpack.c.l.b16 %v2261
    %v2289 = vunpack.c.h.b16 %v2261
    %v2290 = vunpack.c.l.b16 %v2262
    %v2291 = vunpack.c.l.b16 %v2263
    %v2292 = vunpack.c.h.b16 %v2263
    %v2293 = vunpack.c.l.b16 %v2264
    %v2294 = vunpack.c.l.b16 %v2265
    %v2295 = vunpack.c.h.b16 %v2265
    %v2296 = vunpack.c.l.b16 %v2266
    %v2297 = vpack.c.b16 %v2288, %v2285
    %v2298 = vpack.c.b16 %v2289, %v2286
    %v2299 = vpack.c.b16 %v2290, %v2287
    %v2300 = vpack.c.b16 %v2294, %v2291
    %v2301 = vpack.c.b16 %v2295, %v2292
    %v2302 = vpack.c.b16 %v2296, %v2293
    %2303 = vrot.lane.b32.xlu0 %v2297, 127
    %v2304 = vpop.permute.xlu0 %2303
    %2305 = vrot.lane.b32.xlu0 %v2298, 127
    %v2306 = vpop.permute.xlu0 %2305
    %2307 = vrot.lane.b32.xlu0 %v2299, 127
    %v2308 = vpop.permute.xlu0 %2307
    %2309 = vrot.lane.b32.xlu0 %v2300, 127
    %v2310 = vpop.permute.xlu0 %2309
    %2311 = vrot.lane.b32.xlu0 %v2301, 127
    %v2312 = vpop.permute.xlu0 %2311
    %2313 = vrot.lane.b32.xlu0 %v2302, 127
    %v2314 = vpop.permute.xlu0 %2313
    %v2315 = vsel %vm407, %v2304, %v2306
    %v2316 = vsel %vm407, %v2306, %v2308
    %v2317 = vsel %vm407, %v2310, %v2312
    %v2318 = vsel %vm407, %v2312, %v2314
    %v2324 = vsel %vm725, %v2275, 0
    %v2327 = vsel %vm725, %v2276, 0
    %2329 = vmatprep.subr.bf16.mxu0 0
    %2330 = vmatpush1.bf16.msra.mxu0 0
    %2331 = vmatprep.subr.bf16.mxu0 0
    %2332 = vmatpush1.bf16.msra.mxu0 0
    %2333 = vmatprep.subr.bf16.mxu0 0
    %2334 = vmatpush1.bf16.msra.mxu0 0
    %2335 = vmatprep.subr.bf16.mxu0 0
    %2336 = vmatpush1.bf16.msra.mxu0 0
    %2337 = vmatprep.subr.bf16.mxu0 0
    %2338 = vmatpush1.bf16.msra.mxu0 0
    %2339 = vmatprep.subr.bf16.mxu0 0
    %2340 = vmatpush1.bf16.msra.mxu0 0
    %2341 = vmatprep.subr.bf16.mxu0 %v2318
    %2342 = vmatpush1.bf16.msra.mxu0 %v2317
    %2343 = vmatprep.subr.bf16.mxu0 %v2316
    %2344 = vmatpush1.bf16.msra.mxu0 %v2315
    %2345 = vmatprep.subr.bf16.mxu0 0
    %2346 = vmatpush2.bf16.msra.mxu0 0
    %2347 = vmatprep.subr.bf16.mxu0 0
    %2348 = vmatpush2.bf16.msra.mxu0 0
    %2349 = vmatprep.subr.bf16.mxu0 0
    %2350 = vmatpush2.bf16.msra.mxu0 0
    %2351 = vmatprep.subr.bf16.mxu0 0
    %2352 = vmatpush2.bf16.msra.mxu0 0
    %2353 = vmatprep.subr.bf16.mxu0 0
    %2354 = vmatpush2.bf16.msra.mxu0 0
    %2355 = vmatprep.subr.bf16.mxu0 0
    %2356 = vmatpush2.bf16.msra.mxu0 0
    %2357 = vmatprep.subr.bf16.mxu0 0
    %2358 = vmatpush2.bf16.msra.mxu0 0
    %2359 = vmatprep.subr.bf16.mxu0 0
    %2360 = vmatpush2.bf16.msra.mxu0 0
    %2361 = vmatprep.mubr.bf16.mxu0 0
    %2362 = vmatmul.mubr.bf16.gmra.mxu0 %v2324
    %v2363 = vpop.f32.mrf.mxu0
    %v2364 = vadd.f32 0.0, %v2363
    %v2365 = vpop.f32.mrf.mxu0
    %v2366 = vadd.f32 0.0, %v2365
    %v2367 = vpop.f32.mrf.mxu0
    %v2368 = vadd.f32 0.0, %v2367
    %v2369 = vpop.f32.mrf.mxu0
    %v2370 = vadd.f32 0.0, %v2369
    %2371 = vmatprep.mubr.bf16.mxu0 0
    %2372 = vmatmul.mubr.bf16.gmra.mxu0 %v2327
    %v2373 = vpop.f32.mrf.mxu0
    %v2374 = vadd.f32 0.0, %v2373
    %v2375 = vpop.f32.mrf.mxu0
    %v2376 = vadd.f32 0.0, %v2375
    %v2377 = vpop.f32.mrf.mxu0
    %v2378 = vadd.f32 0.0, %v2377
    %v2379 = vpop.f32.mrf.mxu0
    %v2380 = vadd.f32 0.0, %v2379
    %2381 = vdwg.mxu0
    %v2382 = vadd.f32 %v2246, %v2364
    %v2383 = vadd.f32 %v2247, %v2366
    %v2384 = vadd.f32 %v2248, %v2368
    %v2385 = vadd.f32 %v2249, %v2370
    %v2386 = vadd.f32 %v2250, %v2374
    %v2387 = vadd.f32 %v2251, %v2376
    %v2388 = vadd.f32 %v2252, %v2378
    %v2389 = vadd.f32 %v2253, %v2380
    %s2390 = scalar_lea.vmem %s7, 64
    %v2391 = vld [vmem:[%s2390] sm:$0xf]
    %v2392 = vld [vmem:[%s2390 + $0x4] sm:$0xf]
    %v2393 = vld [vmem:[%s2390 + $0x8] sm:$0xf]
    %v2394 = vld [vmem:[%s2390 + $0xc] sm:$0xf]
    %v2399 = vunpack.c.l.b16 %v2391
    %v2400 = vunpack.c.l.b16 %v2392
    %v2401 = vunpack.c.l.b16 %v2393
    %v2402 = vunpack.c.l.b16 %v2394
    %v2403 = vpack.c.b16 %v2400, %v2399
    %v2404 = vpack.c.b16 %v2402, %v2401
    %2405 = vrot.lane.b32.xlu0 %v2297, 126
    %v2406 = vpop.permute.xlu0 %2405
    %2407 = vrot.lane.b32.xlu0 %v2298, 126
    %v2408 = vpop.permute.xlu0 %2407
    %2409 = vrot.lane.b32.xlu0 %v2299, 126
    %v2410 = vpop.permute.xlu0 %2409
    %2411 = vrot.lane.b32.xlu0 %v2300, 126
    %v2412 = vpop.permute.xlu0 %2411
    %2413 = vrot.lane.b32.xlu0 %v2301, 126
    %v2414 = vpop.permute.xlu0 %2413
    %2415 = vrot.lane.b32.xlu0 %v2302, 126
    %v2416 = vpop.permute.xlu0 %2415
    %v2417 = vsel %vm504, %v2406, %v2408
    %v2418 = vsel %vm504, %v2408, %v2410
    %v2419 = vsel %vm504, %v2412, %v2414
    %v2420 = vsel %vm504, %v2414, %v2416
    %v2426 = vsel %vm725, %v2403, 0
    %v2429 = vsel %vm725, %v2404, 0
    %2431 = vmatprep.subr.bf16.mxu0 0
    %2432 = vmatpush1.bf16.msra.mxu0 0
    %2433 = vmatprep.subr.bf16.mxu0 0
    %2434 = vmatpush1.bf16.msra.mxu0 0
    %2435 = vmatprep.subr.bf16.mxu0 0
    %2436 = vmatpush1.bf16.msra.mxu0 0
    %2437 = vmatprep.subr.bf16.mxu0 0
    %2438 = vmatpush1.bf16.msra.mxu0 0
    %2439 = vmatprep.subr.bf16.mxu0 0
    %2440 = vmatpush1.bf16.msra.mxu0 0
    %2441 = vmatprep.subr.bf16.mxu0 0
    %2442 = vmatpush1.bf16.msra.mxu0 0
    %2443 = vmatprep.subr.bf16.mxu0 %v2420
    %2444 = vmatpush1.bf16.msra.mxu0 %v2419
    %2445 = vmatprep.subr.bf16.mxu0 %v2418
    %2446 = vmatpush1.bf16.msra.mxu0 %v2417
    %2447 = vmatprep.subr.bf16.mxu0 0
    %2448 = vmatpush2.bf16.msra.mxu0 0
    %2449 = vmatprep.subr.bf16.mxu0 0
    %2450 = vmatpush2.bf16.msra.mxu0 0
    %2451 = vmatprep.subr.bf16.mxu0 0
    %2452 = vmatpush2.bf16.msra.mxu0 0
    %2453 = vmatprep.subr.bf16.mxu0 0
    %2454 = vmatpush2.bf16.msra.mxu0 0
    %2455 = vmatprep.subr.bf16.mxu0 0
    %2456 = vmatpush2.bf16.msra.mxu0 0
    %2457 = vmatprep.subr.bf16.mxu0 0
    %2458 = vmatpush2.bf16.msra.mxu0 0
    %2459 = vmatprep.subr.bf16.mxu0 0
    %2460 = vmatpush2.bf16.msra.mxu0 0
    %2461 = vmatprep.subr.bf16.mxu0 0
    %2462 = vmatpush2.bf16.msra.mxu0 0
    %2463 = vmatprep.mubr.bf16.mxu0 0
    %2464 = vmatmul.mubr.bf16.gmra.mxu0 %v2426
    %v2465 = vpop.f32.mrf.mxu0
    %v2466 = vadd.f32 0.0, %v2465
    %v2467 = vpop.f32.mrf.mxu0
    %v2468 = vadd.f32 0.0, %v2467
    %v2469 = vpop.f32.mrf.mxu0
    %v2470 = vadd.f32 0.0, %v2469
    %v2471 = vpop.f32.mrf.mxu0
    %v2472 = vadd.f32 0.0, %v2471
    %2473 = vmatprep.mubr.bf16.mxu0 0
    %2474 = vmatmul.mubr.bf16.gmra.mxu0 %v2429
    %v2475 = vpop.f32.mrf.mxu0
    %v2476 = vadd.f32 0.0, %v2475
    %v2477 = vpop.f32.mrf.mxu0
    %v2478 = vadd.f32 0.0, %v2477
    %v2479 = vpop.f32.mrf.mxu0
    %v2480 = vadd.f32 0.0, %v2479
    %v2481 = vpop.f32.mrf.mxu0
    %v2482 = vadd.f32 0.0, %v2481
    %2483 = vdwg.mxu0
    %v2484 = vadd.f32 %v2382, %v2466
    %v2485 = vadd.f32 %v2383, %v2468
    %v2486 = vadd.f32 %v2384, %v2470
    %v2487 = vadd.f32 %v2385, %v2472
    %v2488 = vadd.f32 %v2386, %v2476
    %v2489 = vadd.f32 %v2387, %v2478
    %v2490 = vadd.f32 %v2388, %v2480
    %v2491 = vadd.f32 %v2389, %v2482
    %v2492 = vld [vmem:[%s8] sm:$0xff]
    %v2493 = vld [vmem:[%s8 + $0x8] sm:$0xff]
    %v2494 = vld [vmem:[%s8 + $0x10] sm:$0xff]
    %v2495 = vld [vmem:[%s8 + $0x18] sm:$0xff]
    %2497 = vset.pattern.permute.xlu0 0
    %2498 = vperm.xlu0 %2497, %v2492
    %v2499 = vpop.permute.xlu0 %2498
    %2502 = vset.pattern.permute.xlu0 0
    %2503 = vperm.xlu0 %2502, %v2493
    %v2504 = vpop.permute.xlu0 %2503
    %2507 = vset.pattern.permute.xlu0 0
    %2508 = vperm.xlu0 %2507, %v2494
    %v2509 = vpop.permute.xlu0 %2508
    %2512 = vset.pattern.permute.xlu0 0
    %2513 = vperm.xlu0 %2512, %v2495
    %v2514 = vpop.permute.xlu0 %2513
    %v2516 = vadd.f32 %v2484, %v2499
    %v2517 = vadd.f32 %v2485, %v2499
    %v2518 = vadd.f32 %v2486, %v2504
    %v2519 = vadd.f32 %v2487, %v2504
    %v2520 = vadd.f32 %v2488, %v2509
    %v2521 = vadd.f32 %v2489, %v2509
    %v2522 = vadd.f32 %v2490, %v2514
    %v2523 = vadd.f32 %v2491, %v2514
    %v2524 = vpack.c.bf16 %v2518, %v2516
    %v2525 = vpack.c.bf16 %v2522, %v2520
    %v2528 = vunpack.c.l.b16 %v2524
    %v2529 = vunpack.c.h.b16 %v2524
    %v2530 = vunpack.c.l.b16 %v2525
    %v2531 = vunpack.c.h.b16 %v2525
    %v2532 = vpack.c.b16 %v2528, %v2528
    %v2533 = vpack.c.b16 %v2529, %v2529
    %v2534 = vpack.c.b16 %v2530, %v2530
    %v2535 = vpack.c.b16 %v2531, %v2531
    %2540 = vst.msk [vmem:[#allocation2 + $0x4] sm:$0xf] %vm87, %v2532
    %2541 = vst.msk [vmem:[#allocation2 + $0x14] sm:$0xf] %vm87, %v2533
    %2542 = vst.msk [vmem:[#allocation2 + $0x24] sm:$0xf] %vm87, %v2534
    %2543 = vst.msk [vmem:[#allocation2 + $0x34] sm:$0xf] %vm87, %v2535
    %v2544 = vpack.c.bf16 %v2519, %v2517
    %v2545 = vpack.c.bf16 %v2523, %v2521
    %v2548 = vunpack.c.l.b16 %v2544
    %v2549 = vunpack.c.h.b16 %v2544
    %v2550 = vunpack.c.l.b16 %v2545
    %v2551 = vunpack.c.h.b16 %v2545
    %v2552 = vpack.c.b16 %v2548, %v2548
    %v2553 = vpack.c.b16 %v2549, %v2549
    %v2554 = vpack.c.b16 %v2550, %v2550
    %v2555 = vpack.c.b16 %v2551, %v2551
    %2560 = vst.msk [vmem:[#allocation2 + $0x8] sm:$0xf] %vm87, %v2552
    %2561 = vst.msk [vmem:[#allocation2 + $0x18] sm:$0xf] %vm87, %v2553
    %2562 = vst.msk [vmem:[#allocation2 + $0x28] sm:$0xf] %vm87, %v2554
    %2563 = vst.msk [vmem:[#allocation2 + $0x38] sm:$0xf] %vm87, %v2555
    %v2564 = vld [vmem:[#allocation6] sm:$0xf]
    %v2565 = vld [vmem:[#allocation2] sm:$0xff]
    %v2566 = vld [vmem:[#allocation2 + $0x8] sm:$0xf]
    %v2567 = vld [vmem:[#allocation2 + $0x10] sm:$0xff]
    %v2568 = vld [vmem:[#allocation2 + $0x18] sm:$0xf]
    %v2569 = vld [vmem:[#allocation2 + $0x20] sm:$0xff]
    %v2570 = vld [vmem:[#allocation2 + $0x28] sm:$0xf]
    %v2571 = vld [vmem:[#allocation2 + $0x30] sm:$0xff]
    %v2572 = vld [vmem:[#allocation2 + $0x38] sm:$0xf]
    %s2573 = scalar_lea.vmem [#allocation6], 4
    %v2574 = vld [vmem:[%s2573] sm:$0xf]
    %v2583 = vunpack.c.l.b16 %v2565
    %v2584 = vunpack.c.h.b16 %v2565
    %v2585 = vunpack.c.l.b16 %v2566
    %v2586 = vunpack.c.l.b16 %v2567
    %v2587 = vunpack.c.h.b16 %v2567
    %v2588 = vunpack.c.l.b16 %v2568
    %v2589 = vunpack.c.l.b16 %v2569
    %v2590 = vunpack.c.h.b16 %v2569
    %v2591 = vunpack.c.l.b16 %v2570
    %v2592 = vunpack.c.l.b16 %v2571
    %v2593 = vunpack.c.h.b16 %v2571
    %v2594 = vunpack.c.l.b16 %v2572
    %v2595 = vpack.c.b16 %v2586, %v2583
    %v2596 = vpack.c.b16 %v2587, %v2584
    %v2597 = vpack.c.b16 %v2588, %v2585
    %v2598 = vpack.c.b16 %v2592, %v2589
    %v2599 = vpack.c.b16 %v2593, %v2590
    %v2600 = vpack.c.b16 %v2594, %v2591
    %2601 = vrot.lane.b32.xlu0 %v2595, 1
    %v2602 = vpop.permute.xlu0 %2601
    %2603 = vrot.lane.b32.xlu0 %v2596, 1
    %v2604 = vpop.permute.xlu0 %2603
    %2605 = vrot.lane.b32.xlu0 %v2597, 1
    %v2606 = vpop.permute.xlu0 %2605
    %2607 = vrot.lane.b32.xlu0 %v2598, 1
    %v2608 = vpop.permute.xlu0 %2607
    %2609 = vrot.lane.b32.xlu0 %v2599, 1
    %v2610 = vpop.permute.xlu0 %2609
    %2611 = vrot.lane.b32.xlu0 %v2600, 1
    %v2612 = vpop.permute.xlu0 %2611
    %v2613 = vsel %vm128, %v2602, %v2604
    %v2614 = vsel %vm128, %v2604, %v2606
    %v2615 = vsel %vm128, %v2608, %v2610
    %v2616 = vsel %vm128, %v2610, %v2612
    %v2622 = vsel %vm725, %v2574, 0
    %2624 = vmatprep.subr.bf16.mxu0 0
    %2625 = vmatpush1.bf16.msra.mxu0 0
    %2626 = vmatprep.subr.bf16.mxu0 0
    %2627 = vmatpush1.bf16.msra.mxu0 0
    %2628 = vmatprep.subr.bf16.mxu0 0
    %2629 = vmatpush1.bf16.msra.mxu0 0
    %2630 = vmatprep.subr.bf16.mxu0 0
    %2631 = vmatpush1.bf16.msra.mxu0 0
    %2632 = vmatprep.subr.bf16.mxu0 0
    %2633 = vmatpush1.bf16.msra.mxu0 0
    %2634 = vmatprep.subr.bf16.mxu0 0
    %2635 = vmatpush1.bf16.msra.mxu0 0
    %2636 = vmatprep.subr.bf16.mxu0 %v2616
    %2637 = vmatpush1.bf16.msra.mxu0 %v2615
    %2638 = vmatprep.subr.bf16.mxu0 %v2614
    %2639 = vmatpush1.bf16.msra.mxu0 %v2613
    %2640 = vmatprep.subr.bf16.mxu0 0
    %2641 = vmatpush2.bf16.msra.mxu0 0
    %2642 = vmatprep.subr.bf16.mxu0 0
    %2643 = vmatpush2.bf16.msra.mxu0 0
    %2644 = vmatprep.subr.bf16.mxu0 0
    %2645 = vmatpush2.bf16.msra.mxu0 0
    %2646 = vmatprep.subr.bf16.mxu0 0
    %2647 = vmatpush2.bf16.msra.mxu0 0
    %2648 = vmatprep.subr.bf16.mxu0 0
    %2649 = vmatpush2.bf16.msra.mxu0 0
    %2650 = vmatprep.subr.bf16.mxu0 0
    %2651 = vmatpush2.bf16.msra.mxu0 0
    %2652 = vmatprep.subr.bf16.mxu0 0
    %2653 = vmatpush2.bf16.msra.mxu0 0
    %2654 = vmatprep.subr.bf16.mxu0 0
    %2655 = vmatpush2.bf16.msra.mxu0 0
    %2656 = vmatprep.mubr.bf16.mxu0 0
    %2657 = vmatmul.mubr.bf16.gmra.mxu0 %v2622
    %v2658 = vpop.f32.mrf.mxu0
    %v2659 = vadd.f32 0.0, %v2658
    %v2660 = vpop.f32.mrf.mxu0
    %v2661 = vadd.f32 0.0, %v2660
    %v2662 = vpop.f32.mrf.mxu0
    %v2663 = vpop.f32.mrf.mxu0
    %2664 = vdwg.mxu0
    %2665 = vrot.lane.b32.xlu0 %v2595, 2
    %v2666 = vpop.permute.xlu0 %2665
    %2667 = vrot.lane.b32.xlu0 %v2596, 2
    %v2668 = vpop.permute.xlu0 %2667
    %2669 = vrot.lane.b32.xlu0 %v2597, 2
    %v2670 = vpop.permute.xlu0 %2669
    %2671 = vrot.lane.b32.xlu0 %v2598, 2
    %v2672 = vpop.permute.xlu0 %2671
    %2673 = vrot.lane.b32.xlu0 %v2599, 2
    %v2674 = vpop.permute.xlu0 %2673
    %2675 = vrot.lane.b32.xlu0 %v2600, 2
    %v2676 = vpop.permute.xlu0 %2675
    %v2677 = vsel %vm214, %v2666, %v2668
    %v2678 = vsel %vm214, %v2668, %v2670
    %v2679 = vsel %vm214, %v2672, %v2674
    %v2680 = vsel %vm214, %v2674, %v2676
    %v2686 = vsel %vm725, %v2564, 0
    %2688 = vmatprep.subr.bf16.mxu0 0
    %2689 = vmatpush1.bf16.msra.mxu0 0
    %2690 = vmatprep.subr.bf16.mxu0 0
    %2691 = vmatpush1.bf16.msra.mxu0 0
    %2692 = vmatprep.subr.bf16.mxu0 0
    %2693 = vmatpush1.bf16.msra.mxu0 0
    %2694 = vmatprep.subr.bf16.mxu0 0
    %2695 = vmatpush1.bf16.msra.mxu0 0
    %2696 = vmatprep.subr.bf16.mxu0 0
    %2697 = vmatpush1.bf16.msra.mxu0 0
    %2698 = vmatprep.subr.bf16.mxu0 0
    %2699 = vmatpush1.bf16.msra.mxu0 0
    %2700 = vmatprep.subr.bf16.mxu0 %v2680
    %2701 = vmatpush1.bf16.msra.mxu0 %v2679
    %2702 = vmatprep.subr.bf16.mxu0 %v2678
    %2703 = vmatpush1.bf16.msra.mxu0 %v2677
    %2704 = vmatprep.subr.bf16.mxu0 0
    %2705 = vmatpush2.bf16.msra.mxu0 0
    %2706 = vmatprep.subr.bf16.mxu0 0
    %2707 = vmatpush2.bf16.msra.mxu0 0
    %2708 = vmatprep.subr.bf16.mxu0 0
    %2709 = vmatpush2.bf16.msra.mxu0 0
    %2710 = vmatprep.subr.bf16.mxu0 0
    %2711 = vmatpush2.bf16.msra.mxu0 0
    %2712 = vmatprep.subr.bf16.mxu0 0
    %2713 = vmatpush2.bf16.msra.mxu0 0
    %2714 = vmatprep.subr.bf16.mxu0 0
    %2715 = vmatpush2.bf16.msra.mxu0 0
    %2716 = vmatprep.subr.bf16.mxu0 0
    %2717 = vmatpush2.bf16.msra.mxu0 0
    %2718 = vmatprep.subr.bf16.mxu0 0
    %2719 = vmatpush2.bf16.msra.mxu0 0
    %2720 = vmatprep.mubr.bf16.mxu0 0
    %2721 = vmatmul.mubr.bf16.gmra.mxu0 %v2686
    %v2722 = vpop.f32.mrf.mxu0
    %v2723 = vadd.f32 %v2659, %v2722
    %v2724 = vpop.f32.mrf.mxu0
    %v2725 = vadd.f32 %v2661, %v2724
    %v2726 = vpop.f32.mrf.mxu0
    %v2727 = vpop.f32.mrf.mxu0
    %2728 = vdwg.mxu0
    %s2729 = scalar_lea.vmem [#allocation6], 8
    %v2730 = vld [vmem:[%s2729] sm:$0xf]
    %v2731 = vld [vmem:[#allocation2 + $0x4] sm:$0xff]
    %v2732 = vld [vmem:[#allocation2 + $0x14] sm:$0xff]
    %v2733 = vld [vmem:[#allocation2 + $0x24] sm:$0xff]
    %v2734 = vld [vmem:[#allocation2 + $0x34] sm:$0xff]
    %v2739 = vunpack.c.l.b16 %v2731
    %v2740 = vunpack.c.h.b16 %v2731
    %v2741 = vunpack.c.l.b16 %v2732
    %v2742 = vunpack.c.h.b16 %v2732
    %v2743 = vunpack.c.l.b16 %v2733
    %v2744 = vunpack.c.h.b16 %v2733
    %v2745 = vunpack.c.l.b16 %v2734
    %v2746 = vunpack.c.h.b16 %v2734
    %v2747 = vpack.c.b16 %v2741, %v2739
    %v2748 = vpack.c.b16 %v2742, %v2740
    %v2749 = vpack.c.b16 %v2745, %v2743
    %v2750 = vpack.c.b16 %v2746, %v2744
    %v2756 = vsel %vm725, %v2730, 0
    %2758 = vmatprep.subr.bf16.mxu0 0
    %2759 = vmatpush1.bf16.msra.mxu0 0
    %2760 = vmatprep.subr.bf16.mxu0 0
    %2761 = vmatpush1.bf16.msra.mxu0 0
    %2762 = vmatprep.subr.bf16.mxu0 0
    %2763 = vmatpush1.bf16.msra.mxu0 0
    %2764 = vmatprep.subr.bf16.mxu0 0
    %2765 = vmatpush1.bf16.msra.mxu0 0
    %2766 = vmatprep.subr.bf16.mxu0 0
    %2767 = vmatpush1.bf16.msra.mxu0 0
    %2768 = vmatprep.subr.bf16.mxu0 0
    %2769 = vmatpush1.bf16.msra.mxu0 0
    %2770 = vmatprep.subr.bf16.mxu0 %v2750
    %2771 = vmatpush1.bf16.msra.mxu0 %v2749
    %2772 = vmatprep.subr.bf16.mxu0 %v2748
    %2773 = vmatpush1.bf16.msra.mxu0 %v2747
    %2774 = vmatprep.subr.bf16.mxu0 0
    %2775 = vmatpush2.bf16.msra.mxu0 0
    %2776 = vmatprep.subr.bf16.mxu0 0
    %2777 = vmatpush2.bf16.msra.mxu0 0
    %2778 = vmatprep.subr.bf16.mxu0 0
    %2779 = vmatpush2.bf16.msra.mxu0 0
    %2780 = vmatprep.subr.bf16.mxu0 0
    %2781 = vmatpush2.bf16.msra.mxu0 0
    %2782 = vmatprep.subr.bf16.mxu0 0
    %2783 = vmatpush2.bf16.msra.mxu0 0
    %2784 = vmatprep.subr.bf16.mxu0 0
    %2785 = vmatpush2.bf16.msra.mxu0 0
    %2786 = vmatprep.subr.bf16.mxu0 0
    %2787 = vmatpush2.bf16.msra.mxu0 0
    %2788 = vmatprep.subr.bf16.mxu0 0
    %2789 = vmatpush2.bf16.msra.mxu0 0
    %2790 = vmatprep.mubr.bf16.mxu0 0
    %2791 = vmatmul.mubr.bf16.gmra.mxu0 %v2756
    %v2792 = vpop.f32.mrf.mxu0
    %v2793 = vadd.f32 0.0, %v2792
    %v2794 = vpop.f32.mrf.mxu0
    %v2795 = vadd.f32 0.0, %v2794
    %v2796 = vpop.f32.mrf.mxu0
    %v2797 = vpop.f32.mrf.mxu0
    %2798 = vdwg.mxu0
    %v2799 = vadd.f32 %v2723, %v2793
    %v2800 = vadd.f32 %v2725, %v2795
    %s2801 = scalar_lea.vmem [#allocation6], 12
    %v2802 = vld [vmem:[%s2801] sm:$0xf]
    %v2803 = vld [vmem:[#allocation2 + $0x4] sm:$0xff]
    %v2804 = vld [vmem:[#allocation2 + $0xc] sm:$0xf]
    %v2805 = vld [vmem:[#allocation2 + $0x14] sm:$0xff]
    %v2806 = vld [vmem:[#allocation2 + $0x1c] sm:$0xf]
    %v2807 = vld [vmem:[#allocation2 + $0x24] sm:$0xff]
    %v2808 = vld [vmem:[#allocation2 + $0x2c] sm:$0xf]
    %v2809 = vld [vmem:[#allocation2 + $0x34] sm:$0xff]
    %v2810 = vld [vmem:[#allocation2 + $0x3c] sm:$0xf]
    %v2819 = vunpack.c.l.b16 %v2803
    %v2820 = vunpack.c.h.b16 %v2803
    %v2821 = vunpack.c.l.b16 %v2804
    %v2822 = vunpack.c.l.b16 %v2805
    %v2823 = vunpack.c.h.b16 %v2805
    %v2824 = vunpack.c.l.b16 %v2806
    %v2825 = vunpack.c.l.b16 %v2807
    %v2826 = vunpack.c.h.b16 %v2807
    %v2827 = vunpack.c.l.b16 %v2808
    %v2828 = vunpack.c.l.b16 %v2809
    %v2829 = vunpack.c.h.b16 %v2809
    %v2830 = vunpack.c.l.b16 %v2810
    %v2831 = vpack.c.b16 %v2822, %v2819
    %v2832 = vpack.c.b16 %v2823, %v2820
    %v2833 = vpack.c.b16 %v2824, %v2821
    %v2834 = vpack.c.b16 %v2828, %v2825
    %v2835 = vpack.c.b16 %v2829, %v2826
    %v2836 = vpack.c.b16 %v2830, %v2827
    %2837 = vrot.lane.b32.xlu0 %v2831, 127
    %v2838 = vpop.permute.xlu0 %2837
    %2839 = vrot.lane.b32.xlu0 %v2832, 127
    %v2840 = vpop.permute.xlu0 %2839
    %2841 = vrot.lane.b32.xlu0 %v2833, 127
    %v2842 = vpop.permute.xlu0 %2841
    %2843 = vrot.lane.b32.xlu0 %v2834, 127
    %v2844 = vpop.permute.xlu0 %2843
    %2845 = vrot.lane.b32.xlu0 %v2835, 127
    %v2846 = vpop.permute.xlu0 %2845
    %2847 = vrot.lane.b32.xlu0 %v2836, 127
    %v2848 = vpop.permute.xlu0 %2847
    %v2849 = vsel %vm407, %v2838, %v2840
    %v2850 = vsel %vm407, %v2840, %v2842
    %v2851 = vsel %vm407, %v2844, %v2846
    %v2852 = vsel %vm407, %v2846, %v2848
    %v2858 = vsel %vm725, %v2802, 0
    %2860 = vmatprep.subr.bf16.mxu0 0
    %2861 = vmatpush1.bf16.msra.mxu0 0
    %2862 = vmatprep.subr.bf16.mxu0 0
    %2863 = vmatpush1.bf16.msra.mxu0 0
    %2864 = vmatprep.subr.bf16.mxu0 0
    %2865 = vmatpush1.bf16.msra.mxu0 0
    %2866 = vmatprep.subr.bf16.mxu0 0
    %2867 = vmatpush1.bf16.msra.mxu0 0
    %2868 = vmatprep.subr.bf16.mxu0 0
    %2869 = vmatpush1.bf16.msra.mxu0 0
    %2870 = vmatprep.subr.bf16.mxu0 0
    %2871 = vmatpush1.bf16.msra.mxu0 0
    %2872 = vmatprep.subr.bf16.mxu0 %v2852
    %2873 = vmatpush1.bf16.msra.mxu0 %v2851
    %2874 = vmatprep.subr.bf16.mxu0 %v2850
    %2875 = vmatpush1.bf16.msra.mxu0 %v2849
    %2876 = vmatprep.subr.bf16.mxu0 0
    %2877 = vmatpush2.bf16.msra.mxu0 0
    %2878 = vmatprep.subr.bf16.mxu0 0
    %2879 = vmatpush2.bf16.msra.mxu0 0
    %2880 = vmatprep.subr.bf16.mxu0 0
    %2881 = vmatpush2.bf16.msra.mxu0 0
    %2882 = vmatprep.subr.bf16.mxu0 0
    %2883 = vmatpush2.bf16.msra.mxu0 0
    %2884 = vmatprep.subr.bf16.mxu0 0
    %2885 = vmatpush2.bf16.msra.mxu0 0
    %2886 = vmatprep.subr.bf16.mxu0 0
    %2887 = vmatpush2.bf16.msra.mxu0 0
    %2888 = vmatprep.subr.bf16.mxu0 0
    %2889 = vmatpush2.bf16.msra.mxu0 0
    %2890 = vmatprep.subr.bf16.mxu0 0
    %2891 = vmatpush2.bf16.msra.mxu0 0
    %2892 = vmatprep.mubr.bf16.mxu0 0
    %2893 = vmatmul.mubr.bf16.gmra.mxu0 %v2858
    %v2894 = vpop.f32.mrf.mxu0
    %v2895 = vadd.f32 0.0, %v2894
    %v2896 = vpop.f32.mrf.mxu0
    %v2897 = vadd.f32 0.0, %v2896
    %v2898 = vpop.f32.mrf.mxu0
    %v2899 = vpop.f32.mrf.mxu0
    %2900 = vdwg.mxu0
    %v2901 = vadd.f32 %v2799, %v2895
    %v2902 = vadd.f32 %v2800, %v2897
    %s2903 = scalar_lea.vmem [#allocation6], 16
    %v2904 = vld [vmem:[%s2903] sm:$0xf]
    %2905 = vrot.lane.b32.xlu0 %v2831, 126
    %v2906 = vpop.permute.xlu0 %2905
    %2907 = vrot.lane.b32.xlu0 %v2832, 126
    %v2908 = vpop.permute.xlu0 %2907
    %2909 = vrot.lane.b32.xlu0 %v2833, 126
    %v2910 = vpop.permute.xlu0 %2909
    %2911 = vrot.lane.b32.xlu0 %v2834, 126
    %v2912 = vpop.permute.xlu0 %2911
    %2913 = vrot.lane.b32.xlu0 %v2835, 126
    %v2914 = vpop.permute.xlu0 %2913
    %2915 = vrot.lane.b32.xlu0 %v2836, 126
    %v2916 = vpop.permute.xlu0 %2915
    %v2917 = vsel %vm504, %v2906, %v2908
    %v2918 = vsel %vm504, %v2908, %v2910
    %v2919 = vsel %vm504, %v2912, %v2914
    %v2920 = vsel %vm504, %v2914, %v2916
    %v2926 = vsel %vm725, %v2904, 0
    %2928 = vmatprep.subr.bf16.mxu0 0
    %2929 = vmatpush1.bf16.msra.mxu0 0
    %2930 = vmatprep.subr.bf16.mxu0 0
    %2931 = vmatpush1.bf16.msra.mxu0 0
    %2932 = vmatprep.subr.bf16.mxu0 0
    %2933 = vmatpush1.bf16.msra.mxu0 0
    %2934 = vmatprep.subr.bf16.mxu0 0
    %2935 = vmatpush1.bf16.msra.mxu0 0
    %2936 = vmatprep.subr.bf16.mxu0 0
    %2937 = vmatpush1.bf16.msra.mxu0 0
    %2938 = vmatprep.subr.bf16.mxu0 0
    %2939 = vmatpush1.bf16.msra.mxu0 0
    %2940 = vmatprep.subr.bf16.mxu0 %v2920
    %2941 = vmatpush1.bf16.msra.mxu0 %v2919
    %2942 = vmatprep.subr.bf16.mxu0 %v2918
    %2943 = vmatpush1.bf16.msra.mxu0 %v2917
    %2944 = vmatprep.subr.bf16.mxu0 0
    %2945 = vmatpush2.bf16.msra.mxu0 0
    %2946 = vmatprep.subr.bf16.mxu0 0
    %2947 = vmatpush2.bf16.msra.mxu0 0
    %2948 = vmatprep.subr.bf16.mxu0 0
    %2949 = vmatpush2.bf16.msra.mxu0 0
    %2950 = vmatprep.subr.bf16.mxu0 0
    %2951 = vmatpush2.bf16.msra.mxu0 0
    %2952 = vmatprep.subr.bf16.mxu0 0
    %2953 = vmatpush2.bf16.msra.mxu0 0
    %2954 = vmatprep.subr.bf16.mxu0 0
    %2955 = vmatpush2.bf16.msra.mxu0 0
    %2956 = vmatprep.subr.bf16.mxu0 0
    %2957 = vmatpush2.bf16.msra.mxu0 0
    %2958 = vmatprep.subr.bf16.mxu0 0
    %2959 = vmatpush2.bf16.msra.mxu0 0
    %2960 = vmatprep.mubr.bf16.mxu0 0
    %2961 = vmatmul.mubr.bf16.gmra.mxu0 %v2926
    %v2962 = vpop.f32.mrf.mxu0
    %v2963 = vadd.f32 0.0, %v2962
    %v2964 = vpop.f32.mrf.mxu0
    %v2965 = vadd.f32 0.0, %v2964
    %v2966 = vpop.f32.mrf.mxu0
    %v2967 = vpop.f32.mrf.mxu0
    %2968 = vdwg.mxu0
    %v2969 = vadd.f32 %v2901, %v2963
    %v2970 = vadd.f32 %v2902, %v2965
    %v2971 = vld [vmem:[%s10] sm:$0xff]
    %2973 = vset.pattern.permute.xlu0 0
    %2974 = vperm.xlu0 %2973, %v2971
    %v2975 = vpop.permute.xlu0 %2974
    %v2977 = vadd.f32 %v2969, %v2975
    %v2978 = vadd.f32 %v2970, %v2975
    %vm2979 = vcmask 130048
    %2980 = vst.msk [vmem:[#allocation8] sm:$0xff] %vm2979, %v2977
    %s2981 = scalar_lea.vmem [#allocation8], 8
    %2982 = vst.msk [vmem:[%s2981] sm:$0xff] %vm2979, %v2978
    // Predicated region
    $region54: #{tpu_custom_call.1} parent=1 // pred_check
      _
    $region55: #{tpu_custom_call.1} parent=1 // pred_check_branch
      %2984 = sbr.rel (0) target = $region57
    $region56: #{tpu_custom_call.1} parent=1 // pred_region
      %s2986 = ssub.s32 256, 256
      %2987 = vsyncadd [#allocation5], %s2986
      %s2988 = sshll.u32 [#allocation8], 4
      %s2989 = int_to_ptr.vmem [resolvable:$true] %s2988
      %2994 = dma.vmem_to_hbm [thread:$0]  %s2989, 256, %s11, [#allocation5], 128, 128, 8
    $region57: #{tpu_custom_call.1} parent=1 // pred_fallthru
      _
    // Predicated region
    $region58: #{tpu_custom_call.1} parent=1 // pred_check
      _
    $region59: #{tpu_custom_call.1} parent=1 // pred_check_branch
      %2996 = sbr.rel (0) target = $region61
    $region60: #{tpu_custom_call.1} parent=1 // pred_region
      %2997 = dma.done [#allocation5], 256
    $region61: #{tpu_custom_call.1} parent=1 // pred_fallthru
      _
    %2998 = vsyncpa [#allocation4], 1
    %2999 = vsyncpa [#allocation7], 1
    %3000 = vsyncpa [#allocation5], 1

</llo_original>
